<compile_context>
chip_gen: v7x
topology: tpu7x:2x2x1
jax: 0.10.0
libtpu: 0.0.40
codegen_flags: <defaults>
</compile_context>

<pallas_src>
import math
import numpy as np

import jax
import jax.numpy as jnp
from jax import lax
from jax.experimental import pallas as pl
from jax.experimental.pallas import tpu as pltpu


ITER_OT = 2          # outer (QR) iterations
ITER_IN = 20         # inner power-iteration steps per outer iteration


# ------------------------- fused power-iteration kernel --------------------------

def _power_iter_kernel(a_ref, x_ref, o_ref, a2_ref):
    """One grid step = one batch element, fully resident in VMEM.

    a_ref : (w, w)   original transition matrix
    x_ref : (w, NP)  current (lane-padded) subspace
    o_ref : (w, NP)  output subspace after ITER_IN applications of a@a
    a2_ref: (w, w)   VMEM scratch holding a @ a
    """
    # Square the transition matrix once per call (recomputed per outer iteration:
    # one extra w^3 matmul, negligible vs. the 20 power steps, and it saves an
    # extra pallas_call + an HBM round-trip of inp^2).
    a2_ref[...] = jnp.dot(a_ref[...], a_ref[...],
                          preferred_element_type=jnp.float32)

    # 20 fused power-iteration steps; x lives in the output VMEM buffer the
    # whole time (single HBM write-back at the end of the grid step).
    o_ref[...] = x_ref[...]

    def body(_, carry):
        o_ref[...] = jnp.dot(a2_ref[...], o_ref[...],
                             preferred_element_type=jnp.float32)
        return carry

    lax.fori_loop(0, ITER_IN, body, 0)


def fused_power_iterations(inp, x_pad):
    """Apply (inp @ inp) to x_pad ITER_IN times, batched, in one pallas_call.

    inp   : (bs, w, w)  float32
    x_pad : (bs, w, NP) float32, NP a multiple of 128 (lane-dense)
    """
    bs, w, w2 = inp.shape
    assert w == w2
    np_ = x_pad.shape[-1]
    assert np_ % 128 == 0, "padded subspace width must be lane-dense"

    return pl.pallas_call(
        _power_iter_kernel,
        out_shape=jax.ShapeDtypeStruct((bs, w, np_), jnp.float32),
        grid_spec=pltpu.PrefetchScalarGridSpec(
            num_scalar_prefetch=0,
            grid=(bs,),
            in_specs=[
                # Whole-matrix blocks; batch dim squeezed -> kernel sees 2-D refs.
                pl.BlockSpec((pl.Squeezed(), w, w), lambda b: (b, 0, 0)),
                pl.BlockSpec((pl.Squeezed(), w, np_), lambda b: (b, 0, 0)),
            ],
            out_specs=pl.BlockSpec((pl.Squeezed(), w, np_), lambda b: (b, 0, 0)),
            scratch_shapes=[pltpu.VMEM((w, w), jnp.float32)],
        ),
        compiler_params=pltpu.CompilerParams(
            # Batch axis parallel -> sharded across the 2 TensorCores on v7x.
            dimension_semantics=("parallel",),
        ),
    )(inp, x_pad)


# ----------------------------- module forward (wrapper) ---------------------------

def _build_selection_matrix(w, r, d):
    """Deterministic (w, ns) one-hot column selection matrix, as in the torch code."""
    ns = 49
    wint = math.sqrt(w / ns)
    nW = round(r / wint)
    nH = round(ns / nW)
    wint = r / nW
    hint = d / nH
    ns = nW * nH
    x = np.zeros((w, ns), dtype=np.float32)
    idc = 0
    for j in range(nW):
        for i in range(nH):
            pos = round((j + 0.5) * wint) * d + round((i + 0.5) * hint)
            x[pos, idc] = 1.0
            idc += 1
    return x, ns


def comp_eig_decomp_batch(inp, si):
    """JAX/Pallas equivalent of compEigDecomp_batch.forward(input, si).

    inp: (bs, w, w) float32,  si: (r, d) python ints with r*d == w.
    Returns (t0, x): t0 (bs, ns) abs of diag(R), x (bs, w, ns) orthonormal basis.
    """
    bs, w, w2 = inp.shape
    assert w == w2
    r, d = int(si[0]), int(si[1])

    x0, ns = _build_selection_matrix(w, r, d)

    # Lane-dense padding of the subspace: ns=49 -> 128 columns (zeros). The zero
    # columns stay exactly zero under the power iterations and are sliced off
    # before QR (QR of zero columns would corrupt diag(R)).
    np_ = max(128, ((ns + 127) // 128) * 128)
    x0_pad = np.zeros((w, np_), dtype=np.float32)
    x0_pad[:, :ns] = x0
    xp = jnp.broadcast_to(jnp.asarray(x0_pad), (bs, w, np_))

    x = None
    t = None
    for p in range(ITER_OT):
        # Fused: inp^2 computed in VMEM + 20 power-iteration matmuls, one launch.
        xp = fused_power_iterations(inp, xp)
        # TODO(synk): compQRDecomp is a custom autograd QR; forward == batched
        # reduced QR, done in plain JAX (no clean Pallas Householder-QR here).
        x, t = jnp.linalg.qr(xp[:, :, :ns])
        if p + 1 < ITER_OT:
            xp = jnp.pad(x, ((0, 0), (0, 0), (0, np_ - ns)))

    t0 = jnp.abs(jnp.diagonal(t, axis1=-2, axis2=-1))
    return t0, x


# --------------------------------------- demo -------------------------------------

if __name__ == "__main__":
    key = jax.random.PRNGKey(0)
    bs, r, d = 2, 16, 16          # small spatial grid; w = r*d = 256, ns = 49
    w = r * d

    # Deterministic, diffusion-map-like input: row-stochastic so the power
    # iterations stay numerically bounded (spectral radius 1), as the real
    # module expects.
    A = jnp.abs(jax.random.normal(key, (bs, w, w), dtype=jnp.float32)) + 1e-3
    inp = A / jnp.sum(A, axis=-1, keepdims=True)

    fwd = jax.jit(comp_eig_decomp_batch, static_argnums=(1,))
    t0, x = fwd(inp, (r, d))
    jax.block_until_ready((t0, x))

    assert t0.shape == (bs, 49) and x.shape == (bs, w, 49)
    assert bool(jnp.all(jnp.isfinite(t0))) and bool(jnp.all(jnp.isfinite(x)))
    # Basic orthonormality sanity check of the returned subspace.
    gram = jnp.einsum('bwi,bwj->bij', x, x)
    assert bool(jnp.all(jnp.abs(gram - jnp.eye(49)) < 1e-3))
    print("KERNEL_OK")
</pallas_src>

<mosaic_0001>
module attributes {stable_mosaic.version = 11 : i64} {
  func.func @_power_iter_kernel(%arg0: i32, %arg1: memref<1x256x256xf32, #tpu.memory_space<vmem>>, %arg2: memref<1x256x128xf32, #tpu.memory_space<vmem>>, %arg3: memref<1x256x128xf32, #tpu.memory_space<vmem>>, %arg4: memref<256x256xf32, #tpu.memory_space<vmem>>) attributes {dimension_semantics = [#tpu.dimension_semantics<parallel>], iteration_bounds = array<i64: 2>, scalar_prefetch = 0 : i64, scratch_operands = 1 : i64, tpu.core_type = #tpu.core_type<tc>, window_params = [{transform_indices = @transform_0, window_bounds = array<i64: 1, 256, 256>}, {transform_indices = @transform_1, window_bounds = array<i64: 1, 256, 128>}, {transform_indices = @transform_2, window_bounds = array<i64: 1, 256, 128>}]} {
    %c0 = arith.constant 0 : index
    %c0_0 = arith.constant 0 : index
    %c0_1 = arith.constant 0 : index
    %0 = vector.load %arg1[%c0, %c0_0, %c0_1] : memref<1x256x256xf32, #tpu.memory_space<vmem>>, vector<1x256x256xf32>
    %1 = vector.shape_cast %0 : vector<1x256x256xf32> to vector<256x256xf32>
    %c0_2 = arith.constant 0 : index
    %c0_3 = arith.constant 0 : index
    %c0_4 = arith.constant 0 : index
    %2 = vector.load %arg1[%c0_2, %c0_3, %c0_4] : memref<1x256x256xf32, #tpu.memory_space<vmem>>, vector<1x256x256xf32>
    %3 = vector.shape_cast %2 : vector<1x256x256xf32> to vector<256x256xf32>
    %cst = arith.constant dense<0.000000e+00> : vector<256x256xf32>
    %4 = tpu.matmul %1, %3, %cst {dimension_numbers = #tpu.dot_dimension_numbers<[1], [0], [0], [1], [0, 0, 1, 1], [], []>} : vector<256x256xf32>, vector<256x256xf32>, vector<256x256xf32> -> vector<256x256xf32>
    %c0_5 = arith.constant 0 : index
    %c0_6 = arith.constant 0 : index
    %5 = vector.load %arg4[%c0_5, %c0_6] : memref<256x256xf32, #tpu.memory_space<vmem>>, vector<256x256xf32>
    tpu.vector_store %arg4[%c0_5, %c0_6], %4 {strides = array<i32>} : memref<256x256xf32, #tpu.memory_space<vmem>>, vector<256x256xf32>,
    %c0_7 = arith.constant 0 : index
    %c0_8 = arith.constant 0 : index
    %c0_9 = arith.constant 0 : index
    %6 = vector.load %arg2[%c0_7, %c0_8, %c0_9] : memref<1x256x128xf32, #tpu.memory_space<vmem>>, vector<1x256x128xf32>
    %7 = vector.shape_cast %6 : vector<1x256x128xf32> to vector<256x128xf32>
    %c0_10 = arith.constant 0 : index
    %c0_11 = arith.constant 0 : index
    %c0_12 = arith.constant 0 : index
    %8 = vector.load %arg3[%c0_10, %c0_11, %c0_12] : memref<1x256x128xf32, #tpu.memory_space<vmem>>, vector<1x256x128xf32>
    %9 = vector.shape_cast %8 : vector<1x256x128xf32> to vector<256x128xf32>
    %10 = vector.shape_cast %7 : vector<256x128xf32> to vector<1x256x128xf32>
    tpu.vector_store %arg3[%c0_10, %c0_11, %c0_12], %10 {strides = array<i32>} : memref<1x256x128xf32, #tpu.memory_space<vmem>>, vector<1x256x128xf32>,
    %c0_i32 = arith.constant 0 : i32
    %c20_i32 = arith.constant 20 : i32
    %11 = arith.addi %c0_i32, %c20_i32 : i32
    %c1_i32 = arith.constant 1 : i32
    scf.for %arg5 = %c0_i32 to %11 step %c1_i32  : i32 {
      %c0_13 = arith.constant 0 : index
      %c0_14 = arith.constant 0 : index
      %12 = vector.load %arg4[%c0_13, %c0_14] : memref<256x256xf32, #tpu.memory_space<vmem>>, vector<256x256xf32>
      %c0_15 = arith.constant 0 : index
      %c0_16 = arith.constant 0 : index
      %c0_17 = arith.constant 0 : index
      %13 = vector.load %arg3[%c0_15, %c0_16, %c0_17] : memref<1x256x128xf32, #tpu.memory_space<vmem>>, vector<1x256x128xf32>
      %14 = vector.shape_cast %13 : vector<1x256x128xf32> to vector<256x128xf32>
      %cst_18 = arith.constant dense<0.000000e+00> : vector<256x128xf32>
      %15 = tpu.matmul %12, %14, %cst_18 {dimension_numbers = #tpu.dot_dimension_numbers<[1], [0], [0], [1], [0, 0, 1, 1], [], []>} : vector<256x256xf32>, vector<256x128xf32>, vector<256x128xf32> -> vector<256x128xf32>
      %c0_19 = arith.constant 0 : index
      %c0_20 = arith.constant 0 : index
      %c0_21 = arith.constant 0 : index
      %16 = vector.load %arg3[%c0_19, %c0_20, %c0_21] : memref<1x256x128xf32, #tpu.memory_space<vmem>>, vector<1x256x128xf32>
      %17 = vector.shape_cast %16 : vector<1x256x128xf32> to vector<256x128xf32>
      %18 = vector.shape_cast %15 : vector<256x128xf32> to vector<1x256x128xf32>
      tpu.vector_store %arg3[%c0_19, %c0_20, %c0_21], %18 {strides = array<i32>} : memref<1x256x128xf32, #tpu.memory_space<vmem>>, vector<1x256x128xf32>,
    }
    return
  }
  func.func @transform_0(%arg0: i32) -> (i32, i32, i32) {
    %c0_i32 = arith.constant 0 : i32
    %c0_i32_0 = arith.constant 0 : i32
    %c0_i32_1 = arith.constant 0 : i32
    return %arg0, %c0_i32, %c0_i32_0 : i32, i32, i32
  }
  func.func @transform_1(%arg0: i32) -> (i32, i32, i32) {
    %c0_i32 = arith.constant 0 : i32
    %c0_i32_0 = arith.constant 0 : i32
    %c0_i32_1 = arith.constant 0 : i32
    return %arg0, %c0_i32, %c0_i32_0 : i32, i32, i32
  }
  func.func @transform_2(%arg0: i32) -> (i32, i32, i32) {
    %c0_i32 = arith.constant 0 : i32
    %c0_i32_0 = arith.constant 0 : i32
    %c0_i32_1 = arith.constant 0 : i32
    return %arg0, %c0_i32, %c0_i32_0 : i32, i32, i32
  }
}

module attributes {stable_mosaic.version = 11 : i64} {
  func.func @_power_iter_kernel(%arg0: i32, %arg1: memref<1x256x256xf32, #tpu.memory_space<vmem>>, %arg2: memref<1x256x128xf32, #tpu.memory_space<vmem>>, %arg3: memref<1x256x128xf32, #tpu.memory_space<vmem>>, %arg4: memref<256x256xf32, #tpu.memory_space<vmem>>) attributes {dimension_semantics = [#tpu.dimension_semantics<parallel>], iteration_bounds = array<i64: 2>, scalar_prefetch = 0 : i64, scratch_operands = 1 : i64, tpu.core_type = #tpu.core_type<tc>, window_params = [{transform_indices = @transform_0, window_bounds = array<i64: 1, 256, 256>}, {transform_indices = @transform_1, window_bounds = array<i64: 1, 256, 128>}, {transform_indices = @transform_2, window_bounds = array<i64: 1, 256, 128>}]} {
    %c0 = arith.constant 0 : index
    %c0_0 = arith.constant 0 : index
    %c0_1 = arith.constant 0 : index
    %0 = vector.load %arg1[%c0, %c0_0, %c0_1] : memref<1x256x256xf32, #tpu.memory_space<vmem>>, vector<1x256x256xf32>
    %1 = vector.shape_cast %0 : vector<1x256x256xf32> to vector<256x256xf32>
    %c0_2 = arith.constant 0 : index
    %c0_3 = arith.constant 0 : index
    %c0_4 = arith.constant 0 : index
    %2 = vector.load %arg1[%c0_2, %c0_3, %c0_4] : memref<1x256x256xf32, #tpu.memory_space<vmem>>, vector<1x256x256xf32>
    %3 = vector.shape_cast %2 : vector<1x256x256xf32> to vector<256x256xf32>
    %cst = arith.constant dense<0.000000e+00> : vector<256x256xf32>
    %4 = tpu.matmul %1, %3, %cst {dimension_numbers = #tpu.dot_dimension_numbers<[1], [0], [0], [1], [0, 0, 1, 1], [], []>} : vector<256x256xf32>, vector<256x256xf32>, vector<256x256xf32> -> vector<256x256xf32>
    %c0_5 = arith.constant 0 : index
    %c0_6 = arith.constant 0 : index
    %5 = vector.load %arg4[%c0_5, %c0_6] : memref<256x256xf32, #tpu.memory_space<vmem>>, vector<256x256xf32>
    tpu.vector_store %arg4[%c0_5, %c0_6], %4 {strides = array<i32>} : memref<256x256xf32, #tpu.memory_space<vmem>>, vector<256x256xf32>,
    %c0_7 = arith.constant 0 : index
    %c0_8 = arith.constant 0 : index
    %c0_9 = arith.constant 0 : index
    %6 = vector.load %arg2[%c0_7, %c0_8, %c0_9] : memref<1x256x128xf32, #tpu.memory_space<vmem>>, vector<1x256x128xf32>
    %7 = vector.shape_cast %6 : vector<1x256x128xf32> to vector<256x128xf32>
    %c0_10 = arith.constant 0 : index
    %c0_11 = arith.constant 0 : index
    %c0_12 = arith.constant 0 : index
    %8 = vector.load %arg3[%c0_10, %c0_11, %c0_12] : memref<1x256x128xf32, #tpu.memory_space<vmem>>, vector<1x256x128xf32>
    %9 = vector.shape_cast %8 : vector<1x256x128xf32> to vector<256x128xf32>
    %10 = vector.shape_cast %7 : vector<256x128xf32> to vector<1x256x128xf32>
    tpu.vector_store %arg3[%c0_10, %c0_11, %c0_12], %10 {strides = array<i32>} : memref<1x256x128xf32, #tpu.memory_space<vmem>>, vector<1x256x128xf32>,
    %c0_i32 = arith.constant 0 : i32
    %c20_i32 = arith.constant 20 : i32
    %11 = arith.addi %c0_i32, %c20_i32 : i32
    %c1_i32 = arith.constant 1 : i32
    scf.for %arg5 = %c0_i32 to %11 step %c1_i32  : i32 {
      %c0_13 = arith.constant 0 : index
      %c0_14 = arith.constant 0 : index
      %12 = vector.load %arg4[%c0_13, %c0_14] : memref<256x256xf32, #tpu.memory_space<vmem>>, vector<256x256xf32>
      %c0_15 = arith.constant 0 : index
      %c0_16 = arith.constant 0 : index
      %c0_17 = arith.constant 0 : index
      %13 = vector.load %arg3[%c0_15, %c0_16, %c0_17] : memref<1x256x128xf32, #tpu.memory_space<vmem>>, vector<1x256x128xf32>
      %14 = vector.shape_cast %13 : vector<1x256x128xf32> to vector<256x128xf32>
      %cst_18 = arith.constant dense<0.000000e+00> : vector<256x128xf32>
      %15 = tpu.matmul %12, %14, %cst_18 {dimension_numbers = #tpu.dot_dimension_numbers<[1], [0], [0], [1], [0, 0, 1, 1], [], []>} : vector<256x256xf32>, vector<256x128xf32>, vector<256x128xf32> -> vector<256x128xf32>
      %c0_19 = arith.constant 0 : index
      %c0_20 = arith.constant 0 : index
      %c0_21 = arith.constant 0 : index
      %16 = vector.load %arg3[%c0_19, %c0_20, %c0_21] : memref<1x256x128xf32, #tpu.memory_space<vmem>>, vector<1x256x128xf32>
      %17 = vector.shape_cast %16 : vector<1x256x128xf32> to vector<256x128xf32>
      %18 = vector.shape_cast %15 : vector<256x128xf32> to vector<1x256x128xf32>
      tpu.vector_store %arg3[%c0_19, %c0_20, %c0_21], %18 {strides = array<i32>} : memref<1x256x128xf32, #tpu.memory_space<vmem>>, vector<1x256x128xf32>,
    }
    return
  }
  func.func @transform_0(%arg0: i32) -> (i32, i32, i32) {
    %c0_i32 = arith.constant 0 : i32
    %c0_i32_0 = arith.constant 0 : i32
    %c0_i32_1 = arith.constant 0 : i32
    return %arg0, %c0_i32, %c0_i32_0 : i32, i32, i32
  }
  func.func @transform_1(%arg0: i32) -> (i32, i32, i32) {
    %c0_i32 = arith.constant 0 : i32
    %c0_i32_0 = arith.constant 0 : i32
    %c0_i32_1 = arith.constant 0 : i32
    return %arg0, %c0_i32, %c0_i32_0 : i32, i32, i32
  }
  func.func @transform_2(%arg0: i32) -> (i32, i32, i32) {
    %c0_i32 = arith.constant 0 : i32
    %c0_i32_0 = arith.constant 0 : i32
    %c0_i32_1 = arith.constant 0 : i32
    return %arg0, %c0_i32, %c0_i32_0 : i32, i32, i32
  }
}

</mosaic_0001>

<llo_original>
// kernel: custom-call.7
$region0: #{custom-call.7}
  %s0 = inlined_call_operand.vmem [shape: f32[2,256,49], index: 0, kind: input, shape index: {}]
  %s1 = inlined_call_operand.vmem [shape: f32[2,256,49], index: 1, kind: output, shape index: {0}]
  %s2 = inlined_call_operand.vmem [shape: f32[2,49], index: 2, kind: output, shape index: {1}]
  %3 = xla_tuple %s1, %s2
  $region1: #{custom-call.7} parent=0
    #allocation0 [shape = 'u8[262144]{0}', space=vmem, size = 0x40000, scoped, tag = 'operand span for operand 0']
    #allocation1 [shape = 'u8[262144]{0}', space=vmem, size = 0x40000, scoped, tag = 'operand span for operand 1']
    #allocation2 [shape = 'u8[4096]{0}', space=vmem, size = 0x1000, scoped, tag = 'operand span for operand 2']
    #allocation3 [shape = 'u8[2048]{0}', space=vmem, size = 0x800, scoped, tag = 'packed  for operand 2']
    loop: start=0, step=1, limit=4
    $region2: #{custom-call.7} parent=1 // loop_pre_header
      _
    $region3: #{custom-call.7} parent=1 // loop_header
      %s5 = sphi 0, %s9
      %p6 = scmp.ge.s32.totalorder %s5, 4
      %s12 = sphi 0, %s31
      %s13 = sphi 0, %s27
      %s14 = sphi 0, %s23
      %s15 = sphi 0, %s12
      %s16 = sphi 0, %s13
      %s17 = sphi 0, %s14
      %s18 = sphi 0, %s15
      %s19 = sphi 0, %s16
      %s20 = sphi 0, %s17
      %s46 = sphi 0, %s48
      %s49 = sphi 0, %s46
      %s50 = sphi 0, %s49
      %s66 = sphi 0, %s50
    $region4: #{custom-call.7} parent=1 // loop_header_branch
      %8 = sbr.rel (%p6) target = $region8
    $region5: #{custom-call.7} parent=1 // loop_body
      %s10 = ssub.s32 %s5, 1
      %s11 = ssub.s32 %s5, 2
      %s21 = sadd.s32 1, %s14
      %p22 = scmp.ge.s32.totalorder %s21, 1
      %s23 = scalar_select %p22, 0, %s21
      %s24 = sadd.s32 1, %s13
      %s25 = scalar_select %p22, %s24, %s13
      %p26 = scmp.ge.s32.totalorder %s25, 1
      %s27 = scalar_select %p26, 0, %s25
      %s28 = sadd.s32 1, %s12
      %s29 = scalar_select %p26, %s28, %s12
      %p30 = scmp.ge.s32.totalorder %s29, 2
      %s31 = scalar_select %p30, 0, %s29
      %p32 = scmp.lt.s32.totalorder %s12, 0
      %s33 = ssub.s32 0, %s12
      %s34 = scalar_select %p32, %s33, %s12
      %s35 = sshrl.u32 %s34, 3
      %s36 = ssub.s32 0, %s35
      %s37 = scalar_select %p32, %s36, %s35
      %p38 = scmp.lt.s32.totalorder %s31, 0
      %s39 = ssub.s32 0, %s31
      %s40 = scalar_select %p38, %s39, %s31
      %s41 = sshrl.u32 %s40, 3
      %s42 = ssub.s32 0, %s41
      %s43 = scalar_select %p38, %s42, %s41
      %s44 = ssub.s32 %s37, %s43
      %p45 = scmp.eq.s32.totalorder %s44, 0
      %s47 = sadd.s32 %s46, 1
      %s48 = scalar_select %p45, %s46, %s47
      %p51 = pneg %p45
      %p52 = scmp.eq.s32.totalorder %s5, 1
      %p53 = por %p51, %p52
      %p54 = scmp.ne.s32.totalorder %s46, %s49
      %p55 = scmp.eq.s32.totalorder %s5, 0
      %p56 = por %p54, %p55
      %p57 = scmp.ne.s32.totalorder %s46, %s49
      %p58 = scmp.eq.s32.totalorder %s10, 1
      %p59 = por %p57, %p58
      %p60 = scmp.ne.s32.totalorder %s49, %s50
      %p61 = scmp.eq.s32.totalorder %s10, 0
      %p62 = por %p60, %p61
      %p63 = scmp.ne.s32.totalorder %s49, %s50
      %p64 = scmp.eq.s32.totalorder %s11, 1
      %p65 = por %p63, %p64
      %p67 = scmp.ne.s32.totalorder %s50, %s66
      %p68 = scmp.eq.s32.totalorder %s11, 0
      %p69 = por %p67, %p68
      %p70 = scmp.le.s32.totalorder 1, %s5
      %p71 = scmp.lt.s32.totalorder %s5, 3
      %p72 = pnand %p70, %p71
      %p73 = pneg %p72
      // Predicated region
      $region9: #{custom-call.7} parent=5 // pred_check
        _
      $region10: #{custom-call.7} parent=5 // pred_check_branch
        %75 = sbr.rel (%p72) target = $region12
      $region11: #{custom-call.7} parent=5 // pred_region
        %s76 = ssub.s32 %s5, 1
      $region12: #{custom-call.7} parent=5 // pred_fallthru
        _
      %p77 = scmp.lt.s32.totalorder %s5, 2
      // Predicated region
      $region13: #{custom-call.7} parent=5 // pred_check
        %p78 = pneg %p77
      $region14: #{custom-call.7} parent=5 // pred_check_branch
        %80 = sbr.rel (%p78) target = $region16
      $region15: #{custom-call.7} parent=5 // pred_region
        %s81 = sand.u32 %s5, 1
        %s82 = sand.u32 %s5, 1
        %s83 = smul.addr %s82, 256
        %s84 = scalar_lea.vmem [#allocation0], %s83
        %s85 = smul.u32 32, %s13
        %s86 = sadd.s32 %s14, %s85
        %s87 = smul.addr %s12, 32
        %s88 = sadd.s32 %s86, %s87
        %s89 = smul.addr %s88, 8
        %s90 = scalar_lea.vmem %s0, %s89
        // Predicated region
        $region17: #{custom-call.7} parent=15 // pred_check
          _
        $region18: #{custom-call.7} parent=15 // pred_check_branch
          %92 = sbr.rel (0) target = $region20
        $region19: #{custom-call.7} parent=15 // pred_region
          // Predicated region
          $region21: #{custom-call.7} parent=19 // pred_check
            _
          $region22: #{custom-call.7} parent=19 // pred_check_branch
            %94 = sbr.rel (0) target = $region24
          $region23: #{custom-call.7} parent=19 // pred_region
            // Predicated region
            $region36: #{custom-call.7} parent=23 // pred_check
              _
            $region37: #{custom-call.7} parent=23 // pred_check_branch
              %171 = sbr.rel (0) target = $region39
            $region38: #{custom-call.7} parent=23 // pred_region
              loop: start=0, step=1, limit=1
              $region40: #{custom-call.7} parent=38 // loop_pre_header
                _
              $region41: #{custom-call.7} parent=38 // loop_header
                %s173 = sphi 0, %s177
                %p174 = scmp.ge.s32.totalorder %s173, 1
                %s178 = sphi %s90, %s90
                %s179 = sphi %s84, %s84
              $region42: #{custom-call.7} parent=38 // loop_header_branch
                %176 = sbr.rel (%p174) target = $region46
              $region43: #{custom-call.7} parent=38 // loop_body
                %v180 = vld [vmem:[%s178] sm:$0xff]
                %181 = vst [vmem:[%s179] sm:$0xff] %v180
                %v182 = vld [vmem:[%s178 + $0x8] sm:$0xff]
                %183 = vst [vmem:[%s179 + $0x8] sm:$0xff] %v182
                %v184 = vld [vmem:[%s178 + $0x10] sm:$0xff]
                %185 = vst [vmem:[%s179 + $0x10] sm:$0xff] %v184
                %v186 = vld [vmem:[%s178 + $0x18] sm:$0xff]
                %187 = vst [vmem:[%s179 + $0x18] sm:$0xff] %v186
                %v188 = vld [vmem:[%s178 + $0x20] sm:$0xff]
                %189 = vst [vmem:[%s179 + $0x20] sm:$0xff] %v188
                %v190 = vld [vmem:[%s178 + $0x28] sm:$0xff]
                %191 = vst [vmem:[%s179 + $0x28] sm:$0xff] %v190
                %v192 = vld [vmem:[%s178 + $0x30] sm:$0xff]
                %193 = vst [vmem:[%s179 + $0x30] sm:$0xff] %v192
                %v194 = vld [vmem:[%s178 + $0x38] sm:$0xff]
                %195 = vst [vmem:[%s179 + $0x38] sm:$0xff] %v194
                %v196 = vld [vmem:[%s178 + $0x40] sm:$0xff]
                %197 = vst [vmem:[%s179 + $0x40] sm:$0xff] %v196
                %v198 = vld [vmem:[%s178 + $0x48] sm:$0xff]
                %199 = vst [vmem:[%s179 + $0x48] sm:$0xff] %v198
                %v200 = vld [vmem:[%s178 + $0x50] sm:$0xff]
                %201 = vst [vmem:[%s179 + $0x50] sm:$0xff] %v200
                %v202 = vld [vmem:[%s178 + $0x58] sm:$0xff]
                %203 = vst [vmem:[%s179 + $0x58] sm:$0xff] %v202
                %v204 = vld [vmem:[%s178 + $0x60] sm:$0xff]
                %205 = vst [vmem:[%s179 + $0x60] sm:$0xff] %v204
                %v206 = vld [vmem:[%s178 + $0x68] sm:$0xff]
                %207 = vst [vmem:[%s179 + $0x68] sm:$0xff] %v206
                %v208 = vld [vmem:[%s178 + $0x70] sm:$0xff]
                %209 = vst [vmem:[%s179 + $0x70] sm:$0xff] %v208
                %v210 = vld [vmem:[%s178 + $0x78] sm:$0xff]
                %211 = vst [vmem:[%s179 + $0x78] sm:$0xff] %v210
                %v212 = vld [vmem:[%s178 + $0x80] sm:$0xff]
                %213 = vst [vmem:[%s179 + $0x80] sm:$0xff] %v212
                %v214 = vld [vmem:[%s178 + $0x88] sm:$0xff]
                %215 = vst [vmem:[%s179 + $0x88] sm:$0xff] %v214
                %v216 = vld [vmem:[%s178 + $0x90] sm:$0xff]
                %217 = vst [vmem:[%s179 + $0x90] sm:$0xff] %v216
                %v218 = vld [vmem:[%s178 + $0x98] sm:$0xff]
                %219 = vst [vmem:[%s179 + $0x98] sm:$0xff] %v218
                %v220 = vld [vmem:[%s178 + $0xa0] sm:$0xff]
                %221 = vst [vmem:[%s179 + $0xa0] sm:$0xff] %v220
                %v222 = vld [vmem:[%s178 + $0xa8] sm:$0xff]
                %223 = vst [vmem:[%s179 + $0xa8] sm:$0xff] %v222
                %v224 = vld [vmem:[%s178 + $0xb0] sm:$0xff]
                %225 = vst [vmem:[%s179 + $0xb0] sm:$0xff] %v224
                %v226 = vld [vmem:[%s178 + $0xb8] sm:$0xff]
                %227 = vst [vmem:[%s179 + $0xb8] sm:$0xff] %v226
                %v228 = vld [vmem:[%s178 + $0xc0] sm:$0xff]
                %229 = vst [vmem:[%s179 + $0xc0] sm:$0xff] %v228
                %v230 = vld [vmem:[%s178 + $0xc8] sm:$0xff]
                %231 = vst [vmem:[%s179 + $0xc8] sm:$0xff] %v230
                %v232 = vld [vmem:[%s178 + $0xd0] sm:$0xff]
                %233 = vst [vmem:[%s179 + $0xd0] sm:$0xff] %v232
                %v234 = vld [vmem:[%s178 + $0xd8] sm:$0xff]
                %235 = vst [vmem:[%s179 + $0xd8] sm:$0xff] %v234
                %v236 = vld [vmem:[%s178 + $0xe0] sm:$0xff]
                %237 = vst [vmem:[%s179 + $0xe0] sm:$0xff] %v236
                %v238 = vld [vmem:[%s178 + $0xe8] sm:$0xff]
                %239 = vst [vmem:[%s179 + $0xe8] sm:$0xff] %v238
                %v240 = vld [vmem:[%s178 + $0xf0] sm:$0xff]
                %241 = vst [vmem:[%s179 + $0xf0] sm:$0xff] %v240
                %v242 = vld [vmem:[%s178 + $0xf8] sm:$0xff]
                %243 = vst [vmem:[%s179 + $0xf8] sm:$0xff] %v242
              $region44: #{custom-call.7} parent=38 // loop_footer
                %s177 = sadd.s32 1, %s173
              $region45: #{custom-call.7} parent=38 // loop_footer_branch
                %172 = sbr.rel target = $region41
              $region46: #{custom-call.7} parent=38 // loop_exit
                _
            $region39: #{custom-call.7} parent=23 // pred_fallthru
              _
            // Predicated region
            $region47: #{custom-call.7} parent=23 // pred_check
              _
            $region48: #{custom-call.7} parent=23 // pred_check_branch
              %245 = sbr.rel target = $region50
            $region49: #{custom-call.7} parent=23 // pred_region
              _
            $region50: #{custom-call.7} parent=23 // pred_fallthru
              _
          $region24: #{custom-call.7} parent=19 // pred_fallthru
            _
          // Predicated region
          $region25: #{custom-call.7} parent=19 // pred_check
            _
          $region26: #{custom-call.7} parent=19 // pred_check_branch
            %96 = sbr.rel target = $region28
          $region27: #{custom-call.7} parent=19 // pred_region
            loop: start=0, step=1, limit=1
            $region29: #{custom-call.7} parent=27 // loop_pre_header
              _
            $region30: #{custom-call.7} parent=27 // loop_header
              %s99 = sphi 0, %s103
              %p100 = scmp.ge.s32.totalorder %s99, 1
              %s104 = sphi %s90, %s90
              %s105 = sphi %s84, %s84
            $region31: #{custom-call.7} parent=27 // loop_header_branch
              %102 = sbr.rel (%p100) target = $region35
            $region32: #{custom-call.7} parent=27 // loop_body
              %v106 = vld [vmem:[%s104] sm:$0xff]
              %107 = vst [vmem:[%s105] sm:$0xff] %v106
              %v108 = vld [vmem:[%s104 + $0x8] sm:$0xff]
              %109 = vst [vmem:[%s105 + $0x8] sm:$0xff] %v108
              %v110 = vld [vmem:[%s104 + $0x10] sm:$0xff]
              %111 = vst [vmem:[%s105 + $0x10] sm:$0xff] %v110
              %v112 = vld [vmem:[%s104 + $0x18] sm:$0xff]
              %113 = vst [vmem:[%s105 + $0x18] sm:$0xff] %v112
              %v114 = vld [vmem:[%s104 + $0x20] sm:$0xff]
              %115 = vst [vmem:[%s105 + $0x20] sm:$0xff] %v114
              %v116 = vld [vmem:[%s104 + $0x28] sm:$0xff]
              %117 = vst [vmem:[%s105 + $0x28] sm:$0xff] %v116
              %v118 = vld [vmem:[%s104 + $0x30] sm:$0xff]
              %119 = vst [vmem:[%s105 + $0x30] sm:$0xff] %v118
              %v120 = vld [vmem:[%s104 + $0x38] sm:$0xff]
              %121 = vst [vmem:[%s105 + $0x38] sm:$0xff] %v120
              %v122 = vld [vmem:[%s104 + $0x40] sm:$0xff]
              %123 = vst [vmem:[%s105 + $0x40] sm:$0xff] %v122
              %v124 = vld [vmem:[%s104 + $0x48] sm:$0xff]
              %125 = vst [vmem:[%s105 + $0x48] sm:$0xff] %v124
              %v126 = vld [vmem:[%s104 + $0x50] sm:$0xff]
              %127 = vst [vmem:[%s105 + $0x50] sm:$0xff] %v126
              %v128 = vld [vmem:[%s104 + $0x58] sm:$0xff]
              %129 = vst [vmem:[%s105 + $0x58] sm:$0xff] %v128
              %v130 = vld [vmem:[%s104 + $0x60] sm:$0xff]
              %131 = vst [vmem:[%s105 + $0x60] sm:$0xff] %v130
              %v132 = vld [vmem:[%s104 + $0x68] sm:$0xff]
              %133 = vst [vmem:[%s105 + $0x68] sm:$0xff] %v132
              %v134 = vld [vmem:[%s104 + $0x70] sm:$0xff]
              %135 = vst [vmem:[%s105 + $0x70] sm:$0xff] %v134
              %v136 = vld [vmem:[%s104 + $0x78] sm:$0xff]
              %137 = vst [vmem:[%s105 + $0x78] sm:$0xff] %v136
              %v138 = vld [vmem:[%s104 + $0x80] sm:$0xff]
              %139 = vst [vmem:[%s105 + $0x80] sm:$0xff] %v138
              %v140 = vld [vmem:[%s104 + $0x88] sm:$0xff]
              %141 = vst [vmem:[%s105 + $0x88] sm:$0xff] %v140
              %v142 = vld [vmem:[%s104 + $0x90] sm:$0xff]
              %143 = vst [vmem:[%s105 + $0x90] sm:$0xff] %v142
              %v144 = vld [vmem:[%s104 + $0x98] sm:$0xff]
              %145 = vst [vmem:[%s105 + $0x98] sm:$0xff] %v144
              %v146 = vld [vmem:[%s104 + $0xa0] sm:$0xff]
              %147 = vst [vmem:[%s105 + $0xa0] sm:$0xff] %v146
              %v148 = vld [vmem:[%s104 + $0xa8] sm:$0xff]
              %149 = vst [vmem:[%s105 + $0xa8] sm:$0xff] %v148
              %v150 = vld [vmem:[%s104 + $0xb0] sm:$0xff]
              %151 = vst [vmem:[%s105 + $0xb0] sm:$0xff] %v150
              %v152 = vld [vmem:[%s104 + $0xb8] sm:$0xff]
              %153 = vst [vmem:[%s105 + $0xb8] sm:$0xff] %v152
              %v154 = vld [vmem:[%s104 + $0xc0] sm:$0xff]
              %155 = vst [vmem:[%s105 + $0xc0] sm:$0xff] %v154
              %v156 = vld [vmem:[%s104 + $0xc8] sm:$0xff]
              %157 = vst [vmem:[%s105 + $0xc8] sm:$0xff] %v156
              %v158 = vld [vmem:[%s104 + $0xd0] sm:$0xff]
              %159 = vst [vmem:[%s105 + $0xd0] sm:$0xff] %v158
              %v160 = vld [vmem:[%s104 + $0xd8] sm:$0xff]
              %161 = vst [vmem:[%s105 + $0xd8] sm:$0xff] %v160
              %v162 = vld [vmem:[%s104 + $0xe0] sm:$0xff]
              %163 = vst [vmem:[%s105 + $0xe0] sm:$0xff] %v162
              %v164 = vld [vmem:[%s104 + $0xe8] sm:$0xff]
              %165 = vst [vmem:[%s105 + $0xe8] sm:$0xff] %v164
              %v166 = vld [vmem:[%s104 + $0xf0] sm:$0xff]
              %167 = vst [vmem:[%s105 + $0xf0] sm:$0xff] %v166
              %v168 = vld [vmem:[%s104 + $0xf8] sm:$0xff]
              %169 = vst [vmem:[%s105 + $0xf8] sm:$0xff] %v168
            $region33: #{custom-call.7} parent=27 // loop_footer
              %s103 = sadd.s32 1, %s99
            $region34: #{custom-call.7} parent=27 // loop_footer_branch
              %98 = sbr.rel target = $region30
            $region35: #{custom-call.7} parent=27 // loop_exit
              _
          $region28: #{custom-call.7} parent=19 // pred_fallthru
            _
        $region20: #{custom-call.7} parent=15 // pred_fallthru
          _
        %246 = vnop
      $region16: #{custom-call.7} parent=5 // pred_fallthru
        _
      %p247 = scmp.le.s32.totalorder 1, %s5
      %p248 = scmp.lt.s32.totalorder %s5, 3
      %p249 = pnand %p247, %p248
      %p250 = pneg %p249
      // Predicated region
      $region51: #{custom-call.7} parent=5 // pred_check
        _
      $region52: #{custom-call.7} parent=5 // pred_check_branch
        %252 = sbr.rel (%p249) target = $region54
      $region53: #{custom-call.7} parent=5 // pred_region
        #allocation4 [shape = 'f32[256,128]{1,0}', space=vmem, size = 0x20000, scoped, tag = 'scratch for Householder reflectors']
        %s253 = ssub.s32 %s5, 1
        %s254 = sand.u32 %s10, 1
        %s255 = sand.u32 %s10, 1
        %s256 = smul.addr %s255, 256
        %s257 = scalar_lea.vmem [#allocation0], %s256
        %s258 = sand.u32 %s10, 1
        %s259 = sand.u32 %s10, 1
        %s260 = smul.addr %s259, 256
        %s261 = scalar_lea.vmem [#allocation0], %s260
        %s262 = sand.u32 %s10, 1
        %s263 = sand.u32 %s10, 1
        %s264 = smul.addr %s263, 256
        %s265 = scalar_lea.vmem [#allocation1], %s264
        %p266 = pneg %p62
        %p267 = pneg %p59
        %s268 = sand.u32 %s49, 1
        %s269 = sand.u32 %s49, 1
        %s270 = smul.addr %s269, 2
        %s271 = scalar_lea.vmem [#allocation3], %s270
        %s272 = smul.u32 32, %s16
        %s273 = smul.u32 32, %s16
        %p274 = scmp.lt.s32.totalorder %s15, 0
        %s275 = ssub.s32 0, %s15
        %s276 = scalar_select %p274, %s275, %s15
        %s277 = sshrl.u32 %s276, 3
        %s278 = ssub.s32 0, %s277
        %s279 = scalar_select %p274, %s278, %s277
        %s280 = sand.u32 %s15, 7
        %s281 = scalar_lea.vmem [#allocation2], %s280
        %v282 = vld [vmem:[%s257] sm:$0xff]
        %283 = vst [vmem:[%s265] sm:$0xff] %v282
        %s284 = scalar_lea.vmem %s265, 8 [#allocation1]
        %s285 = scalar_lea.vmem %s257, 8 [#allocation0]
        %v286 = vld [vmem:[%s285] sm:$0xff]
        %287 = vst [vmem:[%s284] sm:$0xff] %v286
        %s288 = scalar_lea.vmem %s265, 16 [#allocation1]
        %s289 = scalar_lea.vmem %s257, 16 [#allocation0]
        %v290 = vld [vmem:[%s289] sm:$0xff]
        %291 = vst [vmem:[%s288] sm:$0xff] %v290
        %s292 = scalar_lea.vmem %s265, 24 [#allocation1]
        %s293 = scalar_lea.vmem %s257, 24 [#allocation0]
        %v294 = vld [vmem:[%s293] sm:$0xff]
        %295 = vst [vmem:[%s292] sm:$0xff] %v294
        %s296 = scalar_lea.vmem %s265, 32 [#allocation1]
        %s297 = scalar_lea.vmem %s257, 32 [#allocation0]
        %v298 = vld [vmem:[%s297] sm:$0xff]
        %299 = vst [vmem:[%s296] sm:$0xff] %v298
        %s300 = scalar_lea.vmem %s265, 40 [#allocation1]
        %s301 = scalar_lea.vmem %s257, 40 [#allocation0]
        %v302 = vld [vmem:[%s301] sm:$0xff]
        %303 = vst [vmem:[%s300] sm:$0xff] %v302
        %s304 = scalar_lea.vmem %s265, 48 [#allocation1]
        %s305 = scalar_lea.vmem %s257, 48 [#allocation0]
        %v306 = vld [vmem:[%s305] sm:$0xff]
        %307 = vst [vmem:[%s304] sm:$0xff] %v306
        %s308 = scalar_lea.vmem %s265, 56 [#allocation1]
        %s309 = scalar_lea.vmem %s257, 56 [#allocation0]
        %v310 = vld [vmem:[%s309] sm:$0xff]
        %311 = vst [vmem:[%s308] sm:$0xff] %v310
        %s312 = scalar_lea.vmem %s265, 64 [#allocation1]
        %s313 = scalar_lea.vmem %s257, 64 [#allocation0]
        %v314 = vld [vmem:[%s313] sm:$0xff]
        %315 = vst [vmem:[%s312] sm:$0xff] %v314
        %s316 = scalar_lea.vmem %s265, 72 [#allocation1]
        %s317 = scalar_lea.vmem %s257, 72 [#allocation0]
        %v318 = vld [vmem:[%s317] sm:$0xff]
        %319 = vst [vmem:[%s316] sm:$0xff] %v318
        %s320 = scalar_lea.vmem %s265, 80 [#allocation1]
        %s321 = scalar_lea.vmem %s257, 80 [#allocation0]
        %v322 = vld [vmem:[%s321] sm:$0xff]
        %323 = vst [vmem:[%s320] sm:$0xff] %v322
        %s324 = scalar_lea.vmem %s265, 88 [#allocation1]
        %s325 = scalar_lea.vmem %s257, 88 [#allocation0]
        %v326 = vld [vmem:[%s325] sm:$0xff]
        %327 = vst [vmem:[%s324] sm:$0xff] %v326
        %s328 = scalar_lea.vmem %s265, 96 [#allocation1]
        %s329 = scalar_lea.vmem %s257, 96 [#allocation0]
        %v330 = vld [vmem:[%s329] sm:$0xff]
        %331 = vst [vmem:[%s328] sm:$0xff] %v330
        %s332 = scalar_lea.vmem %s265, 104 [#allocation1]
        %s333 = scalar_lea.vmem %s257, 104 [#allocation0]
        %v334 = vld [vmem:[%s333] sm:$0xff]
        %335 = vst [vmem:[%s332] sm:$0xff] %v334
        %s336 = scalar_lea.vmem %s265, 112 [#allocation1]
        %s337 = scalar_lea.vmem %s257, 112 [#allocation0]
        %v338 = vld [vmem:[%s337] sm:$0xff]
        %339 = vst [vmem:[%s336] sm:$0xff] %v338
        %s340 = scalar_lea.vmem %s265, 120 [#allocation1]
        %s341 = scalar_lea.vmem %s257, 120 [#allocation0]
        %v342 = vld [vmem:[%s341] sm:$0xff]
        %343 = vst [vmem:[%s340] sm:$0xff] %v342
        %s344 = scalar_lea.vmem %s265, 128 [#allocation1]
        %s345 = scalar_lea.vmem %s257, 128 [#allocation0]
        %v346 = vld [vmem:[%s345] sm:$0xff]
        %347 = vst [vmem:[%s344] sm:$0xff] %v346
        %s348 = scalar_lea.vmem %s265, 136 [#allocation1]
        %s349 = scalar_lea.vmem %s257, 136 [#allocation0]
        %v350 = vld [vmem:[%s349] sm:$0xff]
        %351 = vst [vmem:[%s348] sm:$0xff] %v350
        %s352 = scalar_lea.vmem %s265, 144 [#allocation1]
        %s353 = scalar_lea.vmem %s257, 144 [#allocation0]
        %v354 = vld [vmem:[%s353] sm:$0xff]
        %355 = vst [vmem:[%s352] sm:$0xff] %v354
        %s356 = scalar_lea.vmem %s265, 152 [#allocation1]
        %s357 = scalar_lea.vmem %s257, 152 [#allocation0]
        %v358 = vld [vmem:[%s357] sm:$0xff]
        %359 = vst [vmem:[%s356] sm:$0xff] %v358
        %s360 = scalar_lea.vmem %s265, 160 [#allocation1]
        %s361 = scalar_lea.vmem %s257, 160 [#allocation0]
        %v362 = vld [vmem:[%s361] sm:$0xff]
        %363 = vst [vmem:[%s360] sm:$0xff] %v362
        %s364 = scalar_lea.vmem %s265, 168 [#allocation1]
        %s365 = scalar_lea.vmem %s257, 168 [#allocation0]
        %v366 = vld [vmem:[%s365] sm:$0xff]
        %367 = vst [vmem:[%s364] sm:$0xff] %v366
        %s368 = scalar_lea.vmem %s265, 176 [#allocation1]
        %s369 = scalar_lea.vmem %s257, 176 [#allocation0]
        %v370 = vld [vmem:[%s369] sm:$0xff]
        %371 = vst [vmem:[%s368] sm:$0xff] %v370
        %s372 = scalar_lea.vmem %s265, 184 [#allocation1]
        %s373 = scalar_lea.vmem %s257, 184 [#allocation0]
        %v374 = vld [vmem:[%s373] sm:$0xff]
        %375 = vst [vmem:[%s372] sm:$0xff] %v374
        %s376 = scalar_lea.vmem %s265, 192 [#allocation1]
        %s377 = scalar_lea.vmem %s257, 192 [#allocation0]
        %v378 = vld [vmem:[%s377] sm:$0xff]
        %379 = vst [vmem:[%s376] sm:$0xff] %v378
        %s380 = scalar_lea.vmem %s265, 200 [#allocation1]
        %s381 = scalar_lea.vmem %s257, 200 [#allocation0]
        %v382 = vld [vmem:[%s381] sm:$0xff]
        %383 = vst [vmem:[%s380] sm:$0xff] %v382
        %s384 = scalar_lea.vmem %s265, 208 [#allocation1]
        %s385 = scalar_lea.vmem %s257, 208 [#allocation0]
        %v386 = vld [vmem:[%s385] sm:$0xff]
        %387 = vst [vmem:[%s384] sm:$0xff] %v386
        %s388 = scalar_lea.vmem %s265, 216 [#allocation1]
        %s389 = scalar_lea.vmem %s257, 216 [#allocation0]
        %v390 = vld [vmem:[%s389] sm:$0xff]
        %391 = vst [vmem:[%s388] sm:$0xff] %v390
        %s392 = scalar_lea.vmem %s265, 224 [#allocation1]
        %s393 = scalar_lea.vmem %s257, 224 [#allocation0]
        %v394 = vld [vmem:[%s393] sm:$0xff]
        %395 = vst [vmem:[%s392] sm:$0xff] %v394
        %s396 = scalar_lea.vmem %s265, 232 [#allocation1]
        %s397 = scalar_lea.vmem %s257, 232 [#allocation0]
        %v398 = vld [vmem:[%s397] sm:$0xff]
        %399 = vst [vmem:[%s396] sm:$0xff] %v398
        %s400 = scalar_lea.vmem %s265, 240 [#allocation1]
        %s401 = scalar_lea.vmem %s257, 240 [#allocation0]
        %v402 = vld [vmem:[%s401] sm:$0xff]
        %403 = vst [vmem:[%s400] sm:$0xff] %v402
        %s404 = scalar_lea.vmem %s265, 248 [#allocation1]
        %s405 = scalar_lea.vmem %s257, 248 [#allocation0]
        %v406 = vld [vmem:[%s405] sm:$0xff]
        %407 = vst [vmem:[%s404] sm:$0xff] %v406
        %408 = vst [vmem:[%s281] sm:$0x1] 0.0
        loop: start=0, step=1, limit=49
        $region55: #{custom-call.7} parent=53 // loop_pre_header
          _
        $region56: #{custom-call.7} parent=53 // loop_header
          %s410 = sphi 0, %s414
          %p411 = scmp.ge.s32.totalorder %s410, 49
        $region57: #{custom-call.7} parent=53 // loop_header_branch
          %413 = sbr.rel (%p411) target = $region61
        $region58: #{custom-call.7} parent=53 // loop_body
          %v415 = vld [vmem:[%s265] sm:$0xff]
          %v416 = vlaneseq
          %v417 = vshrl.u32 %v416, 7
          %v419 = vstv %s410
          %vm420 = vcmp.gt.s32.totalorder %v417, %v419
          %v421 = vsel %vm420, %v415, 0.0
          %v422 = vmul.f32 %v421, %v421
          %s423 = scalar_lea.vmem %s265, 8 [#allocation1]
          %v424 = vld [vmem:[%s423] sm:$0xff]
          %v425 = vlaneseq
          %v426 = vshrl.u32 %v425, 7
          %v427 = vadd.s32 %v426, 8
          %v428 = vstv %s410
          %vm429 = vcmp.gt.s32.totalorder %v427, %v428
          %v430 = vsel %vm429, %v424, 0.0
          %v431 = vmul.f32 %v430, %v430
          %v432 = vadd.f32 %v422, %v431
          %s433 = scalar_lea.vmem %s265, 16 [#allocation1]
          %v434 = vld [vmem:[%s433] sm:$0xff]
          %v435 = vlaneseq
          %v436 = vshrl.u32 %v435, 7
          %v437 = vadd.s32 %v436, 16
          %v438 = vstv %s410
          %vm439 = vcmp.gt.s32.totalorder %v437, %v438
          %v440 = vsel %vm439, %v434, 0.0
          %v441 = vmul.f32 %v440, %v440
          %v442 = vadd.f32 %v432, %v441
          %s443 = scalar_lea.vmem %s265, 24 [#allocation1]
          %v444 = vld [vmem:[%s443] sm:$0xff]
          %v445 = vlaneseq
          %v446 = vshrl.u32 %v445, 7
          %v447 = vadd.s32 %v446, 24
          %v448 = vstv %s410
          %vm449 = vcmp.gt.s32.totalorder %v447, %v448
          %v450 = vsel %vm449, %v444, 0.0
          %v451 = vmul.f32 %v450, %v450
          %v452 = vadd.f32 %v442, %v451
          %s453 = scalar_lea.vmem %s265, 32 [#allocation1]
          %v454 = vld [vmem:[%s453] sm:$0xff]
          %v455 = vlaneseq
          %v456 = vshrl.u32 %v455, 7
          %v457 = vadd.s32 %v456, 32
          %v458 = vstv %s410
          %vm459 = vcmp.gt.s32.totalorder %v457, %v458
          %v460 = vsel %vm459, %v454, 0.0
          %v461 = vmul.f32 %v460, %v460
          %v462 = vadd.f32 %v452, %v461
          %s463 = scalar_lea.vmem %s265, 40 [#allocation1]
          %v464 = vld [vmem:[%s463] sm:$0xff]
          %v465 = vlaneseq
          %v466 = vshrl.u32 %v465, 7
          %v467 = vadd.s32 %v466, 40
          %v468 = vstv %s410
          %vm469 = vcmp.gt.s32.totalorder %v467, %v468
          %v470 = vsel %vm469, %v464, 0.0
          %v471 = vmul.f32 %v470, %v470
          %v472 = vadd.f32 %v462, %v471
          %s473 = scalar_lea.vmem %s265, 48 [#allocation1]
          %v474 = vld [vmem:[%s473] sm:$0xff]
          %v475 = vlaneseq
          %v476 = vshrl.u32 %v475, 7
          %v477 = vadd.s32 %v476, 48
          %v478 = vstv %s410
          %vm479 = vcmp.gt.s32.totalorder %v477, %v478
          %v480 = vsel %vm479, %v474, 0.0
          %v481 = vmul.f32 %v480, %v480
          %v482 = vadd.f32 %v472, %v481
          %s483 = scalar_lea.vmem %s265, 56 [#allocation1]
          %v484 = vld [vmem:[%s483] sm:$0xff]
          %v485 = vlaneseq
          %v486 = vshrl.u32 %v485, 7
          %v487 = vadd.s32 %v486, 56
          %v488 = vstv %s410
          %vm489 = vcmp.gt.s32.totalorder %v487, %v488
          %v490 = vsel %vm489, %v484, 0.0
          %v491 = vmul.f32 %v490, %v490
          %v492 = vadd.f32 %v482, %v491
          %s493 = scalar_lea.vmem %s265, 64 [#allocation1]
          %v494 = vld [vmem:[%s493] sm:$0xff]
          %v495 = vlaneseq
          %v496 = vshrl.u32 %v495, 7
          %v497 = vadd.s32 %v496, 64
          %v498 = vstv %s410
          %vm499 = vcmp.gt.s32.totalorder %v497, %v498
          %v500 = vsel %vm499, %v494, 0.0
          %v501 = vmul.f32 %v500, %v500
          %v502 = vadd.f32 %v492, %v501
          %s503 = scalar_lea.vmem %s265, 72 [#allocation1]
          %v504 = vld [vmem:[%s503] sm:$0xff]
          %v505 = vlaneseq
          %v506 = vshrl.u32 %v505, 7
          %v507 = vadd.s32 %v506, 72
          %v508 = vstv %s410
          %vm509 = vcmp.gt.s32.totalorder %v507, %v508
          %v510 = vsel %vm509, %v504, 0.0
          %v511 = vmul.f32 %v510, %v510
          %v512 = vadd.f32 %v502, %v511
          %s513 = scalar_lea.vmem %s265, 80 [#allocation1]
          %v514 = vld [vmem:[%s513] sm:$0xff]
          %v515 = vlaneseq
          %v516 = vshrl.u32 %v515, 7
          %v517 = vadd.s32 %v516, 80
          %v518 = vstv %s410
          %vm519 = vcmp.gt.s32.totalorder %v517, %v518
          %v520 = vsel %vm519, %v514, 0.0
          %v521 = vmul.f32 %v520, %v520
          %v522 = vadd.f32 %v512, %v521
          %s523 = scalar_lea.vmem %s265, 88 [#allocation1]
          %v524 = vld [vmem:[%s523] sm:$0xff]
          %v525 = vlaneseq
          %v526 = vshrl.u32 %v525, 7
          %v527 = vadd.s32 %v526, 88
          %v528 = vstv %s410
          %vm529 = vcmp.gt.s32.totalorder %v527, %v528
          %v530 = vsel %vm529, %v524, 0.0
          %v531 = vmul.f32 %v530, %v530
          %v532 = vadd.f32 %v522, %v531
          %s533 = scalar_lea.vmem %s265, 96 [#allocation1]
          %v534 = vld [vmem:[%s533] sm:$0xff]
          %v535 = vlaneseq
          %v536 = vshrl.u32 %v535, 7
          %v537 = vadd.s32 %v536, 96
          %v538 = vstv %s410
          %vm539 = vcmp.gt.s32.totalorder %v537, %v538
          %v540 = vsel %vm539, %v534, 0.0
          %v541 = vmul.f32 %v540, %v540
          %v542 = vadd.f32 %v532, %v541
          %s543 = scalar_lea.vmem %s265, 104 [#allocation1]
          %v544 = vld [vmem:[%s543] sm:$0xff]
          %v545 = vlaneseq
          %v546 = vshrl.u32 %v545, 7
          %v547 = vadd.s32 %v546, 104
          %v548 = vstv %s410
          %vm549 = vcmp.gt.s32.totalorder %v547, %v548
          %v550 = vsel %vm549, %v544, 0.0
          %v551 = vmul.f32 %v550, %v550
          %v552 = vadd.f32 %v542, %v551
          %s553 = scalar_lea.vmem %s265, 112 [#allocation1]
          %v554 = vld [vmem:[%s553] sm:$0xff]
          %v555 = vlaneseq
          %v556 = vshrl.u32 %v555, 7
          %v557 = vadd.s32 %v556, 112
          %v558 = vstv %s410
          %vm559 = vcmp.gt.s32.totalorder %v557, %v558
          %v560 = vsel %vm559, %v554, 0.0
          %v561 = vmul.f32 %v560, %v560
          %v562 = vadd.f32 %v552, %v561
          %s563 = scalar_lea.vmem %s265, 120 [#allocation1]
          %v564 = vld [vmem:[%s563] sm:$0xff]
          %v565 = vlaneseq
          %v566 = vshrl.u32 %v565, 7
          %v567 = vadd.s32 %v566, 120
          %v568 = vstv %s410
          %vm569 = vcmp.gt.s32.totalorder %v567, %v568
          %v570 = vsel %vm569, %v564, 0.0
          %v571 = vmul.f32 %v570, %v570
          %v572 = vadd.f32 %v562, %v571
          %s573 = scalar_lea.vmem %s265, 128 [#allocation1]
          %v574 = vld [vmem:[%s573] sm:$0xff]
          %v575 = vlaneseq
          %v576 = vshrl.u32 %v575, 7
          %v577 = vadd.s32 %v576, 128
          %v578 = vstv %s410
          %vm579 = vcmp.gt.s32.totalorder %v577, %v578
          %v580 = vsel %vm579, %v574, 0.0
          %v581 = vmul.f32 %v580, %v580
          %v582 = vadd.f32 %v572, %v581
          %s583 = scalar_lea.vmem %s265, 136 [#allocation1]
          %v584 = vld [vmem:[%s583] sm:$0xff]
          %v585 = vlaneseq
          %v586 = vshrl.u32 %v585, 7
          %v587 = vadd.s32 %v586, 136
          %v588 = vstv %s410
          %vm589 = vcmp.gt.s32.totalorder %v587, %v588
          %v590 = vsel %vm589, %v584, 0.0
          %v591 = vmul.f32 %v590, %v590
          %v592 = vadd.f32 %v582, %v591
          %s593 = scalar_lea.vmem %s265, 144 [#allocation1]
          %v594 = vld [vmem:[%s593] sm:$0xff]
          %v595 = vlaneseq
          %v596 = vshrl.u32 %v595, 7
          %v597 = vadd.s32 %v596, 144
          %v598 = vstv %s410
          %vm599 = vcmp.gt.s32.totalorder %v597, %v598
          %v600 = vsel %vm599, %v594, 0.0
          %v601 = vmul.f32 %v600, %v600
          %v602 = vadd.f32 %v592, %v601
          %s603 = scalar_lea.vmem %s265, 152 [#allocation1]
          %v604 = vld [vmem:[%s603] sm:$0xff]
          %v605 = vlaneseq
          %v606 = vshrl.u32 %v605, 7
          %v607 = vadd.s32 %v606, 152
          %v608 = vstv %s410
          %vm609 = vcmp.gt.s32.totalorder %v607, %v608
          %v610 = vsel %vm609, %v604, 0.0
          %v611 = vmul.f32 %v610, %v610
          %v612 = vadd.f32 %v602, %v611
          %s613 = scalar_lea.vmem %s265, 160 [#allocation1]
          %v614 = vld [vmem:[%s613] sm:$0xff]
          %v615 = vlaneseq
          %v616 = vshrl.u32 %v615, 7
          %v617 = vadd.s32 %v616, 160
          %v618 = vstv %s410
          %vm619 = vcmp.gt.s32.totalorder %v617, %v618
          %v620 = vsel %vm619, %v614, 0.0
          %v621 = vmul.f32 %v620, %v620
          %v622 = vadd.f32 %v612, %v621
          %s623 = scalar_lea.vmem %s265, 168 [#allocation1]
          %v624 = vld [vmem:[%s623] sm:$0xff]
          %v625 = vlaneseq
          %v626 = vshrl.u32 %v625, 7
          %v627 = vadd.s32 %v626, 168
          %v628 = vstv %s410
          %vm629 = vcmp.gt.s32.totalorder %v627, %v628
          %v630 = vsel %vm629, %v624, 0.0
          %v631 = vmul.f32 %v630, %v630
          %v632 = vadd.f32 %v622, %v631
          %s633 = scalar_lea.vmem %s265, 176 [#allocation1]
          %v634 = vld [vmem:[%s633] sm:$0xff]
          %v635 = vlaneseq
          %v636 = vshrl.u32 %v635, 7
          %v637 = vadd.s32 %v636, 176
          %v638 = vstv %s410
          %vm639 = vcmp.gt.s32.totalorder %v637, %v638
          %v640 = vsel %vm639, %v634, 0.0
          %v641 = vmul.f32 %v640, %v640
          %v642 = vadd.f32 %v632, %v641
          %s643 = scalar_lea.vmem %s265, 184 [#allocation1]
          %v644 = vld [vmem:[%s643] sm:$0xff]
          %v645 = vlaneseq
          %v646 = vshrl.u32 %v645, 7
          %v647 = vadd.s32 %v646, 184
          %v648 = vstv %s410
          %vm649 = vcmp.gt.s32.totalorder %v647, %v648
          %v650 = vsel %vm649, %v644, 0.0
          %v651 = vmul.f32 %v650, %v650
          %v652 = vadd.f32 %v642, %v651
          %s653 = scalar_lea.vmem %s265, 192 [#allocation1]
          %v654 = vld [vmem:[%s653] sm:$0xff]
          %v655 = vlaneseq
          %v656 = vshrl.u32 %v655, 7
          %v657 = vadd.s32 %v656, 192
          %v658 = vstv %s410
          %vm659 = vcmp.gt.s32.totalorder %v657, %v658
          %v660 = vsel %vm659, %v654, 0.0
          %v661 = vmul.f32 %v660, %v660
          %v662 = vadd.f32 %v652, %v661
          %s663 = scalar_lea.vmem %s265, 200 [#allocation1]
          %v664 = vld [vmem:[%s663] sm:$0xff]
          %v665 = vlaneseq
          %v666 = vshrl.u32 %v665, 7
          %v667 = vadd.s32 %v666, 200
          %v668 = vstv %s410
          %vm669 = vcmp.gt.s32.totalorder %v667, %v668
          %v670 = vsel %vm669, %v664, 0.0
          %v671 = vmul.f32 %v670, %v670
          %v672 = vadd.f32 %v662, %v671
          %s673 = scalar_lea.vmem %s265, 208 [#allocation1]
          %v674 = vld [vmem:[%s673] sm:$0xff]
          %v675 = vlaneseq
          %v676 = vshrl.u32 %v675, 7
          %v677 = vadd.s32 %v676, 208
          %v678 = vstv %s410
          %vm679 = vcmp.gt.s32.totalorder %v677, %v678
          %v680 = vsel %vm679, %v674, 0.0
          %v681 = vmul.f32 %v680, %v680
          %v682 = vadd.f32 %v672, %v681
          %s683 = scalar_lea.vmem %s265, 216 [#allocation1]
          %v684 = vld [vmem:[%s683] sm:$0xff]
          %v685 = vlaneseq
          %v686 = vshrl.u32 %v685, 7
          %v687 = vadd.s32 %v686, 216
          %v688 = vstv %s410
          %vm689 = vcmp.gt.s32.totalorder %v687, %v688
          %v690 = vsel %vm689, %v684, 0.0
          %v691 = vmul.f32 %v690, %v690
          %v692 = vadd.f32 %v682, %v691
          %s693 = scalar_lea.vmem %s265, 224 [#allocation1]
          %v694 = vld [vmem:[%s693] sm:$0xff]
          %v695 = vlaneseq
          %v696 = vshrl.u32 %v695, 7
          %v697 = vadd.s32 %v696, 224
          %v698 = vstv %s410
          %vm699 = vcmp.gt.s32.totalorder %v697, %v698
          %v700 = vsel %vm699, %v694, 0.0
          %v701 = vmul.f32 %v700, %v700
          %v702 = vadd.f32 %v692, %v701
          %s703 = scalar_lea.vmem %s265, 232 [#allocation1]
          %v704 = vld [vmem:[%s703] sm:$0xff]
          %v705 = vlaneseq
          %v706 = vshrl.u32 %v705, 7
          %v707 = vadd.s32 %v706, 232
          %v708 = vstv %s410
          %vm709 = vcmp.gt.s32.totalorder %v707, %v708
          %v710 = vsel %vm709, %v704, 0.0
          %v711 = vmul.f32 %v710, %v710
          %v712 = vadd.f32 %v702, %v711
          %s713 = scalar_lea.vmem %s265, 240 [#allocation1]
          %v714 = vld [vmem:[%s713] sm:$0xff]
          %v715 = vlaneseq
          %v716 = vshrl.u32 %v715, 7
          %v717 = vadd.s32 %v716, 240
          %v718 = vstv %s410
          %vm719 = vcmp.gt.s32.totalorder %v717, %v718
          %v720 = vsel %vm719, %v714, 0.0
          %v721 = vmul.f32 %v720, %v720
          %v722 = vadd.f32 %v712, %v721
          %s723 = scalar_lea.vmem %s265, 248 [#allocation1]
          %v724 = vld [vmem:[%s723] sm:$0xff]
          %v725 = vlaneseq
          %v726 = vshrl.u32 %v725, 7
          %v727 = vadd.s32 %v726, 248
          %v728 = vstv %s410
          %vm729 = vcmp.gt.s32.totalorder %v727, %v728
          %vm730 = vcmp.lt.s32.totalorder %v727, 256
          %vm731 = vmand %vm729, %vm730
          %v732 = vsel %vm731, %v724, 0.0
          %v733 = vmul.f32 %v732, %v732
          %v734 = vadd.f32 %v722, %v733
          %v735 = vrot.slane %v734, 4
          %v736 = vadd.f32 %v734, %v735
          %v737 = vrot.slane %v736, 2
          %v738 = vadd.f32 %v736, %v737
          %v739 = vrot.slane %v738, 1
          %v740 = vadd.f32 %v738, %v739
          %v741 = vrsqrt.pop %v740
          %v742 = vmul.f32 %v740, %v741
          %vm743 = vcmp.eq.f32.partialorder %v740, inf
          %v744 = vsel %vm743, %v740, %v742
          %vm745 = vcmp.eq.f32.partialorder %v740, 0.0
          %v746 = vand.u32 %v740, 2147483648
          %v747 = vsel %vm745, %v746, %v744
          %vm748 = vcmp.eq.f32.partialorder %v740, 0.0
          %s749 = sshrl.u32 %s410, 3
          %s750 = sand.u32 %s410, 7
          %s751 = smul.addr %s749, 8
          %s752 = sadd.s32 %s750, %s751
          %s753 = scalar_lea.vmem %s265, %s752 [#allocation1]
          %v754 = vld [vmem:[%s753] ss:$0 sm:$0xff]
          %v755 = vand.u32 2147483647, %v754
          %v756 = vmax.f32 %v755, 0.0
          %v757 = vand.u32 2147483647, %v747
          %v758 = vmax.f32 %v756, %v757
          %v759 = vrcp.pop %v758
          %v760 = vmul.f32 %v755, %v759
          %v761 = vmul.f32 %v760, %v760
          %v762 = vrcp.pop %v758
          %v763 = vmul.f32 0.0, %v762
          %v764 = vmul.f32 %v763, %v763
          %v765 = vadd.f32 %v761, %v764
          %v766 = vrcp.pop %v758
          %v767 = vmul.f32 %v757, %v766
          %v768 = vmul.f32 %v767, %v767
          %v769 = vadd.f32 %v765, %v768
          %vm770 = vcmp.eq.f32.partialorder %v758, 0.0
          %v771 = vrsqrt.pop %v769
          %v772 = vmul.f32 %v769, %v771
          %vm773 = vcmp.eq.f32.partialorder %v769, inf
          %v774 = vsel %vm773, %v769, %v772
          %vm775 = vcmp.eq.f32.partialorder %v769, 0.0
          %v776 = vand.u32 %v769, 2147483648
          %v777 = vsel %vm775, %v776, %v774
          %v778 = vmul.f32 %v758, %v777
          %v779 = vsel %vm770, 0.0, %v778
          %vm780 = vcmp.lt.f32.partialorder %v754, 0.0
          %v781 = vxor.u32 %v779, 2147483648
          %v782 = vsel %vm780, %v779, %v781
          %v783 = vsub.f32 %v782, %v754
          %v784 = vrcp.pop %v782
          %v785 = vmul.f32 %v783, %v784
          %v786 = vsel %vm748, %v754, %v782
          %v787 = vsel %vm748, 0.0, %v785
          %v788 = vsub.f32 %v754, %v786
          %s789 = smov %s265
          %v790 = vlaneseq
          %v791 = vshrl.u32 %v790, 7
          %v792 = vmov %v791
          %v793 = vld [vmem:[%s789] sm:$0xff]
          %v795 = vstv %s410
          %vm796 = vcmp.gt.s32.totalorder %v792, %v795
          %v797 = vsel %vm796, %v793, 0.0
          %v798 = vrcp.pop %v788
          %v799 = vmul.f32 %v797, %v798
          %v800 = vsel %vm748, 0.0, %v799
          %v801 = vstv %s410
          %v802 = vlaneseq
          %v803 = vand.u32 %v802, 127
          %vm804 = vcmp.eq.s32.totalorder %v803, %v801
          %v805 = vsel %vm804, %v800, 0.0
          %806 = vadd.xlane.f32.xlu0 %v805
          %v807 = vpop.xlane.xlu0 %806
          %808 = vst [vmem:[#allocation4] sm:$0xff] %v807
          %s809 = scalar_lea.vmem %s789, 8
          %v810 = vld [vmem:[%s809] sm:$0xff]
          %v811 = vadd.s32 %v792, 8
          %v812 = vstv %s410
          %vm813 = vcmp.gt.s32.totalorder %v811, %v812
          %v814 = vsel %vm813, %v810, 0.0
          %v815 = vrcp.pop %v788
          %v816 = vmul.f32 %v814, %v815
          %v817 = vsel %vm748, 0.0, %v816
          %v818 = vstv %s410
          %v819 = vlaneseq
          %v820 = vand.u32 %v819, 127
          %vm821 = vcmp.eq.s32.totalorder %v820, %v818
          %v822 = vsel %vm821, %v817, 0.0
          %823 = vadd.xlane.f32.xlu0 %v822
          %v824 = vpop.xlane.xlu0 %823
          %s825 = scalar_lea.vmem [#allocation4], 8
          %826 = vst [vmem:[%s825] sm:$0xff] %v824
          %s827 = scalar_lea.vmem %s789, 16
          %v828 = vld [vmem:[%s827] sm:$0xff]
          %v829 = vadd.s32 %v792, 16
          %v830 = vstv %s410
          %vm831 = vcmp.gt.s32.totalorder %v829, %v830
          %v832 = vsel %vm831, %v828, 0.0
          %v833 = vrcp.pop %v788
          %v834 = vmul.f32 %v832, %v833
          %v835 = vsel %vm748, 0.0, %v834
          %v836 = vstv %s410
          %v837 = vlaneseq
          %v838 = vand.u32 %v837, 127
          %vm839 = vcmp.eq.s32.totalorder %v838, %v836
          %v840 = vsel %vm839, %v835, 0.0
          %841 = vadd.xlane.f32.xlu0 %v840
          %v842 = vpop.xlane.xlu0 %841
          %s843 = scalar_lea.vmem [#allocation4], 16
          %844 = vst [vmem:[%s843] sm:$0xff] %v842
          %s845 = scalar_lea.vmem %s789, 24
          %v846 = vld [vmem:[%s845] sm:$0xff]
          %v847 = vadd.s32 %v792, 24
          %v848 = vstv %s410
          %vm849 = vcmp.gt.s32.totalorder %v847, %v848
          %v850 = vsel %vm849, %v846, 0.0
          %v851 = vrcp.pop %v788
          %v852 = vmul.f32 %v850, %v851
          %v853 = vsel %vm748, 0.0, %v852
          %v854 = vstv %s410
          %v855 = vlaneseq
          %v856 = vand.u32 %v855, 127
          %vm857 = vcmp.eq.s32.totalorder %v856, %v854
          %v858 = vsel %vm857, %v853, 0.0
          %859 = vadd.xlane.f32.xlu0 %v858
          %v860 = vpop.xlane.xlu0 %859
          %s861 = scalar_lea.vmem [#allocation4], 24
          %862 = vst [vmem:[%s861] sm:$0xff] %v860
          %s863 = scalar_lea.vmem %s789, 32
          %v864 = vld [vmem:[%s863] sm:$0xff]
          %v865 = vadd.s32 %v792, 32
          %v866 = vstv %s410
          %vm867 = vcmp.gt.s32.totalorder %v865, %v866
          %v868 = vsel %vm867, %v864, 0.0
          %v869 = vrcp.pop %v788
          %v870 = vmul.f32 %v868, %v869
          %v871 = vsel %vm748, 0.0, %v870
          %v872 = vstv %s410
          %v873 = vlaneseq
          %v874 = vand.u32 %v873, 127
          %vm875 = vcmp.eq.s32.totalorder %v874, %v872
          %v876 = vsel %vm875, %v871, 0.0
          %877 = vadd.xlane.f32.xlu0 %v876
          %v878 = vpop.xlane.xlu0 %877
          %s879 = scalar_lea.vmem [#allocation4], 32
          %880 = vst [vmem:[%s879] sm:$0xff] %v878
          %s881 = scalar_lea.vmem %s789, 40
          %v882 = vld [vmem:[%s881] sm:$0xff]
          %v883 = vadd.s32 %v792, 40
          %v884 = vstv %s410
          %vm885 = vcmp.gt.s32.totalorder %v883, %v884
          %v886 = vsel %vm885, %v882, 0.0
          %v887 = vrcp.pop %v788
          %v888 = vmul.f32 %v886, %v887
          %v889 = vsel %vm748, 0.0, %v888
          %v890 = vstv %s410
          %v891 = vlaneseq
          %v892 = vand.u32 %v891, 127
          %vm893 = vcmp.eq.s32.totalorder %v892, %v890
          %v894 = vsel %vm893, %v889, 0.0
          %895 = vadd.xlane.f32.xlu0 %v894
          %v896 = vpop.xlane.xlu0 %895
          %s897 = scalar_lea.vmem [#allocation4], 40
          %898 = vst [vmem:[%s897] sm:$0xff] %v896
          %s899 = scalar_lea.vmem %s789, 48
          %v900 = vld [vmem:[%s899] sm:$0xff]
          %v901 = vadd.s32 %v792, 48
          %v902 = vstv %s410
          %vm903 = vcmp.gt.s32.totalorder %v901, %v902
          %v904 = vsel %vm903, %v900, 0.0
          %v905 = vrcp.pop %v788
          %v906 = vmul.f32 %v904, %v905
          %v907 = vsel %vm748, 0.0, %v906
          %v908 = vstv %s410
          %v909 = vlaneseq
          %v910 = vand.u32 %v909, 127
          %vm911 = vcmp.eq.s32.totalorder %v910, %v908
          %v912 = vsel %vm911, %v907, 0.0
          %913 = vadd.xlane.f32.xlu0 %v912
          %v914 = vpop.xlane.xlu0 %913
          %s915 = scalar_lea.vmem [#allocation4], 48
          %916 = vst [vmem:[%s915] sm:$0xff] %v914
          %s917 = scalar_lea.vmem %s789, 56
          %v918 = vld [vmem:[%s917] sm:$0xff]
          %v919 = vadd.s32 %v792, 56
          %v920 = vstv %s410
          %vm921 = vcmp.gt.s32.totalorder %v919, %v920
          %v922 = vsel %vm921, %v918, 0.0
          %v923 = vrcp.pop %v788
          %v924 = vmul.f32 %v922, %v923
          %v925 = vsel %vm748, 0.0, %v924
          %v926 = vstv %s410
          %v927 = vlaneseq
          %v928 = vand.u32 %v927, 127
          %vm929 = vcmp.eq.s32.totalorder %v928, %v926
          %v930 = vsel %vm929, %v925, 0.0
          %931 = vadd.xlane.f32.xlu0 %v930
          %v932 = vpop.xlane.xlu0 %931
          %s933 = scalar_lea.vmem [#allocation4], 56
          %934 = vst [vmem:[%s933] sm:$0xff] %v932
          %s935 = scalar_lea.vmem %s789, 64
          %v936 = vld [vmem:[%s935] sm:$0xff]
          %v937 = vadd.s32 %v792, 64
          %v938 = vstv %s410
          %vm939 = vcmp.gt.s32.totalorder %v937, %v938
          %v940 = vsel %vm939, %v936, 0.0
          %v941 = vrcp.pop %v788
          %v942 = vmul.f32 %v940, %v941
          %v943 = vsel %vm748, 0.0, %v942
          %v944 = vstv %s410
          %v945 = vlaneseq
          %v946 = vand.u32 %v945, 127
          %vm947 = vcmp.eq.s32.totalorder %v946, %v944
          %v948 = vsel %vm947, %v943, 0.0
          %949 = vadd.xlane.f32.xlu0 %v948
          %v950 = vpop.xlane.xlu0 %949
          %s951 = scalar_lea.vmem [#allocation4], 64
          %952 = vst [vmem:[%s951] sm:$0xff] %v950
          %s953 = scalar_lea.vmem %s789, 72
          %v954 = vld [vmem:[%s953] sm:$0xff]
          %v955 = vadd.s32 %v792, 72
          %v956 = vstv %s410
          %vm957 = vcmp.gt.s32.totalorder %v955, %v956
          %v958 = vsel %vm957, %v954, 0.0
          %v959 = vrcp.pop %v788
          %v960 = vmul.f32 %v958, %v959
          %v961 = vsel %vm748, 0.0, %v960
          %v962 = vstv %s410
          %v963 = vlaneseq
          %v964 = vand.u32 %v963, 127
          %vm965 = vcmp.eq.s32.totalorder %v964, %v962
          %v966 = vsel %vm965, %v961, 0.0
          %967 = vadd.xlane.f32.xlu0 %v966
          %v968 = vpop.xlane.xlu0 %967
          %s969 = scalar_lea.vmem [#allocation4], 72
          %970 = vst [vmem:[%s969] sm:$0xff] %v968
          %s971 = scalar_lea.vmem %s789, 80
          %v972 = vld [vmem:[%s971] sm:$0xff]
          %v973 = vadd.s32 %v792, 80
          %v974 = vstv %s410
          %vm975 = vcmp.gt.s32.totalorder %v973, %v974
          %v976 = vsel %vm975, %v972, 0.0
          %v977 = vrcp.pop %v788
          %v978 = vmul.f32 %v976, %v977
          %v979 = vsel %vm748, 0.0, %v978
          %v980 = vstv %s410
          %v981 = vlaneseq
          %v982 = vand.u32 %v981, 127
          %vm983 = vcmp.eq.s32.totalorder %v982, %v980
          %v984 = vsel %vm983, %v979, 0.0
          %985 = vadd.xlane.f32.xlu0 %v984
          %v986 = vpop.xlane.xlu0 %985
          %s987 = scalar_lea.vmem [#allocation4], 80
          %988 = vst [vmem:[%s987] sm:$0xff] %v986
          %s989 = scalar_lea.vmem %s789, 88
          %v990 = vld [vmem:[%s989] sm:$0xff]
          %v991 = vadd.s32 %v792, 88
          %v992 = vstv %s410
          %vm993 = vcmp.gt.s32.totalorder %v991, %v992
          %v994 = vsel %vm993, %v990, 0.0
          %v995 = vrcp.pop %v788
          %v996 = vmul.f32 %v994, %v995
          %v997 = vsel %vm748, 0.0, %v996
          %v998 = vstv %s410
          %v999 = vlaneseq
          %v1000 = vand.u32 %v999, 127
          %vm1001 = vcmp.eq.s32.totalorder %v1000, %v998
          %v1002 = vsel %vm1001, %v997, 0.0
          %1003 = vadd.xlane.f32.xlu0 %v1002
          %v1004 = vpop.xlane.xlu0 %1003
          %s1005 = scalar_lea.vmem [#allocation4], 88
          %1006 = vst [vmem:[%s1005] sm:$0xff] %v1004
          %s1007 = scalar_lea.vmem %s789, 96
          %v1008 = vld [vmem:[%s1007] sm:$0xff]
          %v1009 = vadd.s32 %v792, 96
          %v1010 = vstv %s410
          %vm1011 = vcmp.gt.s32.totalorder %v1009, %v1010
          %v1012 = vsel %vm1011, %v1008, 0.0
          %v1013 = vrcp.pop %v788
          %v1014 = vmul.f32 %v1012, %v1013
          %v1015 = vsel %vm748, 0.0, %v1014
          %v1016 = vstv %s410
          %v1017 = vlaneseq
          %v1018 = vand.u32 %v1017, 127
          %vm1019 = vcmp.eq.s32.totalorder %v1018, %v1016
          %v1020 = vsel %vm1019, %v1015, 0.0
          %1021 = vadd.xlane.f32.xlu0 %v1020
          %v1022 = vpop.xlane.xlu0 %1021
          %s1023 = scalar_lea.vmem [#allocation4], 96
          %1024 = vst [vmem:[%s1023] sm:$0xff] %v1022
          %s1025 = scalar_lea.vmem %s789, 104
          %v1026 = vld [vmem:[%s1025] sm:$0xff]
          %v1027 = vadd.s32 %v792, 104
          %v1028 = vstv %s410
          %vm1029 = vcmp.gt.s32.totalorder %v1027, %v1028
          %v1030 = vsel %vm1029, %v1026, 0.0
          %v1031 = vrcp.pop %v788
          %v1032 = vmul.f32 %v1030, %v1031
          %v1033 = vsel %vm748, 0.0, %v1032
          %v1034 = vstv %s410
          %v1035 = vlaneseq
          %v1036 = vand.u32 %v1035, 127
          %vm1037 = vcmp.eq.s32.totalorder %v1036, %v1034
          %v1038 = vsel %vm1037, %v1033, 0.0
          %1039 = vadd.xlane.f32.xlu0 %v1038
          %v1040 = vpop.xlane.xlu0 %1039
          %s1041 = scalar_lea.vmem [#allocation4], 104
          %1042 = vst [vmem:[%s1041] sm:$0xff] %v1040
          %s1043 = scalar_lea.vmem %s789, 112
          %v1044 = vld [vmem:[%s1043] sm:$0xff]
          %v1045 = vadd.s32 %v792, 112
          %v1046 = vstv %s410
          %vm1047 = vcmp.gt.s32.totalorder %v1045, %v1046
          %v1048 = vsel %vm1047, %v1044, 0.0
          %v1049 = vrcp.pop %v788
          %v1050 = vmul.f32 %v1048, %v1049
          %v1051 = vsel %vm748, 0.0, %v1050
          %v1052 = vstv %s410
          %v1053 = vlaneseq
          %v1054 = vand.u32 %v1053, 127
          %vm1055 = vcmp.eq.s32.totalorder %v1054, %v1052
          %v1056 = vsel %vm1055, %v1051, 0.0
          %1057 = vadd.xlane.f32.xlu0 %v1056
          %v1058 = vpop.xlane.xlu0 %1057
          %s1059 = scalar_lea.vmem [#allocation4], 112
          %1060 = vst [vmem:[%s1059] sm:$0xff] %v1058
          %s1061 = scalar_lea.vmem %s789, 120
          %v1062 = vld [vmem:[%s1061] sm:$0xff]
          %v1063 = vadd.s32 %v792, 120
          %v1064 = vstv %s410
          %vm1065 = vcmp.gt.s32.totalorder %v1063, %v1064
          %v1066 = vsel %vm1065, %v1062, 0.0
          %v1067 = vrcp.pop %v788
          %v1068 = vmul.f32 %v1066, %v1067
          %v1069 = vsel %vm748, 0.0, %v1068
          %v1070 = vstv %s410
          %v1071 = vlaneseq
          %v1072 = vand.u32 %v1071, 127
          %vm1073 = vcmp.eq.s32.totalorder %v1072, %v1070
          %v1074 = vsel %vm1073, %v1069, 0.0
          %1075 = vadd.xlane.f32.xlu0 %v1074
          %v1076 = vpop.xlane.xlu0 %1075
          %s1077 = scalar_lea.vmem [#allocation4], 120
          %1078 = vst [vmem:[%s1077] sm:$0xff] %v1076
          %s1079 = scalar_lea.vmem %s789, 128
          %v1080 = vld [vmem:[%s1079] sm:$0xff]
          %v1081 = vadd.s32 %v792, 128
          %v1082 = vstv %s410
          %vm1083 = vcmp.gt.s32.totalorder %v1081, %v1082
          %v1084 = vsel %vm1083, %v1080, 0.0
          %v1085 = vrcp.pop %v788
          %v1086 = vmul.f32 %v1084, %v1085
          %v1087 = vsel %vm748, 0.0, %v1086
          %v1088 = vstv %s410
          %v1089 = vlaneseq
          %v1090 = vand.u32 %v1089, 127
          %vm1091 = vcmp.eq.s32.totalorder %v1090, %v1088
          %v1092 = vsel %vm1091, %v1087, 0.0
          %1093 = vadd.xlane.f32.xlu0 %v1092
          %v1094 = vpop.xlane.xlu0 %1093
          %s1095 = scalar_lea.vmem [#allocation4], 128
          %1096 = vst [vmem:[%s1095] sm:$0xff] %v1094
          %s1097 = scalar_lea.vmem %s789, 136
          %v1098 = vld [vmem:[%s1097] sm:$0xff]
          %v1099 = vadd.s32 %v792, 136
          %v1100 = vstv %s410
          %vm1101 = vcmp.gt.s32.totalorder %v1099, %v1100
          %v1102 = vsel %vm1101, %v1098, 0.0
          %v1103 = vrcp.pop %v788
          %v1104 = vmul.f32 %v1102, %v1103
          %v1105 = vsel %vm748, 0.0, %v1104
          %v1106 = vstv %s410
          %v1107 = vlaneseq
          %v1108 = vand.u32 %v1107, 127
          %vm1109 = vcmp.eq.s32.totalorder %v1108, %v1106
          %v1110 = vsel %vm1109, %v1105, 0.0
          %1111 = vadd.xlane.f32.xlu0 %v1110
          %v1112 = vpop.xlane.xlu0 %1111
          %s1113 = scalar_lea.vmem [#allocation4], 136
          %1114 = vst [vmem:[%s1113] sm:$0xff] %v1112
          %s1115 = scalar_lea.vmem %s789, 144
          %v1116 = vld [vmem:[%s1115] sm:$0xff]
          %v1117 = vadd.s32 %v792, 144
          %v1118 = vstv %s410
          %vm1119 = vcmp.gt.s32.totalorder %v1117, %v1118
          %v1120 = vsel %vm1119, %v1116, 0.0
          %v1121 = vrcp.pop %v788
          %v1122 = vmul.f32 %v1120, %v1121
          %v1123 = vsel %vm748, 0.0, %v1122
          %v1124 = vstv %s410
          %v1125 = vlaneseq
          %v1126 = vand.u32 %v1125, 127
          %vm1127 = vcmp.eq.s32.totalorder %v1126, %v1124
          %v1128 = vsel %vm1127, %v1123, 0.0
          %1129 = vadd.xlane.f32.xlu0 %v1128
          %v1130 = vpop.xlane.xlu0 %1129
          %s1131 = scalar_lea.vmem [#allocation4], 144
          %1132 = vst [vmem:[%s1131] sm:$0xff] %v1130
          %s1133 = scalar_lea.vmem %s789, 152
          %v1134 = vld [vmem:[%s1133] sm:$0xff]
          %v1135 = vadd.s32 %v792, 152
          %v1136 = vstv %s410
          %vm1137 = vcmp.gt.s32.totalorder %v1135, %v1136
          %v1138 = vsel %vm1137, %v1134, 0.0
          %v1139 = vrcp.pop %v788
          %v1140 = vmul.f32 %v1138, %v1139
          %v1141 = vsel %vm748, 0.0, %v1140
          %v1142 = vstv %s410
          %v1143 = vlaneseq
          %v1144 = vand.u32 %v1143, 127
          %vm1145 = vcmp.eq.s32.totalorder %v1144, %v1142
          %v1146 = vsel %vm1145, %v1141, 0.0
          %1147 = vadd.xlane.f32.xlu0 %v1146
          %v1148 = vpop.xlane.xlu0 %1147
          %s1149 = scalar_lea.vmem [#allocation4], 152
          %1150 = vst [vmem:[%s1149] sm:$0xff] %v1148
          %s1151 = scalar_lea.vmem %s789, 160
          %v1152 = vld [vmem:[%s1151] sm:$0xff]
          %v1153 = vadd.s32 %v792, 160
          %v1154 = vstv %s410
          %vm1155 = vcmp.gt.s32.totalorder %v1153, %v1154
          %v1156 = vsel %vm1155, %v1152, 0.0
          %v1157 = vrcp.pop %v788
          %v1158 = vmul.f32 %v1156, %v1157
          %v1159 = vsel %vm748, 0.0, %v1158
          %v1160 = vstv %s410
          %v1161 = vlaneseq
          %v1162 = vand.u32 %v1161, 127
          %vm1163 = vcmp.eq.s32.totalorder %v1162, %v1160
          %v1164 = vsel %vm1163, %v1159, 0.0
          %1165 = vadd.xlane.f32.xlu0 %v1164
          %v1166 = vpop.xlane.xlu0 %1165
          %s1167 = scalar_lea.vmem [#allocation4], 160
          %1168 = vst [vmem:[%s1167] sm:$0xff] %v1166
          %s1169 = scalar_lea.vmem %s789, 168
          %v1170 = vld [vmem:[%s1169] sm:$0xff]
          %v1171 = vadd.s32 %v792, 168
          %v1172 = vstv %s410
          %vm1173 = vcmp.gt.s32.totalorder %v1171, %v1172
          %v1174 = vsel %vm1173, %v1170, 0.0
          %v1175 = vrcp.pop %v788
          %v1176 = vmul.f32 %v1174, %v1175
          %v1177 = vsel %vm748, 0.0, %v1176
          %v1178 = vstv %s410
          %v1179 = vlaneseq
          %v1180 = vand.u32 %v1179, 127
          %vm1181 = vcmp.eq.s32.totalorder %v1180, %v1178
          %v1182 = vsel %vm1181, %v1177, 0.0
          %1183 = vadd.xlane.f32.xlu0 %v1182
          %v1184 = vpop.xlane.xlu0 %1183
          %s1185 = scalar_lea.vmem [#allocation4], 168
          %1186 = vst [vmem:[%s1185] sm:$0xff] %v1184
          %s1187 = scalar_lea.vmem %s789, 176
          %v1188 = vld [vmem:[%s1187] sm:$0xff]
          %v1189 = vadd.s32 %v792, 176
          %v1190 = vstv %s410
          %vm1191 = vcmp.gt.s32.totalorder %v1189, %v1190
          %v1192 = vsel %vm1191, %v1188, 0.0
          %v1193 = vrcp.pop %v788
          %v1194 = vmul.f32 %v1192, %v1193
          %v1195 = vsel %vm748, 0.0, %v1194
          %v1196 = vstv %s410
          %v1197 = vlaneseq
          %v1198 = vand.u32 %v1197, 127
          %vm1199 = vcmp.eq.s32.totalorder %v1198, %v1196
          %v1200 = vsel %vm1199, %v1195, 0.0
          %1201 = vadd.xlane.f32.xlu0 %v1200
          %v1202 = vpop.xlane.xlu0 %1201
          %s1203 = scalar_lea.vmem [#allocation4], 176
          %1204 = vst [vmem:[%s1203] sm:$0xff] %v1202
          %s1205 = scalar_lea.vmem %s789, 184
          %v1206 = vld [vmem:[%s1205] sm:$0xff]
          %v1207 = vadd.s32 %v792, 184
          %v1208 = vstv %s410
          %vm1209 = vcmp.gt.s32.totalorder %v1207, %v1208
          %v1210 = vsel %vm1209, %v1206, 0.0
          %v1211 = vrcp.pop %v788
          %v1212 = vmul.f32 %v1210, %v1211
          %v1213 = vsel %vm748, 0.0, %v1212
          %v1214 = vstv %s410
          %v1215 = vlaneseq
          %v1216 = vand.u32 %v1215, 127
          %vm1217 = vcmp.eq.s32.totalorder %v1216, %v1214
          %v1218 = vsel %vm1217, %v1213, 0.0
          %1219 = vadd.xlane.f32.xlu0 %v1218
          %v1220 = vpop.xlane.xlu0 %1219
          %s1221 = scalar_lea.vmem [#allocation4], 184
          %1222 = vst [vmem:[%s1221] sm:$0xff] %v1220
          %s1223 = scalar_lea.vmem %s789, 192
          %v1224 = vld [vmem:[%s1223] sm:$0xff]
          %v1225 = vadd.s32 %v792, 192
          %v1226 = vstv %s410
          %vm1227 = vcmp.gt.s32.totalorder %v1225, %v1226
          %v1228 = vsel %vm1227, %v1224, 0.0
          %v1229 = vrcp.pop %v788
          %v1230 = vmul.f32 %v1228, %v1229
          %v1231 = vsel %vm748, 0.0, %v1230
          %v1232 = vstv %s410
          %v1233 = vlaneseq
          %v1234 = vand.u32 %v1233, 127
          %vm1235 = vcmp.eq.s32.totalorder %v1234, %v1232
          %v1236 = vsel %vm1235, %v1231, 0.0
          %1237 = vadd.xlane.f32.xlu0 %v1236
          %v1238 = vpop.xlane.xlu0 %1237
          %s1239 = scalar_lea.vmem [#allocation4], 192
          %1240 = vst [vmem:[%s1239] sm:$0xff] %v1238
          %s1241 = scalar_lea.vmem %s789, 200
          %v1242 = vld [vmem:[%s1241] sm:$0xff]
          %v1243 = vadd.s32 %v792, 200
          %v1244 = vstv %s410
          %vm1245 = vcmp.gt.s32.totalorder %v1243, %v1244
          %v1246 = vsel %vm1245, %v1242, 0.0
          %v1247 = vrcp.pop %v788
          %v1248 = vmul.f32 %v1246, %v1247
          %v1249 = vsel %vm748, 0.0, %v1248
          %v1250 = vstv %s410
          %v1251 = vlaneseq
          %v1252 = vand.u32 %v1251, 127
          %vm1253 = vcmp.eq.s32.totalorder %v1252, %v1250
          %v1254 = vsel %vm1253, %v1249, 0.0
          %1255 = vadd.xlane.f32.xlu0 %v1254
          %v1256 = vpop.xlane.xlu0 %1255
          %s1257 = scalar_lea.vmem [#allocation4], 200
          %1258 = vst [vmem:[%s1257] sm:$0xff] %v1256
          %s1259 = scalar_lea.vmem %s789, 208
          %v1260 = vld [vmem:[%s1259] sm:$0xff]
          %v1261 = vadd.s32 %v792, 208
          %v1262 = vstv %s410
          %vm1263 = vcmp.gt.s32.totalorder %v1261, %v1262
          %v1264 = vsel %vm1263, %v1260, 0.0
          %v1265 = vrcp.pop %v788
          %v1266 = vmul.f32 %v1264, %v1265
          %v1267 = vsel %vm748, 0.0, %v1266
          %v1268 = vstv %s410
          %v1269 = vlaneseq
          %v1270 = vand.u32 %v1269, 127
          %vm1271 = vcmp.eq.s32.totalorder %v1270, %v1268
          %v1272 = vsel %vm1271, %v1267, 0.0
          %1273 = vadd.xlane.f32.xlu0 %v1272
          %v1274 = vpop.xlane.xlu0 %1273
          %s1275 = scalar_lea.vmem [#allocation4], 208
          %1276 = vst [vmem:[%s1275] sm:$0xff] %v1274
          %s1277 = scalar_lea.vmem %s789, 216
          %v1278 = vld [vmem:[%s1277] sm:$0xff]
          %v1279 = vadd.s32 %v792, 216
          %v1280 = vstv %s410
          %vm1281 = vcmp.gt.s32.totalorder %v1279, %v1280
          %v1282 = vsel %vm1281, %v1278, 0.0
          %v1283 = vrcp.pop %v788
          %v1284 = vmul.f32 %v1282, %v1283
          %v1285 = vsel %vm748, 0.0, %v1284
          %v1286 = vstv %s410
          %v1287 = vlaneseq
          %v1288 = vand.u32 %v1287, 127
          %vm1289 = vcmp.eq.s32.totalorder %v1288, %v1286
          %v1290 = vsel %vm1289, %v1285, 0.0
          %1291 = vadd.xlane.f32.xlu0 %v1290
          %v1292 = vpop.xlane.xlu0 %1291
          %s1293 = scalar_lea.vmem [#allocation4], 216
          %1294 = vst [vmem:[%s1293] sm:$0xff] %v1292
          %s1295 = scalar_lea.vmem %s789, 224
          %v1296 = vld [vmem:[%s1295] sm:$0xff]
          %v1297 = vadd.s32 %v792, 224
          %v1298 = vstv %s410
          %vm1299 = vcmp.gt.s32.totalorder %v1297, %v1298
          %v1300 = vsel %vm1299, %v1296, 0.0
          %v1301 = vrcp.pop %v788
          %v1302 = vmul.f32 %v1300, %v1301
          %v1303 = vsel %vm748, 0.0, %v1302
          %v1304 = vstv %s410
          %v1305 = vlaneseq
          %v1306 = vand.u32 %v1305, 127
          %vm1307 = vcmp.eq.s32.totalorder %v1306, %v1304
          %v1308 = vsel %vm1307, %v1303, 0.0
          %1309 = vadd.xlane.f32.xlu0 %v1308
          %v1310 = vpop.xlane.xlu0 %1309
          %s1311 = scalar_lea.vmem [#allocation4], 224
          %1312 = vst [vmem:[%s1311] sm:$0xff] %v1310
          %s1313 = scalar_lea.vmem %s789, 232
          %v1314 = vld [vmem:[%s1313] sm:$0xff]
          %v1315 = vadd.s32 %v792, 232
          %v1316 = vstv %s410
          %vm1317 = vcmp.gt.s32.totalorder %v1315, %v1316
          %v1318 = vsel %vm1317, %v1314, 0.0
          %v1319 = vrcp.pop %v788
          %v1320 = vmul.f32 %v1318, %v1319
          %v1321 = vsel %vm748, 0.0, %v1320
          %v1322 = vstv %s410
          %v1323 = vlaneseq
          %v1324 = vand.u32 %v1323, 127
          %vm1325 = vcmp.eq.s32.totalorder %v1324, %v1322
          %v1326 = vsel %vm1325, %v1321, 0.0
          %1327 = vadd.xlane.f32.xlu0 %v1326
          %v1328 = vpop.xlane.xlu0 %1327
          %s1329 = scalar_lea.vmem [#allocation4], 232
          %1330 = vst [vmem:[%s1329] sm:$0xff] %v1328
          %s1331 = scalar_lea.vmem %s789, 240
          %v1332 = vld [vmem:[%s1331] sm:$0xff]
          %v1333 = vadd.s32 %v792, 240
          %v1334 = vstv %s410
          %vm1335 = vcmp.gt.s32.totalorder %v1333, %v1334
          %v1336 = vsel %vm1335, %v1332, 0.0
          %v1337 = vrcp.pop %v788
          %v1338 = vmul.f32 %v1336, %v1337
          %v1339 = vsel %vm748, 0.0, %v1338
          %v1340 = vstv %s410
          %v1341 = vlaneseq
          %v1342 = vand.u32 %v1341, 127
          %vm1343 = vcmp.eq.s32.totalorder %v1342, %v1340
          %v1344 = vsel %vm1343, %v1339, 0.0
          %1345 = vadd.xlane.f32.xlu0 %v1344
          %v1346 = vpop.xlane.xlu0 %1345
          %s1347 = scalar_lea.vmem [#allocation4], 240
          %1348 = vst [vmem:[%s1347] sm:$0xff] %v1346
          %s1349 = scalar_lea.vmem %s789, 248
          %v1350 = vld [vmem:[%s1349] sm:$0xff]
          %v1351 = vadd.s32 %v792, 248
          %v1352 = vstv %s410
          %vm1353 = vcmp.gt.s32.totalorder %v1351, %v1352
          %vm1354 = vcmp.lt.s32.totalorder %v1351, 256
          %vm1355 = vmand %vm1353, %vm1354
          %v1356 = vsel %vm1355, %v1350, 0.0
          %v1357 = vrcp.pop %v788
          %v1358 = vmul.f32 %v1356, %v1357
          %v1359 = vsel %vm748, 0.0, %v1358
          %v1360 = vstv %s410
          %v1361 = vlaneseq
          %v1362 = vand.u32 %v1361, 127
          %vm1363 = vcmp.eq.s32.totalorder %v1362, %v1360
          %v1364 = vsel %vm1363, %v1359, 0.0
          %1365 = vadd.xlane.f32.xlu0 %v1364
          %v1366 = vpop.xlane.xlu0 %1365
          %s1367 = scalar_lea.vmem [#allocation4], 248
          %1368 = vst [vmem:[%s1367] sm:$0xff] %v1366
          %s1369 = scalar_lea.vmem [#allocation4], %s410
          %1370 = vst [vmem:[%s1369] sm:$0x1] 1.0
          %v1371 = vstv %s410
          %v1372 = vlaneseq
          %v1373 = vand.u32 %v1372, 127
          %vm1374 = vcmp.eq.s32.totalorder %v1373, %v1371
          %v1375 = vsel %vm1374, %v787, 0.0
          %1376 = vadd.xlane.f32.xlu0 %v1375
          %v1377 = vpop.xlane.xlu0 %1376
          %v1378 = vstv %s410
          %v1379 = vlaneseq
          %v1380 = vand.u32 %v1379, 127
          %vm1381 = vcmp.eq.s32.totalorder %v1380, %v1378
          %v1382 = vld [vmem:[%s281] ss:$0 sm:$0xff]
          %v1383 = vsel %vm1381, %v1377, %v1382
          %1384 = vst [vmem:[%s281] sm:$0x1] %v1383
          %s1385 = smov %s265
          %s1386 = smov [#allocation4]
          %v1387 = vlaneseq
          %v1388 = vshrl.u32 %v1387, 7
          %v1389 = vmov %v1388
          %v1391 = vld [vmem:[%s1386] sm:$0xff]
          %v1392 = vld [vmem:[%s1385] sm:$0xff]
          %v1393 = vmul.f32 %v1391, %v1392
          %v1394 = vadd.s32 %v1389, 8
          %s1395 = scalar_lea.vmem %s1386, 8
          %v1396 = vld [vmem:[%s1395] sm:$0xff]
          %s1397 = scalar_lea.vmem %s1385, 8
          %v1398 = vld [vmem:[%s1397] sm:$0xff]
          %v1399 = vmul.f32 %v1396, %v1398
          %v1400 = vadd.f32 %v1393, %v1399
          %v1401 = vadd.s32 %v1389, 16
          %s1402 = scalar_lea.vmem %s1386, 16
          %v1403 = vld [vmem:[%s1402] sm:$0xff]
          %s1404 = scalar_lea.vmem %s1385, 16
          %v1405 = vld [vmem:[%s1404] sm:$0xff]
          %v1406 = vmul.f32 %v1403, %v1405
          %v1407 = vadd.f32 %v1400, %v1406
          %v1408 = vadd.s32 %v1389, 24
          %s1409 = scalar_lea.vmem %s1386, 24
          %v1410 = vld [vmem:[%s1409] sm:$0xff]
          %s1411 = scalar_lea.vmem %s1385, 24
          %v1412 = vld [vmem:[%s1411] sm:$0xff]
          %v1413 = vmul.f32 %v1410, %v1412
          %v1414 = vadd.f32 %v1407, %v1413
          %v1415 = vadd.s32 %v1389, 32
          %s1416 = scalar_lea.vmem %s1386, 32
          %v1417 = vld [vmem:[%s1416] sm:$0xff]
          %s1418 = scalar_lea.vmem %s1385, 32
          %v1419 = vld [vmem:[%s1418] sm:$0xff]
          %v1420 = vmul.f32 %v1417, %v1419
          %v1421 = vadd.f32 %v1414, %v1420
          %v1422 = vadd.s32 %v1389, 40
          %s1423 = scalar_lea.vmem %s1386, 40
          %v1424 = vld [vmem:[%s1423] sm:$0xff]
          %s1425 = scalar_lea.vmem %s1385, 40
          %v1426 = vld [vmem:[%s1425] sm:$0xff]
          %v1427 = vmul.f32 %v1424, %v1426
          %v1428 = vadd.f32 %v1421, %v1427
          %v1429 = vadd.s32 %v1389, 48
          %s1430 = scalar_lea.vmem %s1386, 48
          %v1431 = vld [vmem:[%s1430] sm:$0xff]
          %s1432 = scalar_lea.vmem %s1385, 48
          %v1433 = vld [vmem:[%s1432] sm:$0xff]
          %v1434 = vmul.f32 %v1431, %v1433
          %v1435 = vadd.f32 %v1428, %v1434
          %v1436 = vadd.s32 %v1389, 56
          %s1437 = scalar_lea.vmem %s1386, 56
          %v1438 = vld [vmem:[%s1437] sm:$0xff]
          %s1439 = scalar_lea.vmem %s1385, 56
          %v1440 = vld [vmem:[%s1439] sm:$0xff]
          %v1441 = vmul.f32 %v1438, %v1440
          %v1442 = vadd.f32 %v1435, %v1441
          %v1443 = vadd.s32 %v1389, 64
          %s1444 = scalar_lea.vmem %s1386, 64
          %v1445 = vld [vmem:[%s1444] sm:$0xff]
          %s1446 = scalar_lea.vmem %s1385, 64
          %v1447 = vld [vmem:[%s1446] sm:$0xff]
          %v1448 = vmul.f32 %v1445, %v1447
          %v1449 = vadd.f32 %v1442, %v1448
          %v1450 = vadd.s32 %v1389, 72
          %s1451 = scalar_lea.vmem %s1386, 72
          %v1452 = vld [vmem:[%s1451] sm:$0xff]
          %s1453 = scalar_lea.vmem %s1385, 72
          %v1454 = vld [vmem:[%s1453] sm:$0xff]
          %v1455 = vmul.f32 %v1452, %v1454
          %v1456 = vadd.f32 %v1449, %v1455
          %v1457 = vadd.s32 %v1389, 80
          %s1458 = scalar_lea.vmem %s1386, 80
          %v1459 = vld [vmem:[%s1458] sm:$0xff]
          %s1460 = scalar_lea.vmem %s1385, 80
          %v1461 = vld [vmem:[%s1460] sm:$0xff]
          %v1462 = vmul.f32 %v1459, %v1461
          %v1463 = vadd.f32 %v1456, %v1462
          %v1464 = vadd.s32 %v1389, 88
          %s1465 = scalar_lea.vmem %s1386, 88
          %v1466 = vld [vmem:[%s1465] sm:$0xff]
          %s1467 = scalar_lea.vmem %s1385, 88
          %v1468 = vld [vmem:[%s1467] sm:$0xff]
          %v1469 = vmul.f32 %v1466, %v1468
          %v1470 = vadd.f32 %v1463, %v1469
          %v1471 = vadd.s32 %v1389, 96
          %s1472 = scalar_lea.vmem %s1386, 96
          %v1473 = vld [vmem:[%s1472] sm:$0xff]
          %s1474 = scalar_lea.vmem %s1385, 96
          %v1475 = vld [vmem:[%s1474] sm:$0xff]
          %v1476 = vmul.f32 %v1473, %v1475
          %v1477 = vadd.f32 %v1470, %v1476
          %v1478 = vadd.s32 %v1389, 104
          %s1479 = scalar_lea.vmem %s1386, 104
          %v1480 = vld [vmem:[%s1479] sm:$0xff]
          %s1481 = scalar_lea.vmem %s1385, 104
          %v1482 = vld [vmem:[%s1481] sm:$0xff]
          %v1483 = vmul.f32 %v1480, %v1482
          %v1484 = vadd.f32 %v1477, %v1483
          %v1485 = vadd.s32 %v1389, 112
          %s1486 = scalar_lea.vmem %s1386, 112
          %v1487 = vld [vmem:[%s1486] sm:$0xff]
          %s1488 = scalar_lea.vmem %s1385, 112
          %v1489 = vld [vmem:[%s1488] sm:$0xff]
          %v1490 = vmul.f32 %v1487, %v1489
          %v1491 = vadd.f32 %v1484, %v1490
          %v1492 = vadd.s32 %v1389, 120
          %s1493 = scalar_lea.vmem %s1386, 120
          %v1494 = vld [vmem:[%s1493] sm:$0xff]
          %s1495 = scalar_lea.vmem %s1385, 120
          %v1496 = vld [vmem:[%s1495] sm:$0xff]
          %v1497 = vmul.f32 %v1494, %v1496
          %v1498 = vadd.f32 %v1491, %v1497
          %v1499 = vadd.s32 %v1389, 128
          %s1500 = scalar_lea.vmem %s1386, 128
          %v1501 = vld [vmem:[%s1500] sm:$0xff]
          %s1502 = scalar_lea.vmem %s1385, 128
          %v1503 = vld [vmem:[%s1502] sm:$0xff]
          %v1504 = vmul.f32 %v1501, %v1503
          %v1505 = vadd.f32 %v1498, %v1504
          %v1506 = vadd.s32 %v1389, 136
          %s1507 = scalar_lea.vmem %s1386, 136
          %v1508 = vld [vmem:[%s1507] sm:$0xff]
          %s1509 = scalar_lea.vmem %s1385, 136
          %v1510 = vld [vmem:[%s1509] sm:$0xff]
          %v1511 = vmul.f32 %v1508, %v1510
          %v1512 = vadd.f32 %v1505, %v1511
          %v1513 = vadd.s32 %v1389, 144
          %s1514 = scalar_lea.vmem %s1386, 144
          %v1515 = vld [vmem:[%s1514] sm:$0xff]
          %s1516 = scalar_lea.vmem %s1385, 144
          %v1517 = vld [vmem:[%s1516] sm:$0xff]
          %v1518 = vmul.f32 %v1515, %v1517
          %v1519 = vadd.f32 %v1512, %v1518
          %v1520 = vadd.s32 %v1389, 152
          %s1521 = scalar_lea.vmem %s1386, 152
          %v1522 = vld [vmem:[%s1521] sm:$0xff]
          %s1523 = scalar_lea.vmem %s1385, 152
          %v1524 = vld [vmem:[%s1523] sm:$0xff]
          %v1525 = vmul.f32 %v1522, %v1524
          %v1526 = vadd.f32 %v1519, %v1525
          %v1527 = vadd.s32 %v1389, 160
          %s1528 = scalar_lea.vmem %s1386, 160
          %v1529 = vld [vmem:[%s1528] sm:$0xff]
          %s1530 = scalar_lea.vmem %s1385, 160
          %v1531 = vld [vmem:[%s1530] sm:$0xff]
          %v1532 = vmul.f32 %v1529, %v1531
          %v1533 = vadd.f32 %v1526, %v1532
          %v1534 = vadd.s32 %v1389, 168
          %s1535 = scalar_lea.vmem %s1386, 168
          %v1536 = vld [vmem:[%s1535] sm:$0xff]
          %s1537 = scalar_lea.vmem %s1385, 168
          %v1538 = vld [vmem:[%s1537] sm:$0xff]
          %v1539 = vmul.f32 %v1536, %v1538
          %v1540 = vadd.f32 %v1533, %v1539
          %v1541 = vadd.s32 %v1389, 176
          %s1542 = scalar_lea.vmem %s1386, 176
          %v1543 = vld [vmem:[%s1542] sm:$0xff]
          %s1544 = scalar_lea.vmem %s1385, 176
          %v1545 = vld [vmem:[%s1544] sm:$0xff]
          %v1546 = vmul.f32 %v1543, %v1545
          %v1547 = vadd.f32 %v1540, %v1546
          %v1548 = vadd.s32 %v1389, 184
          %s1549 = scalar_lea.vmem %s1386, 184
          %v1550 = vld [vmem:[%s1549] sm:$0xff]
          %s1551 = scalar_lea.vmem %s1385, 184
          %v1552 = vld [vmem:[%s1551] sm:$0xff]
          %v1553 = vmul.f32 %v1550, %v1552
          %v1554 = vadd.f32 %v1547, %v1553
          %v1555 = vadd.s32 %v1389, 192
          %s1556 = scalar_lea.vmem %s1386, 192
          %v1557 = vld [vmem:[%s1556] sm:$0xff]
          %s1558 = scalar_lea.vmem %s1385, 192
          %v1559 = vld [vmem:[%s1558] sm:$0xff]
          %v1560 = vmul.f32 %v1557, %v1559
          %v1561 = vadd.f32 %v1554, %v1560
          %v1562 = vadd.s32 %v1389, 200
          %s1563 = scalar_lea.vmem %s1386, 200
          %v1564 = vld [vmem:[%s1563] sm:$0xff]
          %s1565 = scalar_lea.vmem %s1385, 200
          %v1566 = vld [vmem:[%s1565] sm:$0xff]
          %v1567 = vmul.f32 %v1564, %v1566
          %v1568 = vadd.f32 %v1561, %v1567
          %v1569 = vadd.s32 %v1389, 208
          %s1570 = scalar_lea.vmem %s1386, 208
          %v1571 = vld [vmem:[%s1570] sm:$0xff]
          %s1572 = scalar_lea.vmem %s1385, 208
          %v1573 = vld [vmem:[%s1572] sm:$0xff]
          %v1574 = vmul.f32 %v1571, %v1573
          %v1575 = vadd.f32 %v1568, %v1574
          %v1576 = vadd.s32 %v1389, 216
          %s1577 = scalar_lea.vmem %s1386, 216
          %v1578 = vld [vmem:[%s1577] sm:$0xff]
          %s1579 = scalar_lea.vmem %s1385, 216
          %v1580 = vld [vmem:[%s1579] sm:$0xff]
          %v1581 = vmul.f32 %v1578, %v1580
          %v1582 = vadd.f32 %v1575, %v1581
          %v1583 = vadd.s32 %v1389, 224
          %s1584 = scalar_lea.vmem %s1386, 224
          %v1585 = vld [vmem:[%s1584] sm:$0xff]
          %s1586 = scalar_lea.vmem %s1385, 224
          %v1587 = vld [vmem:[%s1586] sm:$0xff]
          %v1588 = vmul.f32 %v1585, %v1587
          %v1589 = vadd.f32 %v1582, %v1588
          %v1590 = vadd.s32 %v1389, 232
          %s1591 = scalar_lea.vmem %s1386, 232
          %v1592 = vld [vmem:[%s1591] sm:$0xff]
          %s1593 = scalar_lea.vmem %s1385, 232
          %v1594 = vld [vmem:[%s1593] sm:$0xff]
          %v1595 = vmul.f32 %v1592, %v1594
          %v1596 = vadd.f32 %v1589, %v1595
          %v1597 = vadd.s32 %v1389, 240
          %s1598 = scalar_lea.vmem %s1386, 240
          %v1599 = vld [vmem:[%s1598] sm:$0xff]
          %s1600 = scalar_lea.vmem %s1385, 240
          %v1601 = vld [vmem:[%s1600] sm:$0xff]
          %v1602 = vmul.f32 %v1599, %v1601
          %v1603 = vadd.f32 %v1596, %v1602
          %v1604 = vadd.s32 %v1389, 248
          %s1605 = scalar_lea.vmem %s1386, 248
          %v1606 = vld [vmem:[%s1605] sm:$0xff]
          %s1607 = scalar_lea.vmem %s1385, 248
          %v1608 = vld [vmem:[%s1607] sm:$0xff]
          %v1609 = vmul.f32 %v1606, %v1608
          %vm1610 = vcmp.lt.s32.totalorder %v1604, 256
          %v1611 = vsel %vm1610, %v1609, 0.0
          %v1612 = vadd.f32 %v1603, %v1611
          %v1613 = vrot.slane %v1612, 4
          %v1614 = vadd.f32 %v1612, %v1613
          %v1615 = vrot.slane %v1614, 2
          %v1616 = vadd.f32 %v1614, %v1615
          %v1617 = vrot.slane %v1616, 1
          %v1618 = vadd.f32 %v1616, %v1617
          %s1619 = smov %s1385
          %s1620 = smov %s1386
          %v1621 = vlaneseq
          %v1622 = vshrl.u32 %v1621, 7
          %v1623 = vmov %v1622
          %v1624 = vmul.f32 %v1618, %v1377
          %v1626 = vlaneseq
          %v1627 = vand.u32 %v1626, 127
          %v1628 = vld [vmem:[%s1620] sm:$0xff]
          %v1629 = vmul.f32 %v1628, %v1624
          %v1630 = vld [vmem:[%s1619] sm:$0xff]
          %v1631 = vstv %s410
          %vm1632 = vcmp.gt.s32.totalorder %v1627, %v1631
          %v1633 = vsub.f32 %v1630, %v1629
          %v1634 = vsel %vm1632, %v1633, %v1630
          %v1635 = vstv %s410
          %v1636 = vlaneseq
          %v1637 = vand.u32 %v1636, 127
          %vm1638 = vcmp.eq.s32.totalorder %v1637, %v1635
          %v1639 = vstv %s410
          %vm1640 = vcmp.ge.s32.totalorder %v1623, %v1639
          %vm1641 = vmand %vm1638, %vm1640
          %v1642 = vsel %vm1641, %v1628, %v1634
          %1643 = vst [vmem:[%s1619] sm:$0xff] %v1642
          %v1644 = vadd.s32 %v1623, 8
          %v1645 = vlaneseq
          %v1646 = vand.u32 %v1645, 127
          %s1647 = scalar_lea.vmem %s1620, 8
          %v1648 = vld [vmem:[%s1647] sm:$0xff]
          %v1649 = vmul.f32 %v1648, %v1624
          %s1650 = scalar_lea.vmem %s1619, 8
          %v1651 = vld [vmem:[%s1650] sm:$0xff]
          %v1652 = vstv %s410
          %vm1653 = vcmp.gt.s32.totalorder %v1646, %v1652
          %v1654 = vsub.f32 %v1651, %v1649
          %v1655 = vsel %vm1653, %v1654, %v1651
          %v1656 = vstv %s410
          %v1657 = vlaneseq
          %v1658 = vand.u32 %v1657, 127
          %vm1659 = vcmp.eq.s32.totalorder %v1658, %v1656
          %v1660 = vstv %s410
          %vm1661 = vcmp.ge.s32.totalorder %v1644, %v1660
          %vm1662 = vmand %vm1659, %vm1661
          %v1663 = vsel %vm1662, %v1648, %v1655
          %1664 = vst [vmem:[%s1650] sm:$0xff] %v1663
          %v1665 = vadd.s32 %v1623, 16
          %v1666 = vlaneseq
          %v1667 = vand.u32 %v1666, 127
          %s1668 = scalar_lea.vmem %s1620, 16
          %v1669 = vld [vmem:[%s1668] sm:$0xff]
          %v1670 = vmul.f32 %v1669, %v1624
          %s1671 = scalar_lea.vmem %s1619, 16
          %v1672 = vld [vmem:[%s1671] sm:$0xff]
          %v1673 = vstv %s410
          %vm1674 = vcmp.gt.s32.totalorder %v1667, %v1673
          %v1675 = vsub.f32 %v1672, %v1670
          %v1676 = vsel %vm1674, %v1675, %v1672
          %v1677 = vstv %s410
          %v1678 = vlaneseq
          %v1679 = vand.u32 %v1678, 127
          %vm1680 = vcmp.eq.s32.totalorder %v1679, %v1677
          %v1681 = vstv %s410
          %vm1682 = vcmp.ge.s32.totalorder %v1665, %v1681
          %vm1683 = vmand %vm1680, %vm1682
          %v1684 = vsel %vm1683, %v1669, %v1676
          %1685 = vst [vmem:[%s1671] sm:$0xff] %v1684
          %v1686 = vadd.s32 %v1623, 24
          %v1687 = vlaneseq
          %v1688 = vand.u32 %v1687, 127
          %s1689 = scalar_lea.vmem %s1620, 24
          %v1690 = vld [vmem:[%s1689] sm:$0xff]
          %v1691 = vmul.f32 %v1690, %v1624
          %s1692 = scalar_lea.vmem %s1619, 24
          %v1693 = vld [vmem:[%s1692] sm:$0xff]
          %v1694 = vstv %s410
          %vm1695 = vcmp.gt.s32.totalorder %v1688, %v1694
          %v1696 = vsub.f32 %v1693, %v1691
          %v1697 = vsel %vm1695, %v1696, %v1693
          %v1698 = vstv %s410
          %v1699 = vlaneseq
          %v1700 = vand.u32 %v1699, 127
          %vm1701 = vcmp.eq.s32.totalorder %v1700, %v1698
          %v1702 = vstv %s410
          %vm1703 = vcmp.ge.s32.totalorder %v1686, %v1702
          %vm1704 = vmand %vm1701, %vm1703
          %v1705 = vsel %vm1704, %v1690, %v1697
          %1706 = vst [vmem:[%s1692] sm:$0xff] %v1705
          %v1707 = vadd.s32 %v1623, 32
          %v1708 = vlaneseq
          %v1709 = vand.u32 %v1708, 127
          %s1710 = scalar_lea.vmem %s1620, 32
          %v1711 = vld [vmem:[%s1710] sm:$0xff]
          %v1712 = vmul.f32 %v1711, %v1624
          %s1713 = scalar_lea.vmem %s1619, 32
          %v1714 = vld [vmem:[%s1713] sm:$0xff]
          %v1715 = vstv %s410
          %vm1716 = vcmp.gt.s32.totalorder %v1709, %v1715
          %v1717 = vsub.f32 %v1714, %v1712
          %v1718 = vsel %vm1716, %v1717, %v1714
          %v1719 = vstv %s410
          %v1720 = vlaneseq
          %v1721 = vand.u32 %v1720, 127
          %vm1722 = vcmp.eq.s32.totalorder %v1721, %v1719
          %v1723 = vstv %s410
          %vm1724 = vcmp.ge.s32.totalorder %v1707, %v1723
          %vm1725 = vmand %vm1722, %vm1724
          %v1726 = vsel %vm1725, %v1711, %v1718
          %1727 = vst [vmem:[%s1713] sm:$0xff] %v1726
          %v1728 = vadd.s32 %v1623, 40
          %v1729 = vlaneseq
          %v1730 = vand.u32 %v1729, 127
          %s1731 = scalar_lea.vmem %s1620, 40
          %v1732 = vld [vmem:[%s1731] sm:$0xff]
          %v1733 = vmul.f32 %v1732, %v1624
          %s1734 = scalar_lea.vmem %s1619, 40
          %v1735 = vld [vmem:[%s1734] sm:$0xff]
          %v1736 = vstv %s410
          %vm1737 = vcmp.gt.s32.totalorder %v1730, %v1736
          %v1738 = vsub.f32 %v1735, %v1733
          %v1739 = vsel %vm1737, %v1738, %v1735
          %v1740 = vstv %s410
          %v1741 = vlaneseq
          %v1742 = vand.u32 %v1741, 127
          %vm1743 = vcmp.eq.s32.totalorder %v1742, %v1740
          %v1744 = vstv %s410
          %vm1745 = vcmp.ge.s32.totalorder %v1728, %v1744
          %vm1746 = vmand %vm1743, %vm1745
          %v1747 = vsel %vm1746, %v1732, %v1739
          %1748 = vst [vmem:[%s1734] sm:$0xff] %v1747
          %v1749 = vadd.s32 %v1623, 48
          %v1750 = vlaneseq
          %v1751 = vand.u32 %v1750, 127
          %s1752 = scalar_lea.vmem %s1620, 48
          %v1753 = vld [vmem:[%s1752] sm:$0xff]
          %v1754 = vmul.f32 %v1753, %v1624
          %s1755 = scalar_lea.vmem %s1619, 48
          %v1756 = vld [vmem:[%s1755] sm:$0xff]
          %v1757 = vstv %s410
          %vm1758 = vcmp.gt.s32.totalorder %v1751, %v1757
          %v1759 = vsub.f32 %v1756, %v1754
          %v1760 = vsel %vm1758, %v1759, %v1756
          %v1761 = vstv %s410
          %v1762 = vlaneseq
          %v1763 = vand.u32 %v1762, 127
          %vm1764 = vcmp.eq.s32.totalorder %v1763, %v1761
          %v1765 = vstv %s410
          %vm1766 = vcmp.ge.s32.totalorder %v1749, %v1765
          %vm1767 = vmand %vm1764, %vm1766
          %v1768 = vsel %vm1767, %v1753, %v1760
          %1769 = vst [vmem:[%s1755] sm:$0xff] %v1768
          %v1770 = vadd.s32 %v1623, 56
          %v1771 = vlaneseq
          %v1772 = vand.u32 %v1771, 127
          %s1773 = scalar_lea.vmem %s1620, 56
          %v1774 = vld [vmem:[%s1773] sm:$0xff]
          %v1775 = vmul.f32 %v1774, %v1624
          %s1776 = scalar_lea.vmem %s1619, 56
          %v1777 = vld [vmem:[%s1776] sm:$0xff]
          %v1778 = vstv %s410
          %vm1779 = vcmp.gt.s32.totalorder %v1772, %v1778
          %v1780 = vsub.f32 %v1777, %v1775
          %v1781 = vsel %vm1779, %v1780, %v1777
          %v1782 = vstv %s410
          %v1783 = vlaneseq
          %v1784 = vand.u32 %v1783, 127
          %vm1785 = vcmp.eq.s32.totalorder %v1784, %v1782
          %v1786 = vstv %s410
          %vm1787 = vcmp.ge.s32.totalorder %v1770, %v1786
          %vm1788 = vmand %vm1785, %vm1787
          %v1789 = vsel %vm1788, %v1774, %v1781
          %1790 = vst [vmem:[%s1776] sm:$0xff] %v1789
          %v1791 = vadd.s32 %v1623, 64
          %v1792 = vlaneseq
          %v1793 = vand.u32 %v1792, 127
          %s1794 = scalar_lea.vmem %s1620, 64
          %v1795 = vld [vmem:[%s1794] sm:$0xff]
          %v1796 = vmul.f32 %v1795, %v1624
          %s1797 = scalar_lea.vmem %s1619, 64
          %v1798 = vld [vmem:[%s1797] sm:$0xff]
          %v1799 = vstv %s410
          %vm1800 = vcmp.gt.s32.totalorder %v1793, %v1799
          %v1801 = vsub.f32 %v1798, %v1796
          %v1802 = vsel %vm1800, %v1801, %v1798
          %v1803 = vstv %s410
          %v1804 = vlaneseq
          %v1805 = vand.u32 %v1804, 127
          %vm1806 = vcmp.eq.s32.totalorder %v1805, %v1803
          %v1807 = vstv %s410
          %vm1808 = vcmp.ge.s32.totalorder %v1791, %v1807
          %vm1809 = vmand %vm1806, %vm1808
          %v1810 = vsel %vm1809, %v1795, %v1802
          %1811 = vst [vmem:[%s1797] sm:$0xff] %v1810
          %v1812 = vadd.s32 %v1623, 72
          %v1813 = vlaneseq
          %v1814 = vand.u32 %v1813, 127
          %s1815 = scalar_lea.vmem %s1620, 72
          %v1816 = vld [vmem:[%s1815] sm:$0xff]
          %v1817 = vmul.f32 %v1816, %v1624
          %s1818 = scalar_lea.vmem %s1619, 72
          %v1819 = vld [vmem:[%s1818] sm:$0xff]
          %v1820 = vstv %s410
          %vm1821 = vcmp.gt.s32.totalorder %v1814, %v1820
          %v1822 = vsub.f32 %v1819, %v1817
          %v1823 = vsel %vm1821, %v1822, %v1819
          %v1824 = vstv %s410
          %v1825 = vlaneseq
          %v1826 = vand.u32 %v1825, 127
          %vm1827 = vcmp.eq.s32.totalorder %v1826, %v1824
          %v1828 = vstv %s410
          %vm1829 = vcmp.ge.s32.totalorder %v1812, %v1828
          %vm1830 = vmand %vm1827, %vm1829
          %v1831 = vsel %vm1830, %v1816, %v1823
          %1832 = vst [vmem:[%s1818] sm:$0xff] %v1831
          %v1833 = vadd.s32 %v1623, 80
          %v1834 = vlaneseq
          %v1835 = vand.u32 %v1834, 127
          %s1836 = scalar_lea.vmem %s1620, 80
          %v1837 = vld [vmem:[%s1836] sm:$0xff]
          %v1838 = vmul.f32 %v1837, %v1624
          %s1839 = scalar_lea.vmem %s1619, 80
          %v1840 = vld [vmem:[%s1839] sm:$0xff]
          %v1841 = vstv %s410
          %vm1842 = vcmp.gt.s32.totalorder %v1835, %v1841
          %v1843 = vsub.f32 %v1840, %v1838
          %v1844 = vsel %vm1842, %v1843, %v1840
          %v1845 = vstv %s410
          %v1846 = vlaneseq
          %v1847 = vand.u32 %v1846, 127
          %vm1848 = vcmp.eq.s32.totalorder %v1847, %v1845
          %v1849 = vstv %s410
          %vm1850 = vcmp.ge.s32.totalorder %v1833, %v1849
          %vm1851 = vmand %vm1848, %vm1850
          %v1852 = vsel %vm1851, %v1837, %v1844
          %1853 = vst [vmem:[%s1839] sm:$0xff] %v1852
          %v1854 = vadd.s32 %v1623, 88
          %v1855 = vlaneseq
          %v1856 = vand.u32 %v1855, 127
          %s1857 = scalar_lea.vmem %s1620, 88
          %v1858 = vld [vmem:[%s1857] sm:$0xff]
          %v1859 = vmul.f32 %v1858, %v1624
          %s1860 = scalar_lea.vmem %s1619, 88
          %v1861 = vld [vmem:[%s1860] sm:$0xff]
          %v1862 = vstv %s410
          %vm1863 = vcmp.gt.s32.totalorder %v1856, %v1862
          %v1864 = vsub.f32 %v1861, %v1859
          %v1865 = vsel %vm1863, %v1864, %v1861
          %v1866 = vstv %s410
          %v1867 = vlaneseq
          %v1868 = vand.u32 %v1867, 127
          %vm1869 = vcmp.eq.s32.totalorder %v1868, %v1866
          %v1870 = vstv %s410
          %vm1871 = vcmp.ge.s32.totalorder %v1854, %v1870
          %vm1872 = vmand %vm1869, %vm1871
          %v1873 = vsel %vm1872, %v1858, %v1865
          %1874 = vst [vmem:[%s1860] sm:$0xff] %v1873
          %v1875 = vadd.s32 %v1623, 96
          %v1876 = vlaneseq
          %v1877 = vand.u32 %v1876, 127
          %s1878 = scalar_lea.vmem %s1620, 96
          %v1879 = vld [vmem:[%s1878] sm:$0xff]
          %v1880 = vmul.f32 %v1879, %v1624
          %s1881 = scalar_lea.vmem %s1619, 96
          %v1882 = vld [vmem:[%s1881] sm:$0xff]
          %v1883 = vstv %s410
          %vm1884 = vcmp.gt.s32.totalorder %v1877, %v1883
          %v1885 = vsub.f32 %v1882, %v1880
          %v1886 = vsel %vm1884, %v1885, %v1882
          %v1887 = vstv %s410
          %v1888 = vlaneseq
          %v1889 = vand.u32 %v1888, 127
          %vm1890 = vcmp.eq.s32.totalorder %v1889, %v1887
          %v1891 = vstv %s410
          %vm1892 = vcmp.ge.s32.totalorder %v1875, %v1891
          %vm1893 = vmand %vm1890, %vm1892
          %v1894 = vsel %vm1893, %v1879, %v1886
          %1895 = vst [vmem:[%s1881] sm:$0xff] %v1894
          %v1896 = vadd.s32 %v1623, 104
          %v1897 = vlaneseq
          %v1898 = vand.u32 %v1897, 127
          %s1899 = scalar_lea.vmem %s1620, 104
          %v1900 = vld [vmem:[%s1899] sm:$0xff]
          %v1901 = vmul.f32 %v1900, %v1624
          %s1902 = scalar_lea.vmem %s1619, 104
          %v1903 = vld [vmem:[%s1902] sm:$0xff]
          %v1904 = vstv %s410
          %vm1905 = vcmp.gt.s32.totalorder %v1898, %v1904
          %v1906 = vsub.f32 %v1903, %v1901
          %v1907 = vsel %vm1905, %v1906, %v1903
          %v1908 = vstv %s410
          %v1909 = vlaneseq
          %v1910 = vand.u32 %v1909, 127
          %vm1911 = vcmp.eq.s32.totalorder %v1910, %v1908
          %v1912 = vstv %s410
          %vm1913 = vcmp.ge.s32.totalorder %v1896, %v1912
          %vm1914 = vmand %vm1911, %vm1913
          %v1915 = vsel %vm1914, %v1900, %v1907
          %1916 = vst [vmem:[%s1902] sm:$0xff] %v1915
          %v1917 = vadd.s32 %v1623, 112
          %v1918 = vlaneseq
          %v1919 = vand.u32 %v1918, 127
          %s1920 = scalar_lea.vmem %s1620, 112
          %v1921 = vld [vmem:[%s1920] sm:$0xff]
          %v1922 = vmul.f32 %v1921, %v1624
          %s1923 = scalar_lea.vmem %s1619, 112
          %v1924 = vld [vmem:[%s1923] sm:$0xff]
          %v1925 = vstv %s410
          %vm1926 = vcmp.gt.s32.totalorder %v1919, %v1925
          %v1927 = vsub.f32 %v1924, %v1922
          %v1928 = vsel %vm1926, %v1927, %v1924
          %v1929 = vstv %s410
          %v1930 = vlaneseq
          %v1931 = vand.u32 %v1930, 127
          %vm1932 = vcmp.eq.s32.totalorder %v1931, %v1929
          %v1933 = vstv %s410
          %vm1934 = vcmp.ge.s32.totalorder %v1917, %v1933
          %vm1935 = vmand %vm1932, %vm1934
          %v1936 = vsel %vm1935, %v1921, %v1928
          %1937 = vst [vmem:[%s1923] sm:$0xff] %v1936
          %v1938 = vadd.s32 %v1623, 120
          %v1939 = vlaneseq
          %v1940 = vand.u32 %v1939, 127
          %s1941 = scalar_lea.vmem %s1620, 120
          %v1942 = vld [vmem:[%s1941] sm:$0xff]
          %v1943 = vmul.f32 %v1942, %v1624
          %s1944 = scalar_lea.vmem %s1619, 120
          %v1945 = vld [vmem:[%s1944] sm:$0xff]
          %v1946 = vstv %s410
          %vm1947 = vcmp.gt.s32.totalorder %v1940, %v1946
          %v1948 = vsub.f32 %v1945, %v1943
          %v1949 = vsel %vm1947, %v1948, %v1945
          %v1950 = vstv %s410
          %v1951 = vlaneseq
          %v1952 = vand.u32 %v1951, 127
          %vm1953 = vcmp.eq.s32.totalorder %v1952, %v1950
          %v1954 = vstv %s410
          %vm1955 = vcmp.ge.s32.totalorder %v1938, %v1954
          %vm1956 = vmand %vm1953, %vm1955
          %v1957 = vsel %vm1956, %v1942, %v1949
          %1958 = vst [vmem:[%s1944] sm:$0xff] %v1957
          %v1959 = vadd.s32 %v1623, 128
          %v1960 = vlaneseq
          %v1961 = vand.u32 %v1960, 127
          %s1962 = scalar_lea.vmem %s1620, 128
          %v1963 = vld [vmem:[%s1962] sm:$0xff]
          %v1964 = vmul.f32 %v1963, %v1624
          %s1965 = scalar_lea.vmem %s1619, 128
          %v1966 = vld [vmem:[%s1965] sm:$0xff]
          %v1967 = vstv %s410
          %vm1968 = vcmp.gt.s32.totalorder %v1961, %v1967
          %v1969 = vsub.f32 %v1966, %v1964
          %v1970 = vsel %vm1968, %v1969, %v1966
          %v1971 = vstv %s410
          %v1972 = vlaneseq
          %v1973 = vand.u32 %v1972, 127
          %vm1974 = vcmp.eq.s32.totalorder %v1973, %v1971
          %v1975 = vstv %s410
          %vm1976 = vcmp.ge.s32.totalorder %v1959, %v1975
          %vm1977 = vmand %vm1974, %vm1976
          %v1978 = vsel %vm1977, %v1963, %v1970
          %1979 = vst [vmem:[%s1965] sm:$0xff] %v1978
          %v1980 = vadd.s32 %v1623, 136
          %v1981 = vlaneseq
          %v1982 = vand.u32 %v1981, 127
          %s1983 = scalar_lea.vmem %s1620, 136
          %v1984 = vld [vmem:[%s1983] sm:$0xff]
          %v1985 = vmul.f32 %v1984, %v1624
          %s1986 = scalar_lea.vmem %s1619, 136
          %v1987 = vld [vmem:[%s1986] sm:$0xff]
          %v1988 = vstv %s410
          %vm1989 = vcmp.gt.s32.totalorder %v1982, %v1988
          %v1990 = vsub.f32 %v1987, %v1985
          %v1991 = vsel %vm1989, %v1990, %v1987
          %v1992 = vstv %s410
          %v1993 = vlaneseq
          %v1994 = vand.u32 %v1993, 127
          %vm1995 = vcmp.eq.s32.totalorder %v1994, %v1992
          %v1996 = vstv %s410
          %vm1997 = vcmp.ge.s32.totalorder %v1980, %v1996
          %vm1998 = vmand %vm1995, %vm1997
          %v1999 = vsel %vm1998, %v1984, %v1991
          %2000 = vst [vmem:[%s1986] sm:$0xff] %v1999
          %v2001 = vadd.s32 %v1623, 144
          %v2002 = vlaneseq
          %v2003 = vand.u32 %v2002, 127
          %s2004 = scalar_lea.vmem %s1620, 144
          %v2005 = vld [vmem:[%s2004] sm:$0xff]
          %v2006 = vmul.f32 %v2005, %v1624
          %s2007 = scalar_lea.vmem %s1619, 144
          %v2008 = vld [vmem:[%s2007] sm:$0xff]
          %v2009 = vstv %s410
          %vm2010 = vcmp.gt.s32.totalorder %v2003, %v2009
          %v2011 = vsub.f32 %v2008, %v2006
          %v2012 = vsel %vm2010, %v2011, %v2008
          %v2013 = vstv %s410
          %v2014 = vlaneseq
          %v2015 = vand.u32 %v2014, 127
          %vm2016 = vcmp.eq.s32.totalorder %v2015, %v2013
          %v2017 = vstv %s410
          %vm2018 = vcmp.ge.s32.totalorder %v2001, %v2017
          %vm2019 = vmand %vm2016, %vm2018
          %v2020 = vsel %vm2019, %v2005, %v2012
          %2021 = vst [vmem:[%s2007] sm:$0xff] %v2020
          %v2022 = vadd.s32 %v1623, 152
          %v2023 = vlaneseq
          %v2024 = vand.u32 %v2023, 127
          %s2025 = scalar_lea.vmem %s1620, 152
          %v2026 = vld [vmem:[%s2025] sm:$0xff]
          %v2027 = vmul.f32 %v2026, %v1624
          %s2028 = scalar_lea.vmem %s1619, 152
          %v2029 = vld [vmem:[%s2028] sm:$0xff]
          %v2030 = vstv %s410
          %vm2031 = vcmp.gt.s32.totalorder %v2024, %v2030
          %v2032 = vsub.f32 %v2029, %v2027
          %v2033 = vsel %vm2031, %v2032, %v2029
          %v2034 = vstv %s410
          %v2035 = vlaneseq
          %v2036 = vand.u32 %v2035, 127
          %vm2037 = vcmp.eq.s32.totalorder %v2036, %v2034
          %v2038 = vstv %s410
          %vm2039 = vcmp.ge.s32.totalorder %v2022, %v2038
          %vm2040 = vmand %vm2037, %vm2039
          %v2041 = vsel %vm2040, %v2026, %v2033
          %2042 = vst [vmem:[%s2028] sm:$0xff] %v2041
          %v2043 = vadd.s32 %v1623, 160
          %v2044 = vlaneseq
          %v2045 = vand.u32 %v2044, 127
          %s2046 = scalar_lea.vmem %s1620, 160
          %v2047 = vld [vmem:[%s2046] sm:$0xff]
          %v2048 = vmul.f32 %v2047, %v1624
          %s2049 = scalar_lea.vmem %s1619, 160
          %v2050 = vld [vmem:[%s2049] sm:$0xff]
          %v2051 = vstv %s410
          %vm2052 = vcmp.gt.s32.totalorder %v2045, %v2051
          %v2053 = vsub.f32 %v2050, %v2048
          %v2054 = vsel %vm2052, %v2053, %v2050
          %v2055 = vstv %s410
          %v2056 = vlaneseq
          %v2057 = vand.u32 %v2056, 127
          %vm2058 = vcmp.eq.s32.totalorder %v2057, %v2055
          %v2059 = vstv %s410
          %vm2060 = vcmp.ge.s32.totalorder %v2043, %v2059
          %vm2061 = vmand %vm2058, %vm2060
          %v2062 = vsel %vm2061, %v2047, %v2054
          %2063 = vst [vmem:[%s2049] sm:$0xff] %v2062
          %v2064 = vadd.s32 %v1623, 168
          %v2065 = vlaneseq
          %v2066 = vand.u32 %v2065, 127
          %s2067 = scalar_lea.vmem %s1620, 168
          %v2068 = vld [vmem:[%s2067] sm:$0xff]
          %v2069 = vmul.f32 %v2068, %v1624
          %s2070 = scalar_lea.vmem %s1619, 168
          %v2071 = vld [vmem:[%s2070] sm:$0xff]
          %v2072 = vstv %s410
          %vm2073 = vcmp.gt.s32.totalorder %v2066, %v2072
          %v2074 = vsub.f32 %v2071, %v2069
          %v2075 = vsel %vm2073, %v2074, %v2071
          %v2076 = vstv %s410
          %v2077 = vlaneseq
          %v2078 = vand.u32 %v2077, 127
          %vm2079 = vcmp.eq.s32.totalorder %v2078, %v2076
          %v2080 = vstv %s410
          %vm2081 = vcmp.ge.s32.totalorder %v2064, %v2080
          %vm2082 = vmand %vm2079, %vm2081
          %v2083 = vsel %vm2082, %v2068, %v2075
          %2084 = vst [vmem:[%s2070] sm:$0xff] %v2083
          %v2085 = vadd.s32 %v1623, 176
          %v2086 = vlaneseq
          %v2087 = vand.u32 %v2086, 127
          %s2088 = scalar_lea.vmem %s1620, 176
          %v2089 = vld [vmem:[%s2088] sm:$0xff]
          %v2090 = vmul.f32 %v2089, %v1624
          %s2091 = scalar_lea.vmem %s1619, 176
          %v2092 = vld [vmem:[%s2091] sm:$0xff]
          %v2093 = vstv %s410
          %vm2094 = vcmp.gt.s32.totalorder %v2087, %v2093
          %v2095 = vsub.f32 %v2092, %v2090
          %v2096 = vsel %vm2094, %v2095, %v2092
          %v2097 = vstv %s410
          %v2098 = vlaneseq
          %v2099 = vand.u32 %v2098, 127
          %vm2100 = vcmp.eq.s32.totalorder %v2099, %v2097
          %v2101 = vstv %s410
          %vm2102 = vcmp.ge.s32.totalorder %v2085, %v2101
          %vm2103 = vmand %vm2100, %vm2102
          %v2104 = vsel %vm2103, %v2089, %v2096
          %2105 = vst [vmem:[%s2091] sm:$0xff] %v2104
          %v2106 = vadd.s32 %v1623, 184
          %v2107 = vlaneseq
          %v2108 = vand.u32 %v2107, 127
          %s2109 = scalar_lea.vmem %s1620, 184
          %v2110 = vld [vmem:[%s2109] sm:$0xff]
          %v2111 = vmul.f32 %v2110, %v1624
          %s2112 = scalar_lea.vmem %s1619, 184
          %v2113 = vld [vmem:[%s2112] sm:$0xff]
          %v2114 = vstv %s410
          %vm2115 = vcmp.gt.s32.totalorder %v2108, %v2114
          %v2116 = vsub.f32 %v2113, %v2111
          %v2117 = vsel %vm2115, %v2116, %v2113
          %v2118 = vstv %s410
          %v2119 = vlaneseq
          %v2120 = vand.u32 %v2119, 127
          %vm2121 = vcmp.eq.s32.totalorder %v2120, %v2118
          %v2122 = vstv %s410
          %vm2123 = vcmp.ge.s32.totalorder %v2106, %v2122
          %vm2124 = vmand %vm2121, %vm2123
          %v2125 = vsel %vm2124, %v2110, %v2117
          %2126 = vst [vmem:[%s2112] sm:$0xff] %v2125
          %v2127 = vadd.s32 %v1623, 192
          %v2128 = vlaneseq
          %v2129 = vand.u32 %v2128, 127
          %s2130 = scalar_lea.vmem %s1620, 192
          %v2131 = vld [vmem:[%s2130] sm:$0xff]
          %v2132 = vmul.f32 %v2131, %v1624
          %s2133 = scalar_lea.vmem %s1619, 192
          %v2134 = vld [vmem:[%s2133] sm:$0xff]
          %v2135 = vstv %s410
          %vm2136 = vcmp.gt.s32.totalorder %v2129, %v2135
          %v2137 = vsub.f32 %v2134, %v2132
          %v2138 = vsel %vm2136, %v2137, %v2134
          %v2139 = vstv %s410
          %v2140 = vlaneseq
          %v2141 = vand.u32 %v2140, 127
          %vm2142 = vcmp.eq.s32.totalorder %v2141, %v2139
          %v2143 = vstv %s410
          %vm2144 = vcmp.ge.s32.totalorder %v2127, %v2143
          %vm2145 = vmand %vm2142, %vm2144
          %v2146 = vsel %vm2145, %v2131, %v2138
          %2147 = vst [vmem:[%s2133] sm:$0xff] %v2146
          %v2148 = vadd.s32 %v1623, 200
          %v2149 = vlaneseq
          %v2150 = vand.u32 %v2149, 127
          %s2151 = scalar_lea.vmem %s1620, 200
          %v2152 = vld [vmem:[%s2151] sm:$0xff]
          %v2153 = vmul.f32 %v2152, %v1624
          %s2154 = scalar_lea.vmem %s1619, 200
          %v2155 = vld [vmem:[%s2154] sm:$0xff]
          %v2156 = vstv %s410
          %vm2157 = vcmp.gt.s32.totalorder %v2150, %v2156
          %v2158 = vsub.f32 %v2155, %v2153
          %v2159 = vsel %vm2157, %v2158, %v2155
          %v2160 = vstv %s410
          %v2161 = vlaneseq
          %v2162 = vand.u32 %v2161, 127
          %vm2163 = vcmp.eq.s32.totalorder %v2162, %v2160
          %v2164 = vstv %s410
          %vm2165 = vcmp.ge.s32.totalorder %v2148, %v2164
          %vm2166 = vmand %vm2163, %vm2165
          %v2167 = vsel %vm2166, %v2152, %v2159
          %2168 = vst [vmem:[%s2154] sm:$0xff] %v2167
          %v2169 = vadd.s32 %v1623, 208
          %v2170 = vlaneseq
          %v2171 = vand.u32 %v2170, 127
          %s2172 = scalar_lea.vmem %s1620, 208
          %v2173 = vld [vmem:[%s2172] sm:$0xff]
          %v2174 = vmul.f32 %v2173, %v1624
          %s2175 = scalar_lea.vmem %s1619, 208
          %v2176 = vld [vmem:[%s2175] sm:$0xff]
          %v2177 = vstv %s410
          %vm2178 = vcmp.gt.s32.totalorder %v2171, %v2177
          %v2179 = vsub.f32 %v2176, %v2174
          %v2180 = vsel %vm2178, %v2179, %v2176
          %v2181 = vstv %s410
          %v2182 = vlaneseq
          %v2183 = vand.u32 %v2182, 127
          %vm2184 = vcmp.eq.s32.totalorder %v2183, %v2181
          %v2185 = vstv %s410
          %vm2186 = vcmp.ge.s32.totalorder %v2169, %v2185
          %vm2187 = vmand %vm2184, %vm2186
          %v2188 = vsel %vm2187, %v2173, %v2180
          %2189 = vst [vmem:[%s2175] sm:$0xff] %v2188
          %v2190 = vadd.s32 %v1623, 216
          %v2191 = vlaneseq
          %v2192 = vand.u32 %v2191, 127
          %s2193 = scalar_lea.vmem %s1620, 216
          %v2194 = vld [vmem:[%s2193] sm:$0xff]
          %v2195 = vmul.f32 %v2194, %v1624
          %s2196 = scalar_lea.vmem %s1619, 216
          %v2197 = vld [vmem:[%s2196] sm:$0xff]
          %v2198 = vstv %s410
          %vm2199 = vcmp.gt.s32.totalorder %v2192, %v2198
          %v2200 = vsub.f32 %v2197, %v2195
          %v2201 = vsel %vm2199, %v2200, %v2197
          %v2202 = vstv %s410
          %v2203 = vlaneseq
          %v2204 = vand.u32 %v2203, 127
          %vm2205 = vcmp.eq.s32.totalorder %v2204, %v2202
          %v2206 = vstv %s410
          %vm2207 = vcmp.ge.s32.totalorder %v2190, %v2206
          %vm2208 = vmand %vm2205, %vm2207
          %v2209 = vsel %vm2208, %v2194, %v2201
          %2210 = vst [vmem:[%s2196] sm:$0xff] %v2209
          %v2211 = vadd.s32 %v1623, 224
          %v2212 = vlaneseq
          %v2213 = vand.u32 %v2212, 127
          %s2214 = scalar_lea.vmem %s1620, 224
          %v2215 = vld [vmem:[%s2214] sm:$0xff]
          %v2216 = vmul.f32 %v2215, %v1624
          %s2217 = scalar_lea.vmem %s1619, 224
          %v2218 = vld [vmem:[%s2217] sm:$0xff]
          %v2219 = vstv %s410
          %vm2220 = vcmp.gt.s32.totalorder %v2213, %v2219
          %v2221 = vsub.f32 %v2218, %v2216
          %v2222 = vsel %vm2220, %v2221, %v2218
          %v2223 = vstv %s410
          %v2224 = vlaneseq
          %v2225 = vand.u32 %v2224, 127
          %vm2226 = vcmp.eq.s32.totalorder %v2225, %v2223
          %v2227 = vstv %s410
          %vm2228 = vcmp.ge.s32.totalorder %v2211, %v2227
          %vm2229 = vmand %vm2226, %vm2228
          %v2230 = vsel %vm2229, %v2215, %v2222
          %2231 = vst [vmem:[%s2217] sm:$0xff] %v2230
          %v2232 = vadd.s32 %v1623, 232
          %v2233 = vlaneseq
          %v2234 = vand.u32 %v2233, 127
          %s2235 = scalar_lea.vmem %s1620, 232
          %v2236 = vld [vmem:[%s2235] sm:$0xff]
          %v2237 = vmul.f32 %v2236, %v1624
          %s2238 = scalar_lea.vmem %s1619, 232
          %v2239 = vld [vmem:[%s2238] sm:$0xff]
          %v2240 = vstv %s410
          %vm2241 = vcmp.gt.s32.totalorder %v2234, %v2240
          %v2242 = vsub.f32 %v2239, %v2237
          %v2243 = vsel %vm2241, %v2242, %v2239
          %v2244 = vstv %s410
          %v2245 = vlaneseq
          %v2246 = vand.u32 %v2245, 127
          %vm2247 = vcmp.eq.s32.totalorder %v2246, %v2244
          %v2248 = vstv %s410
          %vm2249 = vcmp.ge.s32.totalorder %v2232, %v2248
          %vm2250 = vmand %vm2247, %vm2249
          %v2251 = vsel %vm2250, %v2236, %v2243
          %2252 = vst [vmem:[%s2238] sm:$0xff] %v2251
          %v2253 = vadd.s32 %v1623, 240
          %v2254 = vlaneseq
          %v2255 = vand.u32 %v2254, 127
          %s2256 = scalar_lea.vmem %s1620, 240
          %v2257 = vld [vmem:[%s2256] sm:$0xff]
          %v2258 = vmul.f32 %v2257, %v1624
          %s2259 = scalar_lea.vmem %s1619, 240
          %v2260 = vld [vmem:[%s2259] sm:$0xff]
          %v2261 = vstv %s410
          %vm2262 = vcmp.gt.s32.totalorder %v2255, %v2261
          %v2263 = vsub.f32 %v2260, %v2258
          %v2264 = vsel %vm2262, %v2263, %v2260
          %v2265 = vstv %s410
          %v2266 = vlaneseq
          %v2267 = vand.u32 %v2266, 127
          %vm2268 = vcmp.eq.s32.totalorder %v2267, %v2265
          %v2269 = vstv %s410
          %vm2270 = vcmp.ge.s32.totalorder %v2253, %v2269
          %vm2271 = vmand %vm2268, %vm2270
          %v2272 = vsel %vm2271, %v2257, %v2264
          %2273 = vst [vmem:[%s2259] sm:$0xff] %v2272
          %v2274 = vadd.s32 %v1623, 248
          %v2275 = vlaneseq
          %v2276 = vand.u32 %v2275, 127
          %s2277 = scalar_lea.vmem %s1620, 248
          %v2278 = vld [vmem:[%s2277] sm:$0xff]
          %v2279 = vmul.f32 %v2278, %v1624
          %s2280 = scalar_lea.vmem %s1619, 248
          %v2281 = vld [vmem:[%s2280] sm:$0xff]
          %v2282 = vstv %s410
          %vm2283 = vcmp.gt.s32.totalorder %v2276, %v2282
          %v2284 = vsub.f32 %v2281, %v2279
          %v2285 = vsel %vm2283, %v2284, %v2281
          %v2286 = vstv %s410
          %v2287 = vlaneseq
          %v2288 = vand.u32 %v2287, 127
          %vm2289 = vcmp.eq.s32.totalorder %v2288, %v2286
          %v2290 = vstv %s410
          %vm2291 = vcmp.ge.s32.totalorder %v2274, %v2290
          %vm2292 = vmand %vm2289, %vm2291
          %v2293 = vsel %vm2292, %v2278, %v2285
          %2294 = vst [vmem:[%s2280] sm:$0xff] %v2293
          %s2295 = scalar_lea.vmem %s1619, %s410
          %v2296 = vld [vmem:[%s2295] ss:$0 sm:$0xff]
          %v2297 = vstv %s410
          %v2298 = vlaneseq
          %v2299 = vand.u32 %v2298, 127
          %vm2300 = vcmp.eq.s32.totalorder %v2299, %v2297
          %v2301 = vsel %vm2300, %v786, %v2296
          %2302 = vst [vmem:[%s2295] sm:$0x1] %v2301
        $region59: #{custom-call.7} parent=53 // loop_footer
          %s414 = sadd.s32 1, %s410
        $region60: #{custom-call.7} parent=53 // loop_footer_branch
          %409 = sbr.rel target = $region56
        $region61: #{custom-call.7} parent=53 // loop_exit
          _
        %s2304 = sshllo.u32 0, 2
        %v2306 = vld [vmem:[#allocation2] sm:%s2304]
        %s2307 = sshllo.u32 0, 2
        %2308 = vst [vmem:[%s271] sm:%s2307] %v2306
        %s2309 = sand.u32 %s10, 1
        %s2310 = sand.u32 %s10, 1
        %s2311 = smul.addr %s2310, 256
        %s2312 = scalar_lea.vmem [#allocation1], %s2311
        %s2313 = sand.u32 %s49, 1
        %s2314 = sand.u32 %s49, 1
        %s2315 = smul.addr %s2314, 2
        %s2316 = scalar_lea.vmem [#allocation3], %s2315
        %s2317 = smul.u32 32, %s16
        %s2318 = sadd.s32 %s17, %s2317
        %s2319 = smul.addr %s15, 32
        %s2320 = sadd.s32 %s2318, %s2319
        %s2321 = smul.addr %s2320, 8
        %s2322 = scalar_lea.vmem %s1, %s2321
        // Predicated region
        $region62: #{custom-call.7} parent=53 // pred_check
          _
        $region63: #{custom-call.7} parent=53 // pred_check_branch
          %2324 = sbr.rel (0) target = $region65
        $region64: #{custom-call.7} parent=53 // pred_region
          // Predicated region
          $region66: #{custom-call.7} parent=64 // pred_check
            _
          $region67: #{custom-call.7} parent=64 // pred_check_branch
            %2326 = sbr.rel (0) target = $region69
          $region68: #{custom-call.7} parent=64 // pred_region
            // Predicated region
            $region81: #{custom-call.7} parent=68 // pred_check
              _
            $region82: #{custom-call.7} parent=68 // pred_check_branch
              %2403 = sbr.rel (0) target = $region84
            $region83: #{custom-call.7} parent=68 // pred_region
              loop: start=0, step=1, limit=1
              $region85: #{custom-call.7} parent=83 // loop_pre_header
                _
              $region86: #{custom-call.7} parent=83 // loop_header
                %s2405 = sphi 0, %s2409
                %p2406 = scmp.ge.s32.totalorder %s2405, 1
                %s2410 = sphi %s2312, %s2312
                %s2411 = sphi %s2322, %s2322
              $region87: #{custom-call.7} parent=83 // loop_header_branch
                %2408 = sbr.rel (%p2406) target = $region91
              $region88: #{custom-call.7} parent=83 // loop_body
                %v2412 = vld [vmem:[%s2410] sm:$0xff]
                %2413 = vst [vmem:[%s2411] sm:$0xff] %v2412
                %v2414 = vld [vmem:[%s2410 + $0x8] sm:$0xff]
                %2415 = vst [vmem:[%s2411 + $0x8] sm:$0xff] %v2414
                %v2416 = vld [vmem:[%s2410 + $0x10] sm:$0xff]
                %2417 = vst [vmem:[%s2411 + $0x10] sm:$0xff] %v2416
                %v2418 = vld [vmem:[%s2410 + $0x18] sm:$0xff]
                %2419 = vst [vmem:[%s2411 + $0x18] sm:$0xff] %v2418
                %v2420 = vld [vmem:[%s2410 + $0x20] sm:$0xff]
                %2421 = vst [vmem:[%s2411 + $0x20] sm:$0xff] %v2420
                %v2422 = vld [vmem:[%s2410 + $0x28] sm:$0xff]
                %2423 = vst [vmem:[%s2411 + $0x28] sm:$0xff] %v2422
                %v2424 = vld [vmem:[%s2410 + $0x30] sm:$0xff]
                %2425 = vst [vmem:[%s2411 + $0x30] sm:$0xff] %v2424
                %v2426 = vld [vmem:[%s2410 + $0x38] sm:$0xff]
                %2427 = vst [vmem:[%s2411 + $0x38] sm:$0xff] %v2426
                %v2428 = vld [vmem:[%s2410 + $0x40] sm:$0xff]
                %2429 = vst [vmem:[%s2411 + $0x40] sm:$0xff] %v2428
                %v2430 = vld [vmem:[%s2410 + $0x48] sm:$0xff]
                %2431 = vst [vmem:[%s2411 + $0x48] sm:$0xff] %v2430
                %v2432 = vld [vmem:[%s2410 + $0x50] sm:$0xff]
                %2433 = vst [vmem:[%s2411 + $0x50] sm:$0xff] %v2432
                %v2434 = vld [vmem:[%s2410 + $0x58] sm:$0xff]
                %2435 = vst [vmem:[%s2411 + $0x58] sm:$0xff] %v2434
                %v2436 = vld [vmem:[%s2410 + $0x60] sm:$0xff]
                %2437 = vst [vmem:[%s2411 + $0x60] sm:$0xff] %v2436
                %v2438 = vld [vmem:[%s2410 + $0x68] sm:$0xff]
                %2439 = vst [vmem:[%s2411 + $0x68] sm:$0xff] %v2438
                %v2440 = vld [vmem:[%s2410 + $0x70] sm:$0xff]
                %2441 = vst [vmem:[%s2411 + $0x70] sm:$0xff] %v2440
                %v2442 = vld [vmem:[%s2410 + $0x78] sm:$0xff]
                %2443 = vst [vmem:[%s2411 + $0x78] sm:$0xff] %v2442
                %v2444 = vld [vmem:[%s2410 + $0x80] sm:$0xff]
                %2445 = vst [vmem:[%s2411 + $0x80] sm:$0xff] %v2444
                %v2446 = vld [vmem:[%s2410 + $0x88] sm:$0xff]
                %2447 = vst [vmem:[%s2411 + $0x88] sm:$0xff] %v2446
                %v2448 = vld [vmem:[%s2410 + $0x90] sm:$0xff]
                %2449 = vst [vmem:[%s2411 + $0x90] sm:$0xff] %v2448
                %v2450 = vld [vmem:[%s2410 + $0x98] sm:$0xff]
                %2451 = vst [vmem:[%s2411 + $0x98] sm:$0xff] %v2450
                %v2452 = vld [vmem:[%s2410 + $0xa0] sm:$0xff]
                %2453 = vst [vmem:[%s2411 + $0xa0] sm:$0xff] %v2452
                %v2454 = vld [vmem:[%s2410 + $0xa8] sm:$0xff]
                %2455 = vst [vmem:[%s2411 + $0xa8] sm:$0xff] %v2454
                %v2456 = vld [vmem:[%s2410 + $0xb0] sm:$0xff]
                %2457 = vst [vmem:[%s2411 + $0xb0] sm:$0xff] %v2456
                %v2458 = vld [vmem:[%s2410 + $0xb8] sm:$0xff]
                %2459 = vst [vmem:[%s2411 + $0xb8] sm:$0xff] %v2458
                %v2460 = vld [vmem:[%s2410 + $0xc0] sm:$0xff]
                %2461 = vst [vmem:[%s2411 + $0xc0] sm:$0xff] %v2460
                %v2462 = vld [vmem:[%s2410 + $0xc8] sm:$0xff]
                %2463 = vst [vmem:[%s2411 + $0xc8] sm:$0xff] %v2462
                %v2464 = vld [vmem:[%s2410 + $0xd0] sm:$0xff]
                %2465 = vst [vmem:[%s2411 + $0xd0] sm:$0xff] %v2464
                %v2466 = vld [vmem:[%s2410 + $0xd8] sm:$0xff]
                %2467 = vst [vmem:[%s2411 + $0xd8] sm:$0xff] %v2466
                %v2468 = vld [vmem:[%s2410 + $0xe0] sm:$0xff]
                %2469 = vst [vmem:[%s2411 + $0xe0] sm:$0xff] %v2468
                %v2470 = vld [vmem:[%s2410 + $0xe8] sm:$0xff]
                %2471 = vst [vmem:[%s2411 + $0xe8] sm:$0xff] %v2470
                %v2472 = vld [vmem:[%s2410 + $0xf0] sm:$0xff]
                %2473 = vst [vmem:[%s2411 + $0xf0] sm:$0xff] %v2472
                %v2474 = vld [vmem:[%s2410 + $0xf8] sm:$0xff]
                %2475 = vst [vmem:[%s2411 + $0xf8] sm:$0xff] %v2474
              $region89: #{custom-call.7} parent=83 // loop_footer
                %s2409 = sadd.s32 1, %s2405
              $region90: #{custom-call.7} parent=83 // loop_footer_branch
                %2404 = sbr.rel target = $region86
              $region91: #{custom-call.7} parent=83 // loop_exit
                _
            $region84: #{custom-call.7} parent=68 // pred_fallthru
              _
            // Predicated region
            $region92: #{custom-call.7} parent=68 // pred_check
              _
            $region93: #{custom-call.7} parent=68 // pred_check_branch
              %2477 = sbr.rel target = $region95
            $region94: #{custom-call.7} parent=68 // pred_region
              _
            $region95: #{custom-call.7} parent=68 // pred_fallthru
              _
          $region69: #{custom-call.7} parent=64 // pred_fallthru
            _
          // Predicated region
          $region70: #{custom-call.7} parent=64 // pred_check
            _
          $region71: #{custom-call.7} parent=64 // pred_check_branch
            %2328 = sbr.rel target = $region73
          $region72: #{custom-call.7} parent=64 // pred_region
            loop: start=0, step=1, limit=1
            $region74: #{custom-call.7} parent=72 // loop_pre_header
              _
            $region75: #{custom-call.7} parent=72 // loop_header
              %s2331 = sphi 0, %s2335
              %p2332 = scmp.ge.s32.totalorder %s2331, 1
              %s2336 = sphi %s2312, %s2312
              %s2337 = sphi %s2322, %s2322
            $region76: #{custom-call.7} parent=72 // loop_header_branch
              %2334 = sbr.rel (%p2332) target = $region80
            $region77: #{custom-call.7} parent=72 // loop_body
              %v2338 = vld [vmem:[%s2336] sm:$0xff]
              %2339 = vst [vmem:[%s2337] sm:$0xff] %v2338
              %v2340 = vld [vmem:[%s2336 + $0x8] sm:$0xff]
              %2341 = vst [vmem:[%s2337 + $0x8] sm:$0xff] %v2340
              %v2342 = vld [vmem:[%s2336 + $0x10] sm:$0xff]
              %2343 = vst [vmem:[%s2337 + $0x10] sm:$0xff] %v2342
              %v2344 = vld [vmem:[%s2336 + $0x18] sm:$0xff]
              %2345 = vst [vmem:[%s2337 + $0x18] sm:$0xff] %v2344
              %v2346 = vld [vmem:[%s2336 + $0x20] sm:$0xff]
              %2347 = vst [vmem:[%s2337 + $0x20] sm:$0xff] %v2346
              %v2348 = vld [vmem:[%s2336 + $0x28] sm:$0xff]
              %2349 = vst [vmem:[%s2337 + $0x28] sm:$0xff] %v2348
              %v2350 = vld [vmem:[%s2336 + $0x30] sm:$0xff]
              %2351 = vst [vmem:[%s2337 + $0x30] sm:$0xff] %v2350
              %v2352 = vld [vmem:[%s2336 + $0x38] sm:$0xff]
              %2353 = vst [vmem:[%s2337 + $0x38] sm:$0xff] %v2352
              %v2354 = vld [vmem:[%s2336 + $0x40] sm:$0xff]
              %2355 = vst [vmem:[%s2337 + $0x40] sm:$0xff] %v2354
              %v2356 = vld [vmem:[%s2336 + $0x48] sm:$0xff]
              %2357 = vst [vmem:[%s2337 + $0x48] sm:$0xff] %v2356
              %v2358 = vld [vmem:[%s2336 + $0x50] sm:$0xff]
              %2359 = vst [vmem:[%s2337 + $0x50] sm:$0xff] %v2358
              %v2360 = vld [vmem:[%s2336 + $0x58] sm:$0xff]
              %2361 = vst [vmem:[%s2337 + $0x58] sm:$0xff] %v2360
              %v2362 = vld [vmem:[%s2336 + $0x60] sm:$0xff]
              %2363 = vst [vmem:[%s2337 + $0x60] sm:$0xff] %v2362
              %v2364 = vld [vmem:[%s2336 + $0x68] sm:$0xff]
              %2365 = vst [vmem:[%s2337 + $0x68] sm:$0xff] %v2364
              %v2366 = vld [vmem:[%s2336 + $0x70] sm:$0xff]
              %2367 = vst [vmem:[%s2337 + $0x70] sm:$0xff] %v2366
              %v2368 = vld [vmem:[%s2336 + $0x78] sm:$0xff]
              %2369 = vst [vmem:[%s2337 + $0x78] sm:$0xff] %v2368
              %v2370 = vld [vmem:[%s2336 + $0x80] sm:$0xff]
              %2371 = vst [vmem:[%s2337 + $0x80] sm:$0xff] %v2370
              %v2372 = vld [vmem:[%s2336 + $0x88] sm:$0xff]
              %2373 = vst [vmem:[%s2337 + $0x88] sm:$0xff] %v2372
              %v2374 = vld [vmem:[%s2336 + $0x90] sm:$0xff]
              %2375 = vst [vmem:[%s2337 + $0x90] sm:$0xff] %v2374
              %v2376 = vld [vmem:[%s2336 + $0x98] sm:$0xff]
              %2377 = vst [vmem:[%s2337 + $0x98] sm:$0xff] %v2376
              %v2378 = vld [vmem:[%s2336 + $0xa0] sm:$0xff]
              %2379 = vst [vmem:[%s2337 + $0xa0] sm:$0xff] %v2378
              %v2380 = vld [vmem:[%s2336 + $0xa8] sm:$0xff]
              %2381 = vst [vmem:[%s2337 + $0xa8] sm:$0xff] %v2380
              %v2382 = vld [vmem:[%s2336 + $0xb0] sm:$0xff]
              %2383 = vst [vmem:[%s2337 + $0xb0] sm:$0xff] %v2382
              %v2384 = vld [vmem:[%s2336 + $0xb8] sm:$0xff]
              %2385 = vst [vmem:[%s2337 + $0xb8] sm:$0xff] %v2384
              %v2386 = vld [vmem:[%s2336 + $0xc0] sm:$0xff]
              %2387 = vst [vmem:[%s2337 + $0xc0] sm:$0xff] %v2386
              %v2388 = vld [vmem:[%s2336 + $0xc8] sm:$0xff]
              %2389 = vst [vmem:[%s2337 + $0xc8] sm:$0xff] %v2388
              %v2390 = vld [vmem:[%s2336 + $0xd0] sm:$0xff]
              %2391 = vst [vmem:[%s2337 + $0xd0] sm:$0xff] %v2390
              %v2392 = vld [vmem:[%s2336 + $0xd8] sm:$0xff]
              %2393 = vst [vmem:[%s2337 + $0xd8] sm:$0xff] %v2392
              %v2394 = vld [vmem:[%s2336 + $0xe0] sm:$0xff]
              %2395 = vst [vmem:[%s2337 + $0xe0] sm:$0xff] %v2394
              %v2396 = vld [vmem:[%s2336 + $0xe8] sm:$0xff]
              %2397 = vst [vmem:[%s2337 + $0xe8] sm:$0xff] %v2396
              %v2398 = vld [vmem:[%s2336 + $0xf0] sm:$0xff]
              %2399 = vst [vmem:[%s2337 + $0xf0] sm:$0xff] %v2398
              %v2400 = vld [vmem:[%s2336 + $0xf8] sm:$0xff]
              %2401 = vst [vmem:[%s2337 + $0xf8] sm:$0xff] %v2400
            $region78: #{custom-call.7} parent=72 // loop_footer
              %s2335 = sadd.s32 1, %s2331
            $region79: #{custom-call.7} parent=72 // loop_footer_branch
              %2330 = sbr.rel target = $region75
            $region80: #{custom-call.7} parent=72 // loop_exit
              _
          $region73: #{custom-call.7} parent=64 // pred_fallthru
            _
        $region65: #{custom-call.7} parent=53 // pred_fallthru
          _
        %2478 = vnop
        // Predicated region
        $region96: #{custom-call.7} parent=53 // pred_check
          %p2479 = pneg %p59
        $region97: #{custom-call.7} parent=53 // pred_check_branch
          %2481 = sbr.rel (%p2479) target = $region99
        $region98: #{custom-call.7} parent=53 // pred_region
          %p2482 = scmp.lt.s32.totalorder %s15, 0
          %s2483 = ssub.s32 0, %s15
          %s2484 = scalar_select %p2482, %s2483, %s15
          %s2485 = sshrl.u32 %s2484, 3
          %s2486 = ssub.s32 0, %s2485
          %s2487 = scalar_select %p2482, %s2486, %s2485
          %s2488 = smul.addr %s2487, 2
          %s2489 = scalar_lea.vmem %s2, %s2488
          // Predicated region
          $region100: #{custom-call.7} parent=98 // pred_check
            _
          $region101: #{custom-call.7} parent=98 // pred_check_branch
            %2491 = sbr.rel (0) target = $region103
          $region102: #{custom-call.7} parent=98 // pred_region
            // Predicated region
            $region104: #{custom-call.7} parent=102 // pred_check
              _
            $region105: #{custom-call.7} parent=102 // pred_check_branch
              %2493 = sbr.rel target = $region107
            $region106: #{custom-call.7} parent=102 // pred_region
              // Predicated region
              $region119: #{custom-call.7} parent=106 // pred_check
                _
              $region120: #{custom-call.7} parent=106 // pred_check_branch
                %2508 = sbr.rel (0) target = $region122
              $region121: #{custom-call.7} parent=106 // pred_region
                loop: start=0, step=1, limit=1
                $region123: #{custom-call.7} parent=121 // loop_pre_header
                  _
                $region124: #{custom-call.7} parent=121 // loop_header
                  %s2511 = sphi 0, %s2515
                  %p2512 = scmp.ge.s32.totalorder %s2511, 1
                  %s2516 = sphi %s2316, %s2316
                  %s2517 = sphi %s2489, %s2489
                $region125: #{custom-call.7} parent=121 // loop_header_branch
                  %2514 = sbr.rel (%p2512) target = $region129
                $region126: #{custom-call.7} parent=121 // loop_body
                  %v2518 = vld [vmem:[%s2516] sm:$0x3]
                  %2519 = vst [vmem:[%s2517] sm:$0x3] %v2518
                $region127: #{custom-call.7} parent=121 // loop_footer
                  %s2515 = sadd.s32 1, %s2511
                $region128: #{custom-call.7} parent=121 // loop_footer_branch
                  %2510 = sbr.rel target = $region124
                $region129: #{custom-call.7} parent=121 // loop_exit
                  _
              $region122: #{custom-call.7} parent=106 // pred_fallthru
                _
            $region107: #{custom-call.7} parent=102 // pred_fallthru
              _
            // Predicated region
            $region108: #{custom-call.7} parent=102 // pred_check
              _
            $region109: #{custom-call.7} parent=102 // pred_check_branch
              %2495 = sbr.rel (0) target = $region111
            $region110: #{custom-call.7} parent=102 // pred_region
              loop: start=0, step=1, limit=1
              $region112: #{custom-call.7} parent=110 // loop_pre_header
                _
              $region113: #{custom-call.7} parent=110 // loop_header
                %s2498 = sphi 0, %s2502
                %p2499 = scmp.ge.s32.totalorder %s2498, 1
                %s2503 = sphi %s2316, %s2316
                %s2504 = sphi %s2489, %s2489
              $region114: #{custom-call.7} parent=110 // loop_header_branch
                %2501 = sbr.rel (%p2499) target = $region118
              $region115: #{custom-call.7} parent=110 // loop_body
                %v2505 = vld [vmem:[%s2503] sm:$0x3]
                %2506 = vst [vmem:[%s2504] sm:$0x3] %v2505
              $region116: #{custom-call.7} parent=110 // loop_footer
                %s2502 = sadd.s32 1, %s2498
              $region117: #{custom-call.7} parent=110 // loop_footer_branch
                %2497 = sbr.rel target = $region113
              $region118: #{custom-call.7} parent=110 // loop_exit
                _
            $region111: #{custom-call.7} parent=102 // pred_fallthru
              _
          $region103: #{custom-call.7} parent=98 // pred_fallthru
            _
          %2520 = vnop
        $region99: #{custom-call.7} parent=53 // pred_fallthru
          _
      $region54: #{custom-call.7} parent=5 // pred_fallthru
        _
      %p2521 = scmp.le.s32.totalorder 2, %s5
      // Predicated region
      $region130: #{custom-call.7} parent=5 // pred_check
        %p2522 = pneg %p2521
      $region131: #{custom-call.7} parent=5 // pred_check_branch
        %2524 = sbr.rel (%p2522) target = $region133
      $region132: #{custom-call.7} parent=5 // pred_region
        %s2525 = ssub.s32 %s5, 2
        %s2526 = sand.u32 %s11, 1
        %s2527 = sand.u32 %s11, 1
        %s2528 = smul.addr %s2527, 256
        %s2529 = scalar_lea.vmem [#allocation1], %s2528
        // Predicated region
        $region134: #{custom-call.7} parent=132 // pred_check
          %p2530 = pneg %p65
        $region135: #{custom-call.7} parent=132 // pred_check_branch
          %2532 = sbr.rel (%p2530) target = $region137
        $region136: #{custom-call.7} parent=132 // pred_region
          %s2533 = sand.u32 %s50, 1
          %s2534 = sand.u32 %s50, 1
          %s2535 = smul.addr %s2534, 2
          %s2536 = scalar_lea.vmem [#allocation3], %s2535
        $region137: #{custom-call.7} parent=132 // pred_fallthru
          _
      $region133: #{custom-call.7} parent=5 // pred_fallthru
        _
    $region6: #{custom-call.7} parent=1 // loop_footer
      %s9 = sadd.s32 1, %s5
    $region7: #{custom-call.7} parent=1 // loop_footer_branch
      %4 = sbr.rel target = $region3
    $region8: #{custom-call.7} parent=1 // loop_exit
      _

// kernel: custom-call.8
$region0: #{custom-call.8}
  %s0 = inlined_call_operand.vmem [shape: f32[2,49,49], index: 0, kind: input, shape index: {}]
  %s1 = inlined_call_operand.vmem [shape: f32[2,49,49], index: 1, kind: output, shape index: {}]
  $region1: #{custom-call.8} parent=0
    #allocation0 [shape = 'u8[57344]{0}', space=vmem, size = 0xe000, scoped, tag = 'operand span for operand 0']
    #allocation1 [shape = 'u8[57344]{0}', space=vmem, size = 0xe000, scoped, tag = 'operand span for operand 1']
    loop: start=0, step=1, limit=4
    $region2: #{custom-call.8} parent=1 // loop_pre_header
      _
    $region3: #{custom-call.8} parent=1 // loop_header
      %s3 = sphi 0, %s7
      %p4 = scmp.ge.s32.totalorder %s3, 4
    $region4: #{custom-call.8} parent=1 // loop_header_branch
      %6 = sbr.rel (%p4) target = $region8
    $region5: #{custom-call.8} parent=1 // loop_body
      %s8 = ssub.s32 %s3, 1
      %s9 = ssub.s32 %s3, 2
      %s10 = sadd.s32 %s3, 1
      %p11 = scmp.le.s32.totalorder 1, %s3
      %p12 = scmp.lt.s32.totalorder %s3, 3
      %p13 = pnand %p11, %p12
      %p14 = pneg %p13
      // Predicated region
      $region9: #{custom-call.8} parent=5 // pred_check
        _
      $region10: #{custom-call.8} parent=5 // pred_check_branch
        %16 = sbr.rel (%p13) target = $region12
      $region11: #{custom-call.8} parent=5 // pred_region
        %s17 = ssub.s32 %s3, 1
      $region12: #{custom-call.8} parent=5 // pred_fallthru
        _
      %p18 = scmp.lt.s32.totalorder %s3, 2
      // Predicated region
      $region13: #{custom-call.8} parent=5 // pred_check
        %p19 = pneg %p18
      $region14: #{custom-call.8} parent=5 // pred_check_branch
        %21 = sbr.rel (%p19) target = $region16
      $region15: #{custom-call.8} parent=5 // pred_region
        %s22 = sand.u32 %s3, 1
        %s23 = sand.u32 %s3, 1
        %s24 = smul.addr %s23, 56
        %s25 = scalar_lea.vmem [#allocation0], %s24
        %s26 = smul.addr %s3, 56
        %s27 = scalar_lea.vmem %s0, %s26
        // Predicated region
        $region17: #{custom-call.8} parent=15 // pred_check
          _
        $region18: #{custom-call.8} parent=15 // pred_check_branch
          %29 = sbr.rel (0) target = $region20
        $region19: #{custom-call.8} parent=15 // pred_region
          // Predicated region
          $region21: #{custom-call.8} parent=19 // pred_check
            _
          $region22: #{custom-call.8} parent=19 // pred_check_branch
            %31 = sbr.rel (0) target = $region24
          $region23: #{custom-call.8} parent=19 // pred_region
            loop: start=0, step=1, limit=1
            $region25: #{custom-call.8} parent=23 // loop_pre_header
              _
            $region26: #{custom-call.8} parent=23 // loop_header
              %s33 = sphi 0, %s37
              %p34 = scmp.ge.s32.totalorder %s33, 1
              %s38 = sphi %s27, %s27
              %s39 = sphi %s25, %s25
            $region27: #{custom-call.8} parent=23 // loop_header_branch
              %36 = sbr.rel (%p34) target = $region31
            $region28: #{custom-call.8} parent=23 // loop_body
              %v40 = vld [vmem:[%s38] sm:$0xff]
              %41 = vst [vmem:[%s39] sm:$0xff] %v40
              %v42 = vld [vmem:[%s38 + $0x8] sm:$0xff]
              %43 = vst [vmem:[%s39 + $0x8] sm:$0xff] %v42
              %v44 = vld [vmem:[%s38 + $0x10] sm:$0xff]
              %45 = vst [vmem:[%s39 + $0x10] sm:$0xff] %v44
              %v46 = vld [vmem:[%s38 + $0x18] sm:$0xff]
              %47 = vst [vmem:[%s39 + $0x18] sm:$0xff] %v46
              %v48 = vld [vmem:[%s38 + $0x20] sm:$0xff]
              %49 = vst [vmem:[%s39 + $0x20] sm:$0xff] %v48
              %v50 = vld [vmem:[%s38 + $0x28] sm:$0xff]
              %51 = vst [vmem:[%s39 + $0x28] sm:$0xff] %v50
              %v52 = vld [vmem:[%s38 + $0x30] sm:$0xff]
              %53 = vst [vmem:[%s39 + $0x30] sm:$0xff] %v52
            $region29: #{custom-call.8} parent=23 // loop_footer
              %s37 = sadd.s32 1, %s33
            $region30: #{custom-call.8} parent=23 // loop_footer_branch
              %32 = sbr.rel target = $region26
            $region31: #{custom-call.8} parent=23 // loop_exit
              _
          $region24: #{custom-call.8} parent=19 // pred_fallthru
            _
          // Predicated region
          $region32: #{custom-call.8} parent=19 // pred_check
            _
          $region33: #{custom-call.8} parent=19 // pred_check_branch
            %55 = sbr.rel target = $region35
          $region34: #{custom-call.8} parent=19 // pred_region
            _
          $region35: #{custom-call.8} parent=19 // pred_fallthru
            _
        $region20: #{custom-call.8} parent=15 // pred_fallthru
          _
        %56 = vnop
      $region16: #{custom-call.8} parent=5 // pred_fallthru
        _
      %p57 = scmp.le.s32.totalorder 1, %s3
      %p58 = scmp.lt.s32.totalorder %s3, 3
      %p59 = pnand %p57, %p58
      %p60 = pneg %p59
      // Predicated region
      $region36: #{custom-call.8} parent=5 // pred_check
        _
      $region37: #{custom-call.8} parent=5 // pred_check_branch
        %62 = sbr.rel (%p59) target = $region39
      $region38: #{custom-call.8} parent=5 // pred_region
        %s63 = ssub.s32 %s3, 1
        %s64 = sand.u32 %s8, 1
        %s65 = sand.u32 %s8, 1
        %s66 = smul.addr %s65, 56
        %s67 = scalar_lea.vmem [#allocation0], %s66
        %s68 = sand.u32 %s8, 1
        %s69 = sand.u32 %s8, 1
        %s70 = smul.addr %s69, 56
        %s71 = scalar_lea.vmem [#allocation0], %s70
        %s72 = sand.u32 %s8, 1
        %s73 = sand.u32 %s8, 1
        %s74 = smul.addr %s73, 56
        %s75 = scalar_lea.vmem [#allocation1], %s74
        %v76 = vlaneseq
        %v77 = vand.u32 %v76, 127
        %v78 = vlaneseq
        %v79 = vshrl.u32 %v78, 7
        %vm81 = vcmp.eq.s32.totalorder %v77, %v79
        %v82 = vld [vmem:[%s67] sm:$0xff]
        %v83 = vlaneseq
        %v84 = vand.u32 %v83, 127
        %vm85 = vcmp.eq.s32.totalorder %v84, 0
        %v86 = vsel %vm85, %v82, 1.0
        %v87 = vsel %vm81, %v86, 0.0
        %v88 = vlaneseq
        %v89 = vand.u32 %v88, 127
        %v90 = vlaneseq
        %v91 = vshrl.u32 %v90, 7
        %v92 = vadd.s32 %v91, 8
        %vm93 = vcmp.eq.s32.totalorder %v89, %v92
        %v94 = vsel %vm93, 1.0, 0.0
        %v95 = vlaneseq
        %v96 = vand.u32 %v95, 127
        %v97 = vlaneseq
        %v98 = vshrl.u32 %v97, 7
        %v99 = vadd.s32 %v98, 16
        %vm100 = vcmp.eq.s32.totalorder %v96, %v99
        %v101 = vsel %vm100, 1.0, 0.0
        %v102 = vlaneseq
        %v103 = vand.u32 %v102, 127
        %v104 = vlaneseq
        %v105 = vshrl.u32 %v104, 7
        %v106 = vadd.s32 %v105, 24
        %vm107 = vcmp.eq.s32.totalorder %v103, %v106
        %v108 = vsel %vm107, 1.0, 0.0
        %v109 = vlaneseq
        %v110 = vand.u32 %v109, 127
        %v111 = vlaneseq
        %v112 = vshrl.u32 %v111, 7
        %v113 = vadd.s32 %v112, 32
        %vm114 = vcmp.eq.s32.totalorder %v110, %v113
        %v115 = vsel %vm114, 1.0, 0.0
        %v116 = vlaneseq
        %v117 = vand.u32 %v116, 127
        %v118 = vlaneseq
        %v119 = vshrl.u32 %v118, 7
        %v120 = vadd.s32 %v119, 40
        %vm121 = vcmp.eq.s32.totalorder %v117, %v120
        %v122 = vsel %vm121, 1.0, 0.0
        %v123 = vlaneseq
        %v124 = vand.u32 %v123, 127
        %v125 = vlaneseq
        %v126 = vshrl.u32 %v125, 7
        %v127 = vadd.s32 %v126, 48
        %vm128 = vcmp.eq.s32.totalorder %v124, %v127
        %v129 = vsel %vm128, 1.0, 0.0
        %s130 = scalar_lea.vmem %s67, 1 [#allocation0]
        %v131 = vld [vmem:[%s130] ss:$0 sm:$0xff]
        %vm132 = vcmask 400384
        %v133 = vsel %vm132, %v131, 0.0
        %v134 = vlaneseq
        %v135 = vand.u32 %v134, 127
        %vm136 = vcmp.eq.s32.totalorder %v135, 1
        %v137 = vmul.f32 %v133, %v87
        %138 = vadd.xlane.f32.xlu0 %v137
        %v139 = vpop.xlane.xlu0 %138
        %v140 = vsel %vm136, %v139, %v87
        %s141 = scalar_lea.vmem %s67, 2 [#allocation0]
        %v142 = vld [vmem:[%s141] ss:$0 sm:$0xff]
        %vm143 = vcmask 400384
        %v144 = vsel %vm143, %v142, 0.0
        %v145 = vlaneseq
        %v146 = vand.u32 %v145, 127
        %vm147 = vcmp.eq.s32.totalorder %v146, 2
        %v148 = vmul.f32 %v144, %v140
        %149 = vadd.xlane.f32.xlu0 %v148
        %v150 = vpop.xlane.xlu0 %149
        %v151 = vsel %vm147, %v150, %v140
        %s152 = scalar_lea.vmem %s67, 3 [#allocation0]
        %v153 = vld [vmem:[%s152] ss:$0 sm:$0xff]
        %vm154 = vcmask 400384
        %v155 = vsel %vm154, %v153, 0.0
        %v156 = vlaneseq
        %v157 = vand.u32 %v156, 127
        %vm158 = vcmp.eq.s32.totalorder %v157, 3
        %v159 = vmul.f32 %v155, %v151
        %160 = vadd.xlane.f32.xlu0 %v159
        %v161 = vpop.xlane.xlu0 %160
        %v162 = vsel %vm158, %v161, %v151
        %s163 = scalar_lea.vmem %s67, 4 [#allocation0]
        %v164 = vld [vmem:[%s163] ss:$0 sm:$0xff]
        %vm165 = vcmask 400384
        %v166 = vsel %vm165, %v164, 0.0
        %v167 = vlaneseq
        %v168 = vand.u32 %v167, 127
        %vm169 = vcmp.eq.s32.totalorder %v168, 4
        %v170 = vmul.f32 %v166, %v162
        %171 = vadd.xlane.f32.xlu0 %v170
        %v172 = vpop.xlane.xlu0 %171
        %v173 = vsel %vm169, %v172, %v162
        %s174 = scalar_lea.vmem %s67, 5 [#allocation0]
        %v175 = vld [vmem:[%s174] ss:$0 sm:$0xff]
        %vm176 = vcmask 400384
        %v177 = vsel %vm176, %v175, 0.0
        %v178 = vlaneseq
        %v179 = vand.u32 %v178, 127
        %vm180 = vcmp.eq.s32.totalorder %v179, 5
        %v181 = vmul.f32 %v177, %v173
        %182 = vadd.xlane.f32.xlu0 %v181
        %v183 = vpop.xlane.xlu0 %182
        %v184 = vsel %vm180, %v183, %v173
        %s185 = scalar_lea.vmem %s67, 6 [#allocation0]
        %v186 = vld [vmem:[%s185] ss:$0 sm:$0xff]
        %vm187 = vcmask 400384
        %v188 = vsel %vm187, %v186, 0.0
        %v189 = vlaneseq
        %v190 = vand.u32 %v189, 127
        %vm191 = vcmp.eq.s32.totalorder %v190, 6
        %v192 = vmul.f32 %v188, %v184
        %193 = vadd.xlane.f32.xlu0 %v192
        %v194 = vpop.xlane.xlu0 %193
        %v195 = vsel %vm191, %v194, %v184
        %s196 = scalar_lea.vmem %s67, 7 [#allocation0]
        %v197 = vld [vmem:[%s196] ss:$0 sm:$0xff]
        %vm198 = vcmask 400384
        %v199 = vsel %vm198, %v197, 0.0
        %v200 = vlaneseq
        %v201 = vand.u32 %v200, 127
        %vm202 = vcmp.eq.s32.totalorder %v201, 7
        %v203 = vmul.f32 %v199, %v195
        %204 = vadd.xlane.f32.xlu0 %v203
        %v205 = vpop.xlane.xlu0 %204
        %v206 = vsel %vm202, %v205, %v195
        %s207 = scalar_lea.vmem %s67, 8 [#allocation0]
        %v208 = vld [vmem:[%s207] ss:$0 sm:$0xff]
        %vm209 = vcmask 400384
        %v210 = vsel %vm209, %v208, 0.0
        %v211 = vlaneseq
        %v212 = vand.u32 %v211, 127
        %vm213 = vcmp.eq.s32.totalorder %v212, 8
        %v214 = vmul.f32 %v210, %v206
        %215 = vadd.xlane.f32.xlu0 %v214
        %v216 = vpop.xlane.xlu0 %215
        %v217 = vsel %vm213, %v216, %v206
        %v218 = vmul.f32 %v210, %v94
        %219 = vadd.xlane.f32.xlu0 %v218
        %v220 = vpop.xlane.xlu0 %219
        %v221 = vsel %vm213, %v220, %v94
        %s222 = scalar_lea.vmem %s67, 9 [#allocation0]
        %v223 = vld [vmem:[%s222] ss:$0 sm:$0xff]
        %vm224 = vcmask 400384
        %v225 = vsel %vm224, %v223, 0.0
        %v226 = vlaneseq
        %v227 = vand.u32 %v226, 127
        %vm228 = vcmp.eq.s32.totalorder %v227, 9
        %v229 = vmul.f32 %v225, %v217
        %230 = vadd.xlane.f32.xlu0 %v229
        %v231 = vpop.xlane.xlu0 %230
        %v232 = vsel %vm228, %v231, %v217
        %v233 = vmul.f32 %v225, %v221
        %234 = vadd.xlane.f32.xlu0 %v233
        %v235 = vpop.xlane.xlu0 %234
        %v236 = vsel %vm228, %v235, %v221
        %s237 = scalar_lea.vmem %s67, 10 [#allocation0]
        %v238 = vld [vmem:[%s237] ss:$0 sm:$0xff]
        %vm239 = vcmask 400384
        %v240 = vsel %vm239, %v238, 0.0
        %v241 = vlaneseq
        %v242 = vand.u32 %v241, 127
        %vm243 = vcmp.eq.s32.totalorder %v242, 10
        %v244 = vmul.f32 %v240, %v232
        %245 = vadd.xlane.f32.xlu0 %v244
        %v246 = vpop.xlane.xlu0 %245
        %v247 = vsel %vm243, %v246, %v232
        %v248 = vmul.f32 %v240, %v236
        %249 = vadd.xlane.f32.xlu0 %v248
        %v250 = vpop.xlane.xlu0 %249
        %v251 = vsel %vm243, %v250, %v236
        %s252 = scalar_lea.vmem %s67, 11 [#allocation0]
        %v253 = vld [vmem:[%s252] ss:$0 sm:$0xff]
        %vm254 = vcmask 400384
        %v255 = vsel %vm254, %v253, 0.0
        %v256 = vlaneseq
        %v257 = vand.u32 %v256, 127
        %vm258 = vcmp.eq.s32.totalorder %v257, 11
        %v259 = vmul.f32 %v255, %v247
        %260 = vadd.xlane.f32.xlu0 %v259
        %v261 = vpop.xlane.xlu0 %260
        %v262 = vsel %vm258, %v261, %v247
        %v263 = vmul.f32 %v255, %v251
        %264 = vadd.xlane.f32.xlu0 %v263
        %v265 = vpop.xlane.xlu0 %264
        %v266 = vsel %vm258, %v265, %v251
        %s267 = scalar_lea.vmem %s67, 12 [#allocation0]
        %v268 = vld [vmem:[%s267] ss:$0 sm:$0xff]
        %vm269 = vcmask 400384
        %v270 = vsel %vm269, %v268, 0.0
        %v271 = vlaneseq
        %v272 = vand.u32 %v271, 127
        %vm273 = vcmp.eq.s32.totalorder %v272, 12
        %v274 = vmul.f32 %v270, %v262
        %275 = vadd.xlane.f32.xlu0 %v274
        %v276 = vpop.xlane.xlu0 %275
        %v277 = vsel %vm273, %v276, %v262
        %v278 = vmul.f32 %v270, %v266
        %279 = vadd.xlane.f32.xlu0 %v278
        %v280 = vpop.xlane.xlu0 %279
        %v281 = vsel %vm273, %v280, %v266
        %s282 = scalar_lea.vmem %s67, 13 [#allocation0]
        %v283 = vld [vmem:[%s282] ss:$0 sm:$0xff]
        %vm284 = vcmask 400384
        %v285 = vsel %vm284, %v283, 0.0
        %v286 = vlaneseq
        %v287 = vand.u32 %v286, 127
        %vm288 = vcmp.eq.s32.totalorder %v287, 13
        %v289 = vmul.f32 %v285, %v277
        %290 = vadd.xlane.f32.xlu0 %v289
        %v291 = vpop.xlane.xlu0 %290
        %v292 = vsel %vm288, %v291, %v277
        %v293 = vmul.f32 %v285, %v281
        %294 = vadd.xlane.f32.xlu0 %v293
        %v295 = vpop.xlane.xlu0 %294
        %v296 = vsel %vm288, %v295, %v281
        %s297 = scalar_lea.vmem %s67, 14 [#allocation0]
        %v298 = vld [vmem:[%s297] ss:$0 sm:$0xff]
        %vm299 = vcmask 400384
        %v300 = vsel %vm299, %v298, 0.0
        %v301 = vlaneseq
        %v302 = vand.u32 %v301, 127
        %vm303 = vcmp.eq.s32.totalorder %v302, 14
        %v304 = vmul.f32 %v300, %v292
        %305 = vadd.xlane.f32.xlu0 %v304
        %v306 = vpop.xlane.xlu0 %305
        %v307 = vsel %vm303, %v306, %v292
        %v308 = vmul.f32 %v300, %v296
        %309 = vadd.xlane.f32.xlu0 %v308
        %v310 = vpop.xlane.xlu0 %309
        %v311 = vsel %vm303, %v310, %v296
        %s312 = scalar_lea.vmem %s67, 15 [#allocation0]
        %v313 = vld [vmem:[%s312] ss:$0 sm:$0xff]
        %vm314 = vcmask 400384
        %v315 = vsel %vm314, %v313, 0.0
        %v316 = vlaneseq
        %v317 = vand.u32 %v316, 127
        %vm318 = vcmp.eq.s32.totalorder %v317, 15
        %v319 = vmul.f32 %v315, %v307
        %320 = vadd.xlane.f32.xlu0 %v319
        %v321 = vpop.xlane.xlu0 %320
        %v322 = vsel %vm318, %v321, %v307
        %v323 = vmul.f32 %v315, %v311
        %324 = vadd.xlane.f32.xlu0 %v323
        %v325 = vpop.xlane.xlu0 %324
        %v326 = vsel %vm318, %v325, %v311
        %s327 = scalar_lea.vmem %s67, 16 [#allocation0]
        %v328 = vld [vmem:[%s327] ss:$0 sm:$0xff]
        %vm329 = vcmask 400384
        %v330 = vsel %vm329, %v328, 0.0
        %v331 = vlaneseq
        %v332 = vand.u32 %v331, 127
        %vm333 = vcmp.eq.s32.totalorder %v332, 16
        %v334 = vmul.f32 %v330, %v322
        %335 = vadd.xlane.f32.xlu0 %v334
        %v336 = vpop.xlane.xlu0 %335
        %v337 = vsel %vm333, %v336, %v322
        %v338 = vmul.f32 %v330, %v326
        %339 = vadd.xlane.f32.xlu0 %v338
        %v340 = vpop.xlane.xlu0 %339
        %v341 = vsel %vm333, %v340, %v326
        %v342 = vmul.f32 %v330, %v101
        %343 = vadd.xlane.f32.xlu0 %v342
        %v344 = vpop.xlane.xlu0 %343
        %v345 = vsel %vm333, %v344, %v101
        %s346 = scalar_lea.vmem %s67, 17 [#allocation0]
        %v347 = vld [vmem:[%s346] ss:$0 sm:$0xff]
        %vm348 = vcmask 400384
        %v349 = vsel %vm348, %v347, 0.0
        %v350 = vlaneseq
        %v351 = vand.u32 %v350, 127
        %vm352 = vcmp.eq.s32.totalorder %v351, 17
        %v353 = vmul.f32 %v349, %v337
        %354 = vadd.xlane.f32.xlu0 %v353
        %v355 = vpop.xlane.xlu0 %354
        %v356 = vsel %vm352, %v355, %v337
        %v357 = vmul.f32 %v349, %v341
        %358 = vadd.xlane.f32.xlu0 %v357
        %v359 = vpop.xlane.xlu0 %358
        %v360 = vsel %vm352, %v359, %v341
        %v361 = vmul.f32 %v349, %v345
        %362 = vadd.xlane.f32.xlu0 %v361
        %v363 = vpop.xlane.xlu0 %362
        %v364 = vsel %vm352, %v363, %v345
        %s365 = scalar_lea.vmem %s67, 18 [#allocation0]
        %v366 = vld [vmem:[%s365] ss:$0 sm:$0xff]
        %vm367 = vcmask 400384
        %v368 = vsel %vm367, %v366, 0.0
        %v369 = vlaneseq
        %v370 = vand.u32 %v369, 127
        %vm371 = vcmp.eq.s32.totalorder %v370, 18
        %v372 = vmul.f32 %v368, %v356
        %373 = vadd.xlane.f32.xlu0 %v372
        %v374 = vpop.xlane.xlu0 %373
        %v375 = vsel %vm371, %v374, %v356
        %v376 = vmul.f32 %v368, %v360
        %377 = vadd.xlane.f32.xlu0 %v376
        %v378 = vpop.xlane.xlu0 %377
        %v379 = vsel %vm371, %v378, %v360
        %v380 = vmul.f32 %v368, %v364
        %381 = vadd.xlane.f32.xlu0 %v380
        %v382 = vpop.xlane.xlu0 %381
        %v383 = vsel %vm371, %v382, %v364
        %s384 = scalar_lea.vmem %s67, 19 [#allocation0]
        %v385 = vld [vmem:[%s384] ss:$0 sm:$0xff]
        %vm386 = vcmask 400384
        %v387 = vsel %vm386, %v385, 0.0
        %v388 = vlaneseq
        %v389 = vand.u32 %v388, 127
        %vm390 = vcmp.eq.s32.totalorder %v389, 19
        %v391 = vmul.f32 %v387, %v375
        %392 = vadd.xlane.f32.xlu0 %v391
        %v393 = vpop.xlane.xlu0 %392
        %v394 = vsel %vm390, %v393, %v375
        %v395 = vmul.f32 %v387, %v379
        %396 = vadd.xlane.f32.xlu0 %v395
        %v397 = vpop.xlane.xlu0 %396
        %v398 = vsel %vm390, %v397, %v379
        %v399 = vmul.f32 %v387, %v383
        %400 = vadd.xlane.f32.xlu0 %v399
        %v401 = vpop.xlane.xlu0 %400
        %v402 = vsel %vm390, %v401, %v383
        %s403 = scalar_lea.vmem %s67, 20 [#allocation0]
        %v404 = vld [vmem:[%s403] ss:$0 sm:$0xff]
        %vm405 = vcmask 400384
        %v406 = vsel %vm405, %v404, 0.0
        %v407 = vlaneseq
        %v408 = vand.u32 %v407, 127
        %vm409 = vcmp.eq.s32.totalorder %v408, 20
        %v410 = vmul.f32 %v406, %v394
        %411 = vadd.xlane.f32.xlu0 %v410
        %v412 = vpop.xlane.xlu0 %411
        %v413 = vsel %vm409, %v412, %v394
        %v414 = vmul.f32 %v406, %v398
        %415 = vadd.xlane.f32.xlu0 %v414
        %v416 = vpop.xlane.xlu0 %415
        %v417 = vsel %vm409, %v416, %v398
        %v418 = vmul.f32 %v406, %v402
        %419 = vadd.xlane.f32.xlu0 %v418
        %v420 = vpop.xlane.xlu0 %419
        %v421 = vsel %vm409, %v420, %v402
        %s422 = scalar_lea.vmem %s67, 21 [#allocation0]
        %v423 = vld [vmem:[%s422] ss:$0 sm:$0xff]
        %vm424 = vcmask 400384
        %v425 = vsel %vm424, %v423, 0.0
        %v426 = vlaneseq
        %v427 = vand.u32 %v426, 127
        %vm428 = vcmp.eq.s32.totalorder %v427, 21
        %v429 = vmul.f32 %v425, %v413
        %430 = vadd.xlane.f32.xlu0 %v429
        %v431 = vpop.xlane.xlu0 %430
        %v432 = vsel %vm428, %v431, %v413
        %v433 = vmul.f32 %v425, %v417
        %434 = vadd.xlane.f32.xlu0 %v433
        %v435 = vpop.xlane.xlu0 %434
        %v436 = vsel %vm428, %v435, %v417
        %v437 = vmul.f32 %v425, %v421
        %438 = vadd.xlane.f32.xlu0 %v437
        %v439 = vpop.xlane.xlu0 %438
        %v440 = vsel %vm428, %v439, %v421
        %s441 = scalar_lea.vmem %s67, 22 [#allocation0]
        %v442 = vld [vmem:[%s441] ss:$0 sm:$0xff]
        %vm443 = vcmask 400384
        %v444 = vsel %vm443, %v442, 0.0
        %v445 = vlaneseq
        %v446 = vand.u32 %v445, 127
        %vm447 = vcmp.eq.s32.totalorder %v446, 22
        %v448 = vmul.f32 %v444, %v432
        %449 = vadd.xlane.f32.xlu0 %v448
        %v450 = vpop.xlane.xlu0 %449
        %v451 = vsel %vm447, %v450, %v432
        %v452 = vmul.f32 %v444, %v436
        %453 = vadd.xlane.f32.xlu0 %v452
        %v454 = vpop.xlane.xlu0 %453
        %v455 = vsel %vm447, %v454, %v436
        %v456 = vmul.f32 %v444, %v440
        %457 = vadd.xlane.f32.xlu0 %v456
        %v458 = vpop.xlane.xlu0 %457
        %v459 = vsel %vm447, %v458, %v440
        %s460 = scalar_lea.vmem %s67, 23 [#allocation0]
        %v461 = vld [vmem:[%s460] ss:$0 sm:$0xff]
        %vm462 = vcmask 400384
        %v463 = vsel %vm462, %v461, 0.0
        %v464 = vlaneseq
        %v465 = vand.u32 %v464, 127
        %vm466 = vcmp.eq.s32.totalorder %v465, 23
        %v467 = vmul.f32 %v463, %v451
        %468 = vadd.xlane.f32.xlu0 %v467
        %v469 = vpop.xlane.xlu0 %468
        %v470 = vsel %vm466, %v469, %v451
        %v471 = vmul.f32 %v463, %v455
        %472 = vadd.xlane.f32.xlu0 %v471
        %v473 = vpop.xlane.xlu0 %472
        %v474 = vsel %vm466, %v473, %v455
        %v475 = vmul.f32 %v463, %v459
        %476 = vadd.xlane.f32.xlu0 %v475
        %v477 = vpop.xlane.xlu0 %476
        %v478 = vsel %vm466, %v477, %v459
        %s479 = scalar_lea.vmem %s67, 24 [#allocation0]
        %v480 = vld [vmem:[%s479] ss:$0 sm:$0xff]
        %vm481 = vcmask 400384
        %v482 = vsel %vm481, %v480, 0.0
        %v483 = vlaneseq
        %v484 = vand.u32 %v483, 127
        %vm485 = vcmp.eq.s32.totalorder %v484, 24
        %v486 = vmul.f32 %v482, %v470
        %487 = vadd.xlane.f32.xlu0 %v486
        %v488 = vpop.xlane.xlu0 %487
        %v489 = vsel %vm485, %v488, %v470
        %v490 = vmul.f32 %v482, %v474
        %491 = vadd.xlane.f32.xlu0 %v490
        %v492 = vpop.xlane.xlu0 %491
        %v493 = vsel %vm485, %v492, %v474
        %v494 = vmul.f32 %v482, %v478
        %495 = vadd.xlane.f32.xlu0 %v494
        %v496 = vpop.xlane.xlu0 %495
        %v497 = vsel %vm485, %v496, %v478
        %v498 = vmul.f32 %v482, %v108
        %499 = vadd.xlane.f32.xlu0 %v498
        %v500 = vpop.xlane.xlu0 %499
        %v501 = vsel %vm485, %v500, %v108
        %s502 = scalar_lea.vmem %s67, 25 [#allocation0]
        %v503 = vld [vmem:[%s502] ss:$0 sm:$0xff]
        %vm504 = vcmask 400384
        %v505 = vsel %vm504, %v503, 0.0
        %v506 = vlaneseq
        %v507 = vand.u32 %v506, 127
        %vm508 = vcmp.eq.s32.totalorder %v507, 25
        %v509 = vmul.f32 %v505, %v489
        %510 = vadd.xlane.f32.xlu0 %v509
        %v511 = vpop.xlane.xlu0 %510
        %v512 = vsel %vm508, %v511, %v489
        %v513 = vmul.f32 %v505, %v493
        %514 = vadd.xlane.f32.xlu0 %v513
        %v515 = vpop.xlane.xlu0 %514
        %v516 = vsel %vm508, %v515, %v493
        %v517 = vmul.f32 %v505, %v497
        %518 = vadd.xlane.f32.xlu0 %v517
        %v519 = vpop.xlane.xlu0 %518
        %v520 = vsel %vm508, %v519, %v497
        %v521 = vmul.f32 %v505, %v501
        %522 = vadd.xlane.f32.xlu0 %v521
        %v523 = vpop.xlane.xlu0 %522
        %v524 = vsel %vm508, %v523, %v501
        %s525 = scalar_lea.vmem %s67, 26 [#allocation0]
        %v526 = vld [vmem:[%s525] ss:$0 sm:$0xff]
        %vm527 = vcmask 400384
        %v528 = vsel %vm527, %v526, 0.0
        %v529 = vlaneseq
        %v530 = vand.u32 %v529, 127
        %vm531 = vcmp.eq.s32.totalorder %v530, 26
        %v532 = vmul.f32 %v528, %v512
        %533 = vadd.xlane.f32.xlu0 %v532
        %v534 = vpop.xlane.xlu0 %533
        %v535 = vsel %vm531, %v534, %v512
        %v536 = vmul.f32 %v528, %v516
        %537 = vadd.xlane.f32.xlu0 %v536
        %v538 = vpop.xlane.xlu0 %537
        %v539 = vsel %vm531, %v538, %v516
        %v540 = vmul.f32 %v528, %v520
        %541 = vadd.xlane.f32.xlu0 %v540
        %v542 = vpop.xlane.xlu0 %541
        %v543 = vsel %vm531, %v542, %v520
        %v544 = vmul.f32 %v528, %v524
        %545 = vadd.xlane.f32.xlu0 %v544
        %v546 = vpop.xlane.xlu0 %545
        %v547 = vsel %vm531, %v546, %v524
        %s548 = scalar_lea.vmem %s67, 27 [#allocation0]
        %v549 = vld [vmem:[%s548] ss:$0 sm:$0xff]
        %vm550 = vcmask 400384
        %v551 = vsel %vm550, %v549, 0.0
        %v552 = vlaneseq
        %v553 = vand.u32 %v552, 127
        %vm554 = vcmp.eq.s32.totalorder %v553, 27
        %v555 = vmul.f32 %v551, %v535
        %556 = vadd.xlane.f32.xlu0 %v555
        %v557 = vpop.xlane.xlu0 %556
        %v558 = vsel %vm554, %v557, %v535
        %v559 = vmul.f32 %v551, %v539
        %560 = vadd.xlane.f32.xlu0 %v559
        %v561 = vpop.xlane.xlu0 %560
        %v562 = vsel %vm554, %v561, %v539
        %v563 = vmul.f32 %v551, %v543
        %564 = vadd.xlane.f32.xlu0 %v563
        %v565 = vpop.xlane.xlu0 %564
        %v566 = vsel %vm554, %v565, %v543
        %v567 = vmul.f32 %v551, %v547
        %568 = vadd.xlane.f32.xlu0 %v567
        %v569 = vpop.xlane.xlu0 %568
        %v570 = vsel %vm554, %v569, %v547
        %s571 = scalar_lea.vmem %s67, 28 [#allocation0]
        %v572 = vld [vmem:[%s571] ss:$0 sm:$0xff]
        %vm573 = vcmask 400384
        %v574 = vsel %vm573, %v572, 0.0
        %v575 = vlaneseq
        %v576 = vand.u32 %v575, 127
        %vm577 = vcmp.eq.s32.totalorder %v576, 28
        %v578 = vmul.f32 %v574, %v558
        %579 = vadd.xlane.f32.xlu0 %v578
        %v580 = vpop.xlane.xlu0 %579
        %v581 = vsel %vm577, %v580, %v558
        %v582 = vmul.f32 %v574, %v562
        %583 = vadd.xlane.f32.xlu0 %v582
        %v584 = vpop.xlane.xlu0 %583
        %v585 = vsel %vm577, %v584, %v562
        %v586 = vmul.f32 %v574, %v566
        %587 = vadd.xlane.f32.xlu0 %v586
        %v588 = vpop.xlane.xlu0 %587
        %v589 = vsel %vm577, %v588, %v566
        %v590 = vmul.f32 %v574, %v570
        %591 = vadd.xlane.f32.xlu0 %v590
        %v592 = vpop.xlane.xlu0 %591
        %v593 = vsel %vm577, %v592, %v570
        %s594 = scalar_lea.vmem %s67, 29 [#allocation0]
        %v595 = vld [vmem:[%s594] ss:$0 sm:$0xff]
        %vm596 = vcmask 400384
        %v597 = vsel %vm596, %v595, 0.0
        %v598 = vlaneseq
        %v599 = vand.u32 %v598, 127
        %vm600 = vcmp.eq.s32.totalorder %v599, 29
        %v601 = vmul.f32 %v597, %v581
        %602 = vadd.xlane.f32.xlu0 %v601
        %v603 = vpop.xlane.xlu0 %602
        %v604 = vsel %vm600, %v603, %v581
        %v605 = vmul.f32 %v597, %v585
        %606 = vadd.xlane.f32.xlu0 %v605
        %v607 = vpop.xlane.xlu0 %606
        %v608 = vsel %vm600, %v607, %v585
        %v609 = vmul.f32 %v597, %v589
        %610 = vadd.xlane.f32.xlu0 %v609
        %v611 = vpop.xlane.xlu0 %610
        %v612 = vsel %vm600, %v611, %v589
        %v613 = vmul.f32 %v597, %v593
        %614 = vadd.xlane.f32.xlu0 %v613
        %v615 = vpop.xlane.xlu0 %614
        %v616 = vsel %vm600, %v615, %v593
        %s617 = scalar_lea.vmem %s67, 30 [#allocation0]
        %v618 = vld [vmem:[%s617] ss:$0 sm:$0xff]
        %vm619 = vcmask 400384
        %v620 = vsel %vm619, %v618, 0.0
        %v621 = vlaneseq
        %v622 = vand.u32 %v621, 127
        %vm623 = vcmp.eq.s32.totalorder %v622, 30
        %v624 = vmul.f32 %v620, %v604
        %625 = vadd.xlane.f32.xlu0 %v624
        %v626 = vpop.xlane.xlu0 %625
        %v627 = vsel %vm623, %v626, %v604
        %v628 = vmul.f32 %v620, %v608
        %629 = vadd.xlane.f32.xlu0 %v628
        %v630 = vpop.xlane.xlu0 %629
        %v631 = vsel %vm623, %v630, %v608
        %v632 = vmul.f32 %v620, %v612
        %633 = vadd.xlane.f32.xlu0 %v632
        %v634 = vpop.xlane.xlu0 %633
        %v635 = vsel %vm623, %v634, %v612
        %v636 = vmul.f32 %v620, %v616
        %637 = vadd.xlane.f32.xlu0 %v636
        %v638 = vpop.xlane.xlu0 %637
        %v639 = vsel %vm623, %v638, %v616
        %s640 = scalar_lea.vmem %s67, 31 [#allocation0]
        %v641 = vld [vmem:[%s640] ss:$0 sm:$0xff]
        %vm642 = vcmask 400384
        %v643 = vsel %vm642, %v641, 0.0
        %v644 = vlaneseq
        %v645 = vand.u32 %v644, 127
        %vm646 = vcmp.eq.s32.totalorder %v645, 31
        %v647 = vmul.f32 %v643, %v627
        %648 = vadd.xlane.f32.xlu0 %v647
        %v649 = vpop.xlane.xlu0 %648
        %v650 = vsel %vm646, %v649, %v627
        %v651 = vmul.f32 %v643, %v631
        %652 = vadd.xlane.f32.xlu0 %v651
        %v653 = vpop.xlane.xlu0 %652
        %v654 = vsel %vm646, %v653, %v631
        %v655 = vmul.f32 %v643, %v635
        %656 = vadd.xlane.f32.xlu0 %v655
        %v657 = vpop.xlane.xlu0 %656
        %v658 = vsel %vm646, %v657, %v635
        %v659 = vmul.f32 %v643, %v639
        %660 = vadd.xlane.f32.xlu0 %v659
        %v661 = vpop.xlane.xlu0 %660
        %v662 = vsel %vm646, %v661, %v639
        %s663 = scalar_lea.vmem %s67, 32 [#allocation0]
        %v664 = vld [vmem:[%s663] ss:$0 sm:$0xff]
        %vm665 = vcmask 400384
        %v666 = vsel %vm665, %v664, 0.0
        %v667 = vlaneseq
        %v668 = vand.u32 %v667, 127
        %vm669 = vcmp.eq.s32.totalorder %v668, 32
        %v670 = vmul.f32 %v666, %v650
        %671 = vadd.xlane.f32.xlu0 %v670
        %v672 = vpop.xlane.xlu0 %671
        %v673 = vsel %vm669, %v672, %v650
        %v674 = vmul.f32 %v666, %v654
        %675 = vadd.xlane.f32.xlu0 %v674
        %v676 = vpop.xlane.xlu0 %675
        %v677 = vsel %vm669, %v676, %v654
        %v678 = vmul.f32 %v666, %v658
        %679 = vadd.xlane.f32.xlu0 %v678
        %v680 = vpop.xlane.xlu0 %679
        %v681 = vsel %vm669, %v680, %v658
        %v682 = vmul.f32 %v666, %v662
        %683 = vadd.xlane.f32.xlu0 %v682
        %v684 = vpop.xlane.xlu0 %683
        %v685 = vsel %vm669, %v684, %v662
        %v686 = vmul.f32 %v666, %v115
        %687 = vadd.xlane.f32.xlu0 %v686
        %v688 = vpop.xlane.xlu0 %687
        %v689 = vsel %vm669, %v688, %v115
        %s690 = scalar_lea.vmem %s67, 33 [#allocation0]
        %v691 = vld [vmem:[%s690] ss:$0 sm:$0xff]
        %vm692 = vcmask 400384
        %v693 = vsel %vm692, %v691, 0.0
        %v694 = vlaneseq
        %v695 = vand.u32 %v694, 127
        %vm696 = vcmp.eq.s32.totalorder %v695, 33
        %v697 = vmul.f32 %v693, %v673
        %698 = vadd.xlane.f32.xlu0 %v697
        %v699 = vpop.xlane.xlu0 %698
        %v700 = vsel %vm696, %v699, %v673
        %v701 = vmul.f32 %v693, %v677
        %702 = vadd.xlane.f32.xlu0 %v701
        %v703 = vpop.xlane.xlu0 %702
        %v704 = vsel %vm696, %v703, %v677
        %v705 = vmul.f32 %v693, %v681
        %706 = vadd.xlane.f32.xlu0 %v705
        %v707 = vpop.xlane.xlu0 %706
        %v708 = vsel %vm696, %v707, %v681
        %v709 = vmul.f32 %v693, %v685
        %710 = vadd.xlane.f32.xlu0 %v709
        %v711 = vpop.xlane.xlu0 %710
        %v712 = vsel %vm696, %v711, %v685
        %v713 = vmul.f32 %v693, %v689
        %714 = vadd.xlane.f32.xlu0 %v713
        %v715 = vpop.xlane.xlu0 %714
        %v716 = vsel %vm696, %v715, %v689
        %s717 = scalar_lea.vmem %s67, 34 [#allocation0]
        %v718 = vld [vmem:[%s717] ss:$0 sm:$0xff]
        %vm719 = vcmask 400384
        %v720 = vsel %vm719, %v718, 0.0
        %v721 = vlaneseq
        %v722 = vand.u32 %v721, 127
        %vm723 = vcmp.eq.s32.totalorder %v722, 34
        %v724 = vmul.f32 %v720, %v700
        %725 = vadd.xlane.f32.xlu0 %v724
        %v726 = vpop.xlane.xlu0 %725
        %v727 = vsel %vm723, %v726, %v700
        %v728 = vmul.f32 %v720, %v704
        %729 = vadd.xlane.f32.xlu0 %v728
        %v730 = vpop.xlane.xlu0 %729
        %v731 = vsel %vm723, %v730, %v704
        %v732 = vmul.f32 %v720, %v708
        %733 = vadd.xlane.f32.xlu0 %v732
        %v734 = vpop.xlane.xlu0 %733
        %v735 = vsel %vm723, %v734, %v708
        %v736 = vmul.f32 %v720, %v712
        %737 = vadd.xlane.f32.xlu0 %v736
        %v738 = vpop.xlane.xlu0 %737
        %v739 = vsel %vm723, %v738, %v712
        %v740 = vmul.f32 %v720, %v716
        %741 = vadd.xlane.f32.xlu0 %v740
        %v742 = vpop.xlane.xlu0 %741
        %v743 = vsel %vm723, %v742, %v716
        %s744 = scalar_lea.vmem %s67, 35 [#allocation0]
        %v745 = vld [vmem:[%s744] ss:$0 sm:$0xff]
        %vm746 = vcmask 400384
        %v747 = vsel %vm746, %v745, 0.0
        %v748 = vlaneseq
        %v749 = vand.u32 %v748, 127
        %vm750 = vcmp.eq.s32.totalorder %v749, 35
        %v751 = vmul.f32 %v747, %v727
        %752 = vadd.xlane.f32.xlu0 %v751
        %v753 = vpop.xlane.xlu0 %752
        %v754 = vsel %vm750, %v753, %v727
        %v755 = vmul.f32 %v747, %v731
        %756 = vadd.xlane.f32.xlu0 %v755
        %v757 = vpop.xlane.xlu0 %756
        %v758 = vsel %vm750, %v757, %v731
        %v759 = vmul.f32 %v747, %v735
        %760 = vadd.xlane.f32.xlu0 %v759
        %v761 = vpop.xlane.xlu0 %760
        %v762 = vsel %vm750, %v761, %v735
        %v763 = vmul.f32 %v747, %v739
        %764 = vadd.xlane.f32.xlu0 %v763
        %v765 = vpop.xlane.xlu0 %764
        %v766 = vsel %vm750, %v765, %v739
        %v767 = vmul.f32 %v747, %v743
        %768 = vadd.xlane.f32.xlu0 %v767
        %v769 = vpop.xlane.xlu0 %768
        %v770 = vsel %vm750, %v769, %v743
        %s771 = scalar_lea.vmem %s67, 36 [#allocation0]
        %v772 = vld [vmem:[%s771] ss:$0 sm:$0xff]
        %vm773 = vcmask 400384
        %v774 = vsel %vm773, %v772, 0.0
        %v775 = vlaneseq
        %v776 = vand.u32 %v775, 127
        %vm777 = vcmp.eq.s32.totalorder %v776, 36
        %v778 = vmul.f32 %v774, %v754
        %779 = vadd.xlane.f32.xlu0 %v778
        %v780 = vpop.xlane.xlu0 %779
        %v781 = vsel %vm777, %v780, %v754
        %v782 = vmul.f32 %v774, %v758
        %783 = vadd.xlane.f32.xlu0 %v782
        %v784 = vpop.xlane.xlu0 %783
        %v785 = vsel %vm777, %v784, %v758
        %v786 = vmul.f32 %v774, %v762
        %787 = vadd.xlane.f32.xlu0 %v786
        %v788 = vpop.xlane.xlu0 %787
        %v789 = vsel %vm777, %v788, %v762
        %v790 = vmul.f32 %v774, %v766
        %791 = vadd.xlane.f32.xlu0 %v790
        %v792 = vpop.xlane.xlu0 %791
        %v793 = vsel %vm777, %v792, %v766
        %v794 = vmul.f32 %v774, %v770
        %795 = vadd.xlane.f32.xlu0 %v794
        %v796 = vpop.xlane.xlu0 %795
        %v797 = vsel %vm777, %v796, %v770
        %s798 = scalar_lea.vmem %s67, 37 [#allocation0]
        %v799 = vld [vmem:[%s798] ss:$0 sm:$0xff]
        %vm800 = vcmask 400384
        %v801 = vsel %vm800, %v799, 0.0
        %v802 = vlaneseq
        %v803 = vand.u32 %v802, 127
        %vm804 = vcmp.eq.s32.totalorder %v803, 37
        %v805 = vmul.f32 %v801, %v781
        %806 = vadd.xlane.f32.xlu0 %v805
        %v807 = vpop.xlane.xlu0 %806
        %v808 = vsel %vm804, %v807, %v781
        %v809 = vmul.f32 %v801, %v785
        %810 = vadd.xlane.f32.xlu0 %v809
        %v811 = vpop.xlane.xlu0 %810
        %v812 = vsel %vm804, %v811, %v785
        %v813 = vmul.f32 %v801, %v789
        %814 = vadd.xlane.f32.xlu0 %v813
        %v815 = vpop.xlane.xlu0 %814
        %v816 = vsel %vm804, %v815, %v789
        %v817 = vmul.f32 %v801, %v793
        %818 = vadd.xlane.f32.xlu0 %v817
        %v819 = vpop.xlane.xlu0 %818
        %v820 = vsel %vm804, %v819, %v793
        %v821 = vmul.f32 %v801, %v797
        %822 = vadd.xlane.f32.xlu0 %v821
        %v823 = vpop.xlane.xlu0 %822
        %v824 = vsel %vm804, %v823, %v797
        %s825 = scalar_lea.vmem %s67, 38 [#allocation0]
        %v826 = vld [vmem:[%s825] ss:$0 sm:$0xff]
        %vm827 = vcmask 400384
        %v828 = vsel %vm827, %v826, 0.0
        %v829 = vlaneseq
        %v830 = vand.u32 %v829, 127
        %vm831 = vcmp.eq.s32.totalorder %v830, 38
        %v832 = vmul.f32 %v828, %v808
        %833 = vadd.xlane.f32.xlu0 %v832
        %v834 = vpop.xlane.xlu0 %833
        %v835 = vsel %vm831, %v834, %v808
        %v836 = vmul.f32 %v828, %v812
        %837 = vadd.xlane.f32.xlu0 %v836
        %v838 = vpop.xlane.xlu0 %837
        %v839 = vsel %vm831, %v838, %v812
        %v840 = vmul.f32 %v828, %v816
        %841 = vadd.xlane.f32.xlu0 %v840
        %v842 = vpop.xlane.xlu0 %841
        %v843 = vsel %vm831, %v842, %v816
        %v844 = vmul.f32 %v828, %v820
        %845 = vadd.xlane.f32.xlu0 %v844
        %v846 = vpop.xlane.xlu0 %845
        %v847 = vsel %vm831, %v846, %v820
        %v848 = vmul.f32 %v828, %v824
        %849 = vadd.xlane.f32.xlu0 %v848
        %v850 = vpop.xlane.xlu0 %849
        %v851 = vsel %vm831, %v850, %v824
        %s852 = scalar_lea.vmem %s67, 39 [#allocation0]
        %v853 = vld [vmem:[%s852] ss:$0 sm:$0xff]
        %vm854 = vcmask 400384
        %v855 = vsel %vm854, %v853, 0.0
        %v856 = vlaneseq
        %v857 = vand.u32 %v856, 127
        %vm858 = vcmp.eq.s32.totalorder %v857, 39
        %v859 = vmul.f32 %v855, %v835
        %860 = vadd.xlane.f32.xlu0 %v859
        %v861 = vpop.xlane.xlu0 %860
        %v862 = vsel %vm858, %v861, %v835
        %v863 = vmul.f32 %v855, %v839
        %864 = vadd.xlane.f32.xlu0 %v863
        %v865 = vpop.xlane.xlu0 %864
        %v866 = vsel %vm858, %v865, %v839
        %v867 = vmul.f32 %v855, %v843
        %868 = vadd.xlane.f32.xlu0 %v867
        %v869 = vpop.xlane.xlu0 %868
        %v870 = vsel %vm858, %v869, %v843
        %v871 = vmul.f32 %v855, %v847
        %872 = vadd.xlane.f32.xlu0 %v871
        %v873 = vpop.xlane.xlu0 %872
        %v874 = vsel %vm858, %v873, %v847
        %v875 = vmul.f32 %v855, %v851
        %876 = vadd.xlane.f32.xlu0 %v875
        %v877 = vpop.xlane.xlu0 %876
        %v878 = vsel %vm858, %v877, %v851
        %s879 = scalar_lea.vmem %s67, 40 [#allocation0]
        %v880 = vld [vmem:[%s879] ss:$0 sm:$0xff]
        %vm881 = vcmask 400384
        %v882 = vsel %vm881, %v880, 0.0
        %v883 = vlaneseq
        %v884 = vand.u32 %v883, 127
        %vm885 = vcmp.eq.s32.totalorder %v884, 40
        %v886 = vmul.f32 %v882, %v862
        %887 = vadd.xlane.f32.xlu0 %v886
        %v888 = vpop.xlane.xlu0 %887
        %v889 = vsel %vm885, %v888, %v862
        %v890 = vmul.f32 %v882, %v866
        %891 = vadd.xlane.f32.xlu0 %v890
        %v892 = vpop.xlane.xlu0 %891
        %v893 = vsel %vm885, %v892, %v866
        %v894 = vmul.f32 %v882, %v870
        %895 = vadd.xlane.f32.xlu0 %v894
        %v896 = vpop.xlane.xlu0 %895
        %v897 = vsel %vm885, %v896, %v870
        %v898 = vmul.f32 %v882, %v874
        %899 = vadd.xlane.f32.xlu0 %v898
        %v900 = vpop.xlane.xlu0 %899
        %v901 = vsel %vm885, %v900, %v874
        %v902 = vmul.f32 %v882, %v878
        %903 = vadd.xlane.f32.xlu0 %v902
        %v904 = vpop.xlane.xlu0 %903
        %v905 = vsel %vm885, %v904, %v878
        %v906 = vmul.f32 %v882, %v122
        %907 = vadd.xlane.f32.xlu0 %v906
        %v908 = vpop.xlane.xlu0 %907
        %v909 = vsel %vm885, %v908, %v122
        %s910 = scalar_lea.vmem %s67, 41 [#allocation0]
        %v911 = vld [vmem:[%s910] ss:$0 sm:$0xff]
        %vm912 = vcmask 400384
        %v913 = vsel %vm912, %v911, 0.0
        %v914 = vlaneseq
        %v915 = vand.u32 %v914, 127
        %vm916 = vcmp.eq.s32.totalorder %v915, 41
        %v917 = vmul.f32 %v913, %v889
        %918 = vadd.xlane.f32.xlu0 %v917
        %v919 = vpop.xlane.xlu0 %918
        %v920 = vsel %vm916, %v919, %v889
        %v921 = vmul.f32 %v913, %v893
        %922 = vadd.xlane.f32.xlu0 %v921
        %v923 = vpop.xlane.xlu0 %922
        %v924 = vsel %vm916, %v923, %v893
        %v925 = vmul.f32 %v913, %v897
        %926 = vadd.xlane.f32.xlu0 %v925
        %v927 = vpop.xlane.xlu0 %926
        %v928 = vsel %vm916, %v927, %v897
        %v929 = vmul.f32 %v913, %v901
        %930 = vadd.xlane.f32.xlu0 %v929
        %v931 = vpop.xlane.xlu0 %930
        %v932 = vsel %vm916, %v931, %v901
        %v933 = vmul.f32 %v913, %v905
        %934 = vadd.xlane.f32.xlu0 %v933
        %v935 = vpop.xlane.xlu0 %934
        %v936 = vsel %vm916, %v935, %v905
        %v937 = vmul.f32 %v913, %v909
        %938 = vadd.xlane.f32.xlu0 %v937
        %v939 = vpop.xlane.xlu0 %938
        %v940 = vsel %vm916, %v939, %v909
        %s941 = scalar_lea.vmem %s67, 42 [#allocation0]
        %v942 = vld [vmem:[%s941] ss:$0 sm:$0xff]
        %vm943 = vcmask 400384
        %v944 = vsel %vm943, %v942, 0.0
        %v945 = vlaneseq
        %v946 = vand.u32 %v945, 127
        %vm947 = vcmp.eq.s32.totalorder %v946, 42
        %v948 = vmul.f32 %v944, %v920
        %949 = vadd.xlane.f32.xlu0 %v948
        %v950 = vpop.xlane.xlu0 %949
        %v951 = vsel %vm947, %v950, %v920
        %v952 = vmul.f32 %v944, %v924
        %953 = vadd.xlane.f32.xlu0 %v952
        %v954 = vpop.xlane.xlu0 %953
        %v955 = vsel %vm947, %v954, %v924
        %v956 = vmul.f32 %v944, %v928
        %957 = vadd.xlane.f32.xlu0 %v956
        %v958 = vpop.xlane.xlu0 %957
        %v959 = vsel %vm947, %v958, %v928
        %v960 = vmul.f32 %v944, %v932
        %961 = vadd.xlane.f32.xlu0 %v960
        %v962 = vpop.xlane.xlu0 %961
        %v963 = vsel %vm947, %v962, %v932
        %v964 = vmul.f32 %v944, %v936
        %965 = vadd.xlane.f32.xlu0 %v964
        %v966 = vpop.xlane.xlu0 %965
        %v967 = vsel %vm947, %v966, %v936
        %v968 = vmul.f32 %v944, %v940
        %969 = vadd.xlane.f32.xlu0 %v968
        %v970 = vpop.xlane.xlu0 %969
        %v971 = vsel %vm947, %v970, %v940
        %s972 = scalar_lea.vmem %s67, 43 [#allocation0]
        %v973 = vld [vmem:[%s972] ss:$0 sm:$0xff]
        %vm974 = vcmask 400384
        %v975 = vsel %vm974, %v973, 0.0
        %v976 = vlaneseq
        %v977 = vand.u32 %v976, 127
        %vm978 = vcmp.eq.s32.totalorder %v977, 43
        %v979 = vmul.f32 %v975, %v951
        %980 = vadd.xlane.f32.xlu0 %v979
        %v981 = vpop.xlane.xlu0 %980
        %v982 = vsel %vm978, %v981, %v951
        %v983 = vmul.f32 %v975, %v955
        %984 = vadd.xlane.f32.xlu0 %v983
        %v985 = vpop.xlane.xlu0 %984
        %v986 = vsel %vm978, %v985, %v955
        %v987 = vmul.f32 %v975, %v959
        %988 = vadd.xlane.f32.xlu0 %v987
        %v989 = vpop.xlane.xlu0 %988
        %v990 = vsel %vm978, %v989, %v959
        %v991 = vmul.f32 %v975, %v963
        %992 = vadd.xlane.f32.xlu0 %v991
        %v993 = vpop.xlane.xlu0 %992
        %v994 = vsel %vm978, %v993, %v963
        %v995 = vmul.f32 %v975, %v967
        %996 = vadd.xlane.f32.xlu0 %v995
        %v997 = vpop.xlane.xlu0 %996
        %v998 = vsel %vm978, %v997, %v967
        %v999 = vmul.f32 %v975, %v971
        %1000 = vadd.xlane.f32.xlu0 %v999
        %v1001 = vpop.xlane.xlu0 %1000
        %v1002 = vsel %vm978, %v1001, %v971
        %s1003 = scalar_lea.vmem %s67, 44 [#allocation0]
        %v1004 = vld [vmem:[%s1003] ss:$0 sm:$0xff]
        %vm1005 = vcmask 400384
        %v1006 = vsel %vm1005, %v1004, 0.0
        %v1007 = vlaneseq
        %v1008 = vand.u32 %v1007, 127
        %vm1009 = vcmp.eq.s32.totalorder %v1008, 44
        %v1010 = vmul.f32 %v1006, %v982
        %1011 = vadd.xlane.f32.xlu0 %v1010
        %v1012 = vpop.xlane.xlu0 %1011
        %v1013 = vsel %vm1009, %v1012, %v982
        %v1014 = vmul.f32 %v1006, %v986
        %1015 = vadd.xlane.f32.xlu0 %v1014
        %v1016 = vpop.xlane.xlu0 %1015
        %v1017 = vsel %vm1009, %v1016, %v986
        %v1018 = vmul.f32 %v1006, %v990
        %1019 = vadd.xlane.f32.xlu0 %v1018
        %v1020 = vpop.xlane.xlu0 %1019
        %v1021 = vsel %vm1009, %v1020, %v990
        %v1022 = vmul.f32 %v1006, %v994
        %1023 = vadd.xlane.f32.xlu0 %v1022
        %v1024 = vpop.xlane.xlu0 %1023
        %v1025 = vsel %vm1009, %v1024, %v994
        %v1026 = vmul.f32 %v1006, %v998
        %1027 = vadd.xlane.f32.xlu0 %v1026
        %v1028 = vpop.xlane.xlu0 %1027
        %v1029 = vsel %vm1009, %v1028, %v998
        %v1030 = vmul.f32 %v1006, %v1002
        %1031 = vadd.xlane.f32.xlu0 %v1030
        %v1032 = vpop.xlane.xlu0 %1031
        %v1033 = vsel %vm1009, %v1032, %v1002
        %s1034 = scalar_lea.vmem %s67, 45 [#allocation0]
        %v1035 = vld [vmem:[%s1034] ss:$0 sm:$0xff]
        %vm1036 = vcmask 400384
        %v1037 = vsel %vm1036, %v1035, 0.0
        %v1038 = vlaneseq
        %v1039 = vand.u32 %v1038, 127
        %vm1040 = vcmp.eq.s32.totalorder %v1039, 45
        %v1041 = vmul.f32 %v1037, %v1013
        %1042 = vadd.xlane.f32.xlu0 %v1041
        %v1043 = vpop.xlane.xlu0 %1042
        %v1044 = vsel %vm1040, %v1043, %v1013
        %v1045 = vmul.f32 %v1037, %v1017
        %1046 = vadd.xlane.f32.xlu0 %v1045
        %v1047 = vpop.xlane.xlu0 %1046
        %v1048 = vsel %vm1040, %v1047, %v1017
        %v1049 = vmul.f32 %v1037, %v1021
        %1050 = vadd.xlane.f32.xlu0 %v1049
        %v1051 = vpop.xlane.xlu0 %1050
        %v1052 = vsel %vm1040, %v1051, %v1021
        %v1053 = vmul.f32 %v1037, %v1025
        %1054 = vadd.xlane.f32.xlu0 %v1053
        %v1055 = vpop.xlane.xlu0 %1054
        %v1056 = vsel %vm1040, %v1055, %v1025
        %v1057 = vmul.f32 %v1037, %v1029
        %1058 = vadd.xlane.f32.xlu0 %v1057
        %v1059 = vpop.xlane.xlu0 %1058
        %v1060 = vsel %vm1040, %v1059, %v1029
        %v1061 = vmul.f32 %v1037, %v1033
        %1062 = vadd.xlane.f32.xlu0 %v1061
        %v1063 = vpop.xlane.xlu0 %1062
        %v1064 = vsel %vm1040, %v1063, %v1033
        %s1065 = scalar_lea.vmem %s67, 46 [#allocation0]
        %v1066 = vld [vmem:[%s1065] ss:$0 sm:$0xff]
        %vm1067 = vcmask 400384
        %v1068 = vsel %vm1067, %v1066, 0.0
        %v1069 = vlaneseq
        %v1070 = vand.u32 %v1069, 127
        %vm1071 = vcmp.eq.s32.totalorder %v1070, 46
        %v1072 = vmul.f32 %v1068, %v1044
        %1073 = vadd.xlane.f32.xlu0 %v1072
        %v1074 = vpop.xlane.xlu0 %1073
        %v1075 = vsel %vm1071, %v1074, %v1044
        %v1076 = vmul.f32 %v1068, %v1048
        %1077 = vadd.xlane.f32.xlu0 %v1076
        %v1078 = vpop.xlane.xlu0 %1077
        %v1079 = vsel %vm1071, %v1078, %v1048
        %v1080 = vmul.f32 %v1068, %v1052
        %1081 = vadd.xlane.f32.xlu0 %v1080
        %v1082 = vpop.xlane.xlu0 %1081
        %v1083 = vsel %vm1071, %v1082, %v1052
        %v1084 = vmul.f32 %v1068, %v1056
        %1085 = vadd.xlane.f32.xlu0 %v1084
        %v1086 = vpop.xlane.xlu0 %1085
        %v1087 = vsel %vm1071, %v1086, %v1056
        %v1088 = vmul.f32 %v1068, %v1060
        %1089 = vadd.xlane.f32.xlu0 %v1088
        %v1090 = vpop.xlane.xlu0 %1089
        %v1091 = vsel %vm1071, %v1090, %v1060
        %v1092 = vmul.f32 %v1068, %v1064
        %1093 = vadd.xlane.f32.xlu0 %v1092
        %v1094 = vpop.xlane.xlu0 %1093
        %v1095 = vsel %vm1071, %v1094, %v1064
        %s1096 = scalar_lea.vmem %s67, 47 [#allocation0]
        %v1097 = vld [vmem:[%s1096] ss:$0 sm:$0xff]
        %vm1098 = vcmask 400384
        %v1099 = vsel %vm1098, %v1097, 0.0
        %v1100 = vlaneseq
        %v1101 = vand.u32 %v1100, 127
        %vm1102 = vcmp.eq.s32.totalorder %v1101, 47
        %v1103 = vmul.f32 %v1099, %v1075
        %1104 = vadd.xlane.f32.xlu0 %v1103
        %v1105 = vpop.xlane.xlu0 %1104
        %v1106 = vsel %vm1102, %v1105, %v1075
        %v1107 = vmul.f32 %v1099, %v1079
        %1108 = vadd.xlane.f32.xlu0 %v1107
        %v1109 = vpop.xlane.xlu0 %1108
        %v1110 = vsel %vm1102, %v1109, %v1079
        %v1111 = vmul.f32 %v1099, %v1083
        %1112 = vadd.xlane.f32.xlu0 %v1111
        %v1113 = vpop.xlane.xlu0 %1112
        %v1114 = vsel %vm1102, %v1113, %v1083
        %v1115 = vmul.f32 %v1099, %v1087
        %1116 = vadd.xlane.f32.xlu0 %v1115
        %v1117 = vpop.xlane.xlu0 %1116
        %v1118 = vsel %vm1102, %v1117, %v1087
        %v1119 = vmul.f32 %v1099, %v1091
        %1120 = vadd.xlane.f32.xlu0 %v1119
        %v1121 = vpop.xlane.xlu0 %1120
        %v1122 = vsel %vm1102, %v1121, %v1091
        %v1123 = vmul.f32 %v1099, %v1095
        %1124 = vadd.xlane.f32.xlu0 %v1123
        %v1125 = vpop.xlane.xlu0 %1124
        %v1126 = vsel %vm1102, %v1125, %v1095
        %s1127 = scalar_lea.vmem %s67, 48 [#allocation0]
        %v1128 = vld [vmem:[%s1127] ss:$0 sm:$0xff]
        %vm1129 = vcmask 400384
        %v1130 = vsel %vm1129, %v1128, 0.0
        %v1131 = vlaneseq
        %v1132 = vand.u32 %v1131, 127
        %vm1133 = vcmp.eq.s32.totalorder %v1132, 48
        %v1134 = vmul.f32 %v1130, %v1106
        %1135 = vadd.xlane.f32.xlu0 %v1134
        %v1136 = vpop.xlane.xlu0 %1135
        %v1137 = vsel %vm1133, %v1136, %v1106
        %v1138 = vmul.f32 %v1130, %v1110
        %1139 = vadd.xlane.f32.xlu0 %v1138
        %v1140 = vpop.xlane.xlu0 %1139
        %v1141 = vsel %vm1133, %v1140, %v1110
        %v1142 = vmul.f32 %v1130, %v1114
        %1143 = vadd.xlane.f32.xlu0 %v1142
        %v1144 = vpop.xlane.xlu0 %1143
        %v1145 = vsel %vm1133, %v1144, %v1114
        %v1146 = vmul.f32 %v1130, %v1118
        %1147 = vadd.xlane.f32.xlu0 %v1146
        %v1148 = vpop.xlane.xlu0 %1147
        %v1149 = vsel %vm1133, %v1148, %v1118
        %v1150 = vmul.f32 %v1130, %v1122
        %1151 = vadd.xlane.f32.xlu0 %v1150
        %v1152 = vpop.xlane.xlu0 %1151
        %v1153 = vsel %vm1133, %v1152, %v1122
        %v1154 = vmul.f32 %v1130, %v1126
        %1155 = vadd.xlane.f32.xlu0 %v1154
        %v1156 = vpop.xlane.xlu0 %1155
        %v1157 = vsel %vm1133, %v1156, %v1126
        %v1158 = vmul.f32 %v1130, %v129
        %1159 = vadd.xlane.f32.xlu0 %v1158
        %v1160 = vpop.xlane.xlu0 %1159
        %v1161 = vsel %vm1133, %v1160, %v129
        %1162 = vst [vmem:[%s75] sm:$0xff] %v1137
        %s1163 = scalar_lea.vmem %s75, 8 [#allocation1]
        %1164 = vst [vmem:[%s1163] sm:$0xff] %v1141
        %s1165 = scalar_lea.vmem %s75, 16 [#allocation1]
        %1166 = vst [vmem:[%s1165] sm:$0xff] %v1145
        %s1167 = scalar_lea.vmem %s75, 24 [#allocation1]
        %1168 = vst [vmem:[%s1167] sm:$0xff] %v1149
        %s1169 = scalar_lea.vmem %s75, 32 [#allocation1]
        %1170 = vst [vmem:[%s1169] sm:$0xff] %v1153
        %s1171 = scalar_lea.vmem %s75, 40 [#allocation1]
        %1172 = vst [vmem:[%s1171] sm:$0xff] %v1157
        %s1173 = scalar_lea.vmem %s75, 48 [#allocation1]
        %1174 = vst [vmem:[%s1173] sm:$0xff] %v1161
        %s1175 = sand.u32 %s8, 1
        %s1176 = sand.u32 %s8, 1
        %s1177 = smul.addr %s1176, 56
        %s1178 = scalar_lea.vmem [#allocation1], %s1177
        %s1179 = smul.addr %s8, 56
        %s1180 = scalar_lea.vmem %s1, %s1179
        // Predicated region
        $region40: #{custom-call.8} parent=38 // pred_check
          _
        $region41: #{custom-call.8} parent=38 // pred_check_branch
          %1182 = sbr.rel (0) target = $region43
        $region42: #{custom-call.8} parent=38 // pred_region
          // Predicated region
          $region44: #{custom-call.8} parent=42 // pred_check
            _
          $region45: #{custom-call.8} parent=42 // pred_check_branch
            %1184 = sbr.rel (0) target = $region47
          $region46: #{custom-call.8} parent=42 // pred_region
            loop: start=0, step=1, limit=1
            $region48: #{custom-call.8} parent=46 // loop_pre_header
              _
            $region49: #{custom-call.8} parent=46 // loop_header
              %s1186 = sphi 0, %s1190
              %p1187 = scmp.ge.s32.totalorder %s1186, 1
              %s1191 = sphi %s1178, %s1178
              %s1192 = sphi %s1180, %s1180
            $region50: #{custom-call.8} parent=46 // loop_header_branch
              %1189 = sbr.rel (%p1187) target = $region54
            $region51: #{custom-call.8} parent=46 // loop_body
              %v1193 = vld [vmem:[%s1191] sm:$0xff]
              %1194 = vst [vmem:[%s1192] sm:$0xff] %v1193
              %v1195 = vld [vmem:[%s1191 + $0x8] sm:$0xff]
              %1196 = vst [vmem:[%s1192 + $0x8] sm:$0xff] %v1195
              %v1197 = vld [vmem:[%s1191 + $0x10] sm:$0xff]
              %1198 = vst [vmem:[%s1192 + $0x10] sm:$0xff] %v1197
              %v1199 = vld [vmem:[%s1191 + $0x18] sm:$0xff]
              %1200 = vst [vmem:[%s1192 + $0x18] sm:$0xff] %v1199
              %v1201 = vld [vmem:[%s1191 + $0x20] sm:$0xff]
              %1202 = vst [vmem:[%s1192 + $0x20] sm:$0xff] %v1201
              %v1203 = vld [vmem:[%s1191 + $0x28] sm:$0xff]
              %1204 = vst [vmem:[%s1192 + $0x28] sm:$0xff] %v1203
              %v1205 = vld [vmem:[%s1191 + $0x30] sm:$0xff]
              %1206 = vst [vmem:[%s1192 + $0x30] sm:$0xff] %v1205
            $region52: #{custom-call.8} parent=46 // loop_footer
              %s1190 = sadd.s32 1, %s1186
            $region53: #{custom-call.8} parent=46 // loop_footer_branch
              %1185 = sbr.rel target = $region49
            $region54: #{custom-call.8} parent=46 // loop_exit
              _
          $region47: #{custom-call.8} parent=42 // pred_fallthru
            _
          // Predicated region
          $region55: #{custom-call.8} parent=42 // pred_check
            _
          $region56: #{custom-call.8} parent=42 // pred_check_branch
            %1208 = sbr.rel target = $region58
          $region57: #{custom-call.8} parent=42 // pred_region
            _
          $region58: #{custom-call.8} parent=42 // pred_fallthru
            _
        $region43: #{custom-call.8} parent=38 // pred_fallthru
          _
        %1209 = vnop
      $region39: #{custom-call.8} parent=5 // pred_fallthru
        _
      %p1210 = scmp.le.s32.totalorder 2, %s3
      // Predicated region
      $region59: #{custom-call.8} parent=5 // pred_check
        %p1211 = pneg %p1210
      $region60: #{custom-call.8} parent=5 // pred_check_branch
        %1213 = sbr.rel (%p1211) target = $region62
      $region61: #{custom-call.8} parent=5 // pred_region
        %s1214 = ssub.s32 %s3, 2
        %s1215 = sand.u32 %s9, 1
        %s1216 = sand.u32 %s9, 1
        %s1217 = smul.addr %s1216, 56
        %s1218 = scalar_lea.vmem [#allocation1], %s1217
      $region62: #{custom-call.8} parent=5 // pred_fallthru
        _
    $region6: #{custom-call.8} parent=1 // loop_footer
      %s7 = sadd.s32 1, %s3
    $region7: #{custom-call.8} parent=1 // loop_footer_branch
      %2 = sbr.rel target = $region3
    $region8: #{custom-call.8} parent=1 // loop_exit
      _

// kernel: comp_eig_decomp_batch.2
$region0: #{comp_eig_decomp_batch.2}
  #allocation0 [shape = 'u32[]', space=smem, size = 0x4, offset = 0x4, fixed_abs, tag = 'smem constant byte address 0x4 - core index']
  #allocation1 [shape = 'u32[144,128]{1,0:T(1,128)}', space=vmem, size = 0x12000, scoped, tag = 'internal scratch']
  #allocation2 [shape = 'f32[256,256]{1,0:T(8,128)}', space=vmem, size = 0x40000, scoped, tag = 'scratch operand']
  %s0 = inlined_call_operand.hbm [shape: f32[2,256,256], index: 0, kind: input, shape index: {}]
  %s1 = inlined_call_operand.vmem [shape: f32[2,256,128], index: 1, kind: input, shape index: {}]
  %s2 = inlined_call_operand.vmem [shape: f32[2,256,128], index: 2, kind: output, shape index: {}]
  %s3 = sld [smem:[#allocation0]]
  $region52: #{comp_eig_decomp_batch.2} parent=0
    _
  %s5 = ssub.s32 1, %s3
  %s6 = scalar_select 0, %s5, %s3
  $region1: #{comp_eig_decomp_batch.2} parent=0
    #allocation3 [shape = 'u8[524288]{0}', space=vmem, size = 0x80000, scoped, tag = 'input window, operand 0']
    #allocation4 [shape = 's32[2]{0}', space=sflag, size = 0x8, scoped, tag = 'scoped memory for comp_eig_decomp_batch.2']
    %7 = vsyncpa [#allocation4], 0
    %s8 = scalar_lea.sflag [#allocation4], 1
    %9 = vsyncpa %s8, 0
    loop: start=0, step=1, limit=4
    $region2: #{comp_eig_decomp_batch.2} parent=1 // loop_pre_header
      _
    $region3: #{comp_eig_decomp_batch.2} parent=1 // loop_header
      %s11 = sphi 0, %s15
      %p12 = scmp.ge.s32.totalorder %s11, 4
      %s21 = sphi 0, %s23
      %s24 = sphi 0, %s21
      %s25 = sphi 0, %s24
      %s41 = sphi 0, %s25
      %s47 = sphi 0, %s49
      %s50 = sphi 0, %s47
      %s51 = sphi 0, %s50
      %s67 = sphi 0, %s51
      %s73 = sphi 0, %s75
      %s76 = sphi 0, %s73
      %s77 = sphi 0, %s76
      %s93 = sphi 0, %s77
    $region4: #{comp_eig_decomp_batch.2} parent=1 // loop_header_branch
      %14 = sbr.rel (%p12) target = $region8
    $region5: #{comp_eig_decomp_batch.2} parent=1 // loop_body
      %s16 = ssub.s32 %s11, 1
      %s17 = ssub.s32 %s11, 2
      %s18 = sadd.s32 %s11, 1
      %s19 = ssub.s32 %s11, %s18
      %p20 = scmp.eq.s32.totalorder %s19, 0
      %s22 = sadd.s32 %s21, 1
      %s23 = scalar_select %p20, %s21, %s22
      %p26 = pneg %p20
      %p27 = scmp.eq.s32.totalorder %s11, 1
      %p28 = por %p26, %p27
      %p29 = scmp.ne.s32.totalorder %s21, %s24
      %p30 = scmp.eq.s32.totalorder %s11, 0
      %p31 = por %p29, %p30
      %p32 = scmp.ne.s32.totalorder %s21, %s24
      %p33 = scmp.eq.s32.totalorder %s16, 1
      %p34 = por %p32, %p33
      %p35 = scmp.ne.s32.totalorder %s24, %s25
      %p36 = scmp.eq.s32.totalorder %s16, 0
      %p37 = por %p35, %p36
      %p38 = scmp.ne.s32.totalorder %s24, %s25
      %p39 = scmp.eq.s32.totalorder %s17, 1
      %p40 = por %p38, %p39
      %p42 = scmp.ne.s32.totalorder %s25, %s41
      %p43 = scmp.eq.s32.totalorder %s17, 0
      %p44 = por %p42, %p43
      %s45 = ssub.s32 %s11, %s18
      %p46 = scmp.eq.s32.totalorder %s45, 0
      %s48 = sadd.s32 %s47, 1
      %s49 = scalar_select %p46, %s47, %s48
      %p52 = pneg %p46
      %p53 = scmp.eq.s32.totalorder %s11, 1
      %p54 = por %p52, %p53
      %p55 = scmp.ne.s32.totalorder %s47, %s50
      %p56 = scmp.eq.s32.totalorder %s11, 0
      %p57 = por %p55, %p56
      %p58 = scmp.ne.s32.totalorder %s47, %s50
      %p59 = scmp.eq.s32.totalorder %s16, 1
      %p60 = por %p58, %p59
      %p61 = scmp.ne.s32.totalorder %s50, %s51
      %p62 = scmp.eq.s32.totalorder %s16, 0
      %p63 = por %p61, %p62
      %p64 = scmp.ne.s32.totalorder %s50, %s51
      %p65 = scmp.eq.s32.totalorder %s17, 1
      %p66 = por %p64, %p65
      %p68 = scmp.ne.s32.totalorder %s51, %s67
      %p69 = scmp.eq.s32.totalorder %s17, 0
      %p70 = por %p68, %p69
      %s71 = ssub.s32 %s11, %s18
      %p72 = scmp.eq.s32.totalorder %s71, 0
      %s74 = sadd.s32 %s73, 1
      %s75 = scalar_select %p72, %s73, %s74
      %p78 = pneg %p72
      %p79 = scmp.eq.s32.totalorder %s11, 1
      %p80 = por %p78, %p79
      %p81 = scmp.ne.s32.totalorder %s73, %s76
      %p82 = scmp.eq.s32.totalorder %s11, 0
      %p83 = por %p81, %p82
      %p84 = scmp.ne.s32.totalorder %s73, %s76
      %p85 = scmp.eq.s32.totalorder %s16, 1
      %p86 = por %p84, %p85
      %p87 = scmp.ne.s32.totalorder %s76, %s77
      %p88 = scmp.eq.s32.totalorder %s16, 0
      %p89 = por %p87, %p88
      %p90 = scmp.ne.s32.totalorder %s76, %s77
      %p91 = scmp.eq.s32.totalorder %s17, 1
      %p92 = por %p90, %p91
      %p94 = scmp.ne.s32.totalorder %s77, %s93
      %p95 = scmp.eq.s32.totalorder %s17, 0
      %p96 = por %p94, %p95
      %p97 = scmp.le.s32.totalorder 1, %s11
      %p98 = scmp.lt.s32.totalorder %s11, 3
      %p99 = pnand %p97, %p98
      %p100 = pneg %p99
      // Predicated region
      $region9: #{comp_eig_decomp_batch.2} parent=5 // pred_check
        _
      $region10: #{comp_eig_decomp_batch.2} parent=5 // pred_check_branch
        %102 = sbr.rel (%p99) target = $region12
      $region11: #{comp_eig_decomp_batch.2} parent=5 // pred_region
        %s103 = ssub.s32 %s11, 1
      $region12: #{comp_eig_decomp_batch.2} parent=5 // pred_fallthru
        _
      %p104 = scmp.lt.s32.totalorder %s11, 2
      // Predicated region
      $region13: #{comp_eig_decomp_batch.2} parent=5 // pred_check
        %p105 = pneg %p104
      $region14: #{comp_eig_decomp_batch.2} parent=5 // pred_check_branch
        %107 = sbr.rel (%p105) target = $region16
      $region15: #{comp_eig_decomp_batch.2} parent=5 // pred_region
        // Predicated region
        $region17: #{comp_eig_decomp_batch.2} parent=15 // pred_check
          %p108 = pneg %p31
        $region18: #{comp_eig_decomp_batch.2} parent=15 // pred_check_branch
          %110 = sbr.rel (%p108) target = $region20
        $region19: #{comp_eig_decomp_batch.2} parent=15 // pred_region
          %s111 = sand.u32 %s21, 1
          %s112 = scalar_lea.sflag [#allocation4], %s111
          %s113 = sand.u32 %s21, 1
          %s114 = smul.addr %s113, 512
          %s115 = scalar_lea.vmem [#allocation3], %s114
          %s117 = ssub.s32 8192, 8192
          %118 = vsyncadd %s112, %s117
          %s119 = smul.addr %s11, 64
          %s120 = smul.addr %s119, 128
          %s121 = scalar_lea.hbm %s0, %s120
          %s122 = sshll.u32 %s115, 4
          %s123 = int_to_ptr.vmem [resolvable:$true] %s122
          %128 = dma.hbm_to_vmem [thread:$0]  %s121, 8192, %s123, %s112, 256, 256, 16
        $region20: #{comp_eig_decomp_batch.2} parent=15 // pred_fallthru
          _
        // Predicated region
        $region21: #{comp_eig_decomp_batch.2} parent=15 // pred_check
          %p129 = pneg %p57
        $region22: #{comp_eig_decomp_batch.2} parent=15 // pred_check_branch
          %131 = sbr.rel (%p129) target = $region24
        $region23: #{comp_eig_decomp_batch.2} parent=15 // pred_region
          %p132 = scmp.lt.s32.totalorder %s11, 1
          %s133 = scalar_select %p132, %s11, 1
          %s134 = smul.addr %s133, 32
          %s135 = smul.addr %s134, 8
          %s136 = scalar_lea.vmem %s1, %s135
        $region24: #{comp_eig_decomp_batch.2} parent=15 // pred_fallthru
          _
      $region16: #{comp_eig_decomp_batch.2} parent=5 // pred_fallthru
        _
      %p137 = scmp.le.s32.totalorder 1, %s11
      %p138 = scmp.lt.s32.totalorder %s11, 3
      %p139 = pnand %p137, %p138
      %p140 = pneg %p139
      // Predicated region
      $region25: #{comp_eig_decomp_batch.2} parent=5 // pred_check
        _
      $region26: #{comp_eig_decomp_batch.2} parent=5 // pred_check_branch
        %142 = sbr.rel (%p139) target = $region28
      $region27: #{comp_eig_decomp_batch.2} parent=5 // pred_region
        %s143 = ssub.s32 %s11, 1
        %s144 = sand.u32 %s24, 1
        %s145 = scalar_lea.sflag [#allocation4], %s144
        %s146 = sand.u32 %s24, 1
        %s147 = smul.addr %s146, 512
        %s148 = scalar_lea.vmem [#allocation3], %s147
        // Predicated region
        $region29: #{comp_eig_decomp_batch.2} parent=27 // pred_check
          %p149 = pneg %p37
        $region30: #{comp_eig_decomp_batch.2} parent=27 // pred_check_branch
          %151 = sbr.rel (%p149) target = $region32
        $region31: #{comp_eig_decomp_batch.2} parent=27 // pred_region
          %152 = dma.done %s145, 8192
        $region32: #{comp_eig_decomp_batch.2} parent=27 // pred_fallthru
          _
        %s153 = sand.u32 %s24, 1
        %s154 = scalar_lea.sflag [#allocation4], %s153
        %s155 = sand.u32 %s24, 1
        %s156 = smul.addr %s155, 512
        %s157 = scalar_lea.vmem [#allocation3], %s156
        %p158 = pneg %p37
        %p159 = pneg %p34
        %p160 = scmp.lt.s32.totalorder %s16, 1
        %s161 = scalar_select %p160, %s16, 1
        %s162 = smul.addr %s161, 32
        %s163 = smul.addr %s162, 8
        %s164 = scalar_lea.vmem %s1, %s163
        %p165 = pneg %p63
        %p166 = pneg %p60
        %p167 = pneg %p89
        %p168 = pneg %p86
        %p169 = scmp.lt.s32.totalorder %s16, 1
        %s170 = scalar_select %p169, %s16, 1
        %s171 = smul.addr %s170, 32
        %s172 = smul.addr %s171, 8
        %s173 = scalar_lea.vmem %s2, %s172
        %p174 = scmp.lt.s32.totalorder %s16, 1
        %s175 = scalar_select %p174, %s16, 1
        %s176 = smul.addr %s175, 32
        %s177 = smul.addr %s176, 8
        %s178 = scalar_lea.vmem %s1, %s177
        %p179 = scmp.lt.s32.totalorder %s16, 1
        %s180 = scalar_select %p179, %s16, 1
        %s181 = smul.addr %s180, 32
        %s182 = smul.addr %s181, 8
        %s183 = scalar_lea.vmem %s2, %s182
        %v184 = vld [vmem:[%s148] sm:$0xff]
        %v185 = vld [vmem:[%s148 + $0x8] sm:$0xff]
        %v186 = vld [vmem:[%s148 + $0x10] sm:$0xff]
        %v187 = vld [vmem:[%s148 + $0x18] sm:$0xff]
        %v188 = vld [vmem:[%s148 + $0x20] sm:$0xff]
        %v189 = vld [vmem:[%s148 + $0x28] sm:$0xff]
        %v190 = vld [vmem:[%s148 + $0x30] sm:$0xff]
        %v191 = vld [vmem:[%s148 + $0x38] sm:$0xff]
        %v192 = vld [vmem:[%s148 + $0x40] sm:$0xff]
        %v193 = vld [vmem:[%s148 + $0x48] sm:$0xff]
        %v194 = vld [vmem:[%s148 + $0x50] sm:$0xff]
        %v195 = vld [vmem:[%s148 + $0x58] sm:$0xff]
        %v196 = vld [vmem:[%s148 + $0x60] sm:$0xff]
        %v197 = vld [vmem:[%s148 + $0x68] sm:$0xff]
        %v198 = vld [vmem:[%s148 + $0x70] sm:$0xff]
        %v199 = vld [vmem:[%s148 + $0x78] sm:$0xff]
        %v200 = vld [vmem:[%s148 + $0x80] sm:$0xff]
        %v201 = vld [vmem:[%s148 + $0x88] sm:$0xff]
        %v202 = vld [vmem:[%s148 + $0x90] sm:$0xff]
        %v203 = vld [vmem:[%s148 + $0x98] sm:$0xff]
        %v204 = vld [vmem:[%s148 + $0xa0] sm:$0xff]
        %v205 = vld [vmem:[%s148 + $0xa8] sm:$0xff]
        %v206 = vld [vmem:[%s148 + $0xb0] sm:$0xff]
        %v207 = vld [vmem:[%s148 + $0xb8] sm:$0xff]
        %v208 = vld [vmem:[%s148 + $0xc0] sm:$0xff]
        %v209 = vld [vmem:[%s148 + $0xc8] sm:$0xff]
        %v210 = vld [vmem:[%s148 + $0xd0] sm:$0xff]
        %v211 = vld [vmem:[%s148 + $0xd8] sm:$0xff]
        %v212 = vld [vmem:[%s148 + $0xe0] sm:$0xff]
        %v213 = vld [vmem:[%s148 + $0xe8] sm:$0xff]
        %v214 = vld [vmem:[%s148 + $0xf0] sm:$0xff]
        %v215 = vld [vmem:[%s148 + $0xf8] sm:$0xff]
        %v216 = vld [vmem:[%s148 + $0x100] sm:$0xff]
        %v217 = vld [vmem:[%s148 + $0x108] sm:$0xff]
        %v218 = vld [vmem:[%s148 + $0x110] sm:$0xff]
        %v219 = vld [vmem:[%s148 + $0x118] sm:$0xff]
        %v220 = vld [vmem:[%s148 + $0x120] sm:$0xff]
        %v221 = vld [vmem:[%s148 + $0x128] sm:$0xff]
        %v222 = vld [vmem:[%s148 + $0x130] sm:$0xff]
        %v223 = vld [vmem:[%s148 + $0x138] sm:$0xff]
        %v224 = vld [vmem:[%s148 + $0x140] sm:$0xff]
        %v225 = vld [vmem:[%s148 + $0x148] sm:$0xff]
        %v226 = vld [vmem:[%s148 + $0x150] sm:$0xff]
        %v227 = vld [vmem:[%s148 + $0x158] sm:$0xff]
        %v228 = vld [vmem:[%s148 + $0x160] sm:$0xff]
        %v229 = vld [vmem:[%s148 + $0x168] sm:$0xff]
        %v230 = vld [vmem:[%s148 + $0x170] sm:$0xff]
        %v231 = vld [vmem:[%s148 + $0x178] sm:$0xff]
        %v232 = vld [vmem:[%s148 + $0x180] sm:$0xff]
        %v233 = vld [vmem:[%s148 + $0x188] sm:$0xff]
        %v234 = vld [vmem:[%s148 + $0x190] sm:$0xff]
        %v235 = vld [vmem:[%s148 + $0x198] sm:$0xff]
        %v236 = vld [vmem:[%s148 + $0x1a0] sm:$0xff]
        %v237 = vld [vmem:[%s148 + $0x1a8] sm:$0xff]
        %v238 = vld [vmem:[%s148 + $0x1b0] sm:$0xff]
        %v239 = vld [vmem:[%s148 + $0x1b8] sm:$0xff]
        %v240 = vld [vmem:[%s148 + $0x1c0] sm:$0xff]
        %v241 = vld [vmem:[%s148 + $0x1c8] sm:$0xff]
        %v242 = vld [vmem:[%s148 + $0x1d0] sm:$0xff]
        %v243 = vld [vmem:[%s148 + $0x1d8] sm:$0xff]
        %v244 = vld [vmem:[%s148 + $0x1e0] sm:$0xff]
        %v245 = vld [vmem:[%s148 + $0x1e8] sm:$0xff]
        %v246 = vld [vmem:[%s148 + $0x1f0] sm:$0xff]
        %v247 = vld [vmem:[%s148 + $0x1f8] sm:$0xff]
        %248 = vmatprep.subr.mxu0 %v185
        %249 = vmatpush1.msra.mxu0 %v184
        %250 = vmatprep.subr.mxu0 %v187
        %251 = vmatpush1.msra.mxu0 %v186
        %252 = vmatprep.subr.mxu0 %v189
        %253 = vmatpush1.msra.mxu0 %v188
        %254 = vmatprep.subr.mxu0 %v191
        %255 = vmatpush1.msra.mxu0 %v190
        %256 = vmatprep.subr.mxu0 %v193
        %257 = vmatpush1.msra.mxu0 %v192
        %258 = vmatprep.subr.mxu0 %v195
        %259 = vmatpush1.msra.mxu0 %v194
        %260 = vmatprep.subr.mxu0 %v197
        %261 = vmatpush1.msra.mxu0 %v196
        %262 = vmatprep.subr.mxu0 %v199
        %263 = vmatpush1.msra.mxu0 %v198
        %264 = vmatprep.subr.mxu0 %v201
        %265 = vmatpush1.msra.mxu0 %v200
        %266 = vmatprep.subr.mxu0 %v203
        %267 = vmatpush1.msra.mxu0 %v202
        %268 = vmatprep.subr.mxu0 %v205
        %269 = vmatpush1.msra.mxu0 %v204
        %270 = vmatprep.subr.mxu0 %v207
        %271 = vmatpush1.msra.mxu0 %v206
        %272 = vmatprep.subr.mxu0 %v209
        %273 = vmatpush1.msra.mxu0 %v208
        %274 = vmatprep.subr.mxu0 %v211
        %275 = vmatpush1.msra.mxu0 %v210
        %276 = vmatprep.subr.mxu0 %v213
        %277 = vmatpush1.msra.mxu0 %v212
        %278 = vmatprep.subr.mxu0 %v215
        %279 = vmatpush1.msra.mxu0 %v214
        %280 = vmatprep.subr.mxu0 %v217
        %281 = vmatpush1.msra.mxu0 %v216
        %282 = vmatprep.subr.mxu0 %v219
        %283 = vmatpush1.msra.mxu0 %v218
        %284 = vmatprep.subr.mxu0 %v221
        %285 = vmatpush1.msra.mxu0 %v220
        %286 = vmatprep.subr.mxu0 %v223
        %287 = vmatpush1.msra.mxu0 %v222
        %288 = vmatprep.subr.mxu0 %v225
        %289 = vmatpush1.msra.mxu0 %v224
        %290 = vmatprep.subr.mxu0 %v227
        %291 = vmatpush1.msra.mxu0 %v226
        %292 = vmatprep.subr.mxu0 %v229
        %293 = vmatpush1.msra.mxu0 %v228
        %294 = vmatprep.subr.mxu0 %v231
        %295 = vmatpush1.msra.mxu0 %v230
        %296 = vmatprep.subr.mxu0 %v233
        %297 = vmatpush1.msra.mxu0 %v232
        %298 = vmatprep.subr.mxu0 %v235
        %299 = vmatpush1.msra.mxu0 %v234
        %300 = vmatprep.subr.mxu0 %v237
        %301 = vmatpush1.msra.mxu0 %v236
        %302 = vmatprep.subr.mxu0 %v239
        %303 = vmatpush1.msra.mxu0 %v238
        %304 = vmatprep.subr.mxu0 %v241
        %305 = vmatpush1.msra.mxu0 %v240
        %306 = vmatprep.subr.mxu0 %v243
        %307 = vmatpush1.msra.mxu0 %v242
        %308 = vmatprep.subr.mxu0 %v245
        %309 = vmatpush1.msra.mxu0 %v244
        %310 = vmatprep.subr.mxu0 %v247
        %311 = vmatpush1.msra.mxu0 %v246
        %312 = vmatprep.mubr.f32.mxu0 %v185
        %313 = vmatmul.mubr.f32.gmra.mrb[0].mxu0 %v184
        %v314 = vpop.f32.mrb[0].mxu0
        %v315 = vadd.f32 0.0, %v314
        %v316 = vpop.f32.mrb[0].mxu0
        %v317 = vadd.f32 0.0, %v316
        %318 = vmatprep.mubr.f32.mxu0 %v187
        %319 = vmatmul.mubr.f32.gmra.mrb[0].mxu0 %v186
        %v320 = vpop.f32.mrb[0].mxu0
        %v321 = vadd.f32 0.0, %v320
        %v322 = vpop.f32.mrb[0].mxu0
        %v323 = vadd.f32 0.0, %v322
        %324 = vmatprep.mubr.f32.mxu0 %v189
        %325 = vmatmul.mubr.f32.gmra.mrb[0].mxu0 %v188
        %v326 = vpop.f32.mrb[0].mxu0
        %v327 = vadd.f32 0.0, %v326
        %v328 = vpop.f32.mrb[0].mxu0
        %v329 = vadd.f32 0.0, %v328
        %330 = vmatprep.mubr.f32.mxu0 %v191
        %331 = vmatmul.mubr.f32.gmra.mrb[0].mxu0 %v190
        %v332 = vpop.f32.mrb[0].mxu0
        %v333 = vadd.f32 0.0, %v332
        %v334 = vpop.f32.mrb[0].mxu0
        %v335 = vadd.f32 0.0, %v334
        %336 = vmatprep.mubr.f32.mxu0 %v193
        %337 = vmatmul.mubr.f32.gmra.mrb[0].mxu0 %v192
        %v338 = vpop.f32.mrb[0].mxu0
        %v339 = vadd.f32 0.0, %v338
        %v340 = vpop.f32.mrb[0].mxu0
        %v341 = vadd.f32 0.0, %v340
        %342 = vmatprep.mubr.f32.mxu0 %v195
        %343 = vmatmul.mubr.f32.gmra.mrb[0].mxu0 %v194
        %v344 = vpop.f32.mrb[0].mxu0
        %v345 = vadd.f32 0.0, %v344
        %v346 = vpop.f32.mrb[0].mxu0
        %v347 = vadd.f32 0.0, %v346
        %348 = vmatprep.mubr.f32.mxu0 %v197
        %349 = vmatmul.mubr.f32.gmra.mrb[0].mxu0 %v196
        %v350 = vpop.f32.mrb[0].mxu0
        %v351 = vadd.f32 0.0, %v350
        %v352 = vpop.f32.mrb[0].mxu0
        %v353 = vadd.f32 0.0, %v352
        %354 = vmatprep.mubr.f32.mxu0 %v199
        %355 = vmatmul.mubr.f32.gmra.mrb[0].mxu0 %v198
        %v356 = vpop.f32.mrb[0].mxu0
        %v357 = vadd.f32 0.0, %v356
        %v358 = vpop.f32.mrb[0].mxu0
        %v359 = vadd.f32 0.0, %v358
        %360 = vmatprep.mubr.f32.mxu0 %v201
        %361 = vmatmul.mubr.f32.gmra.mrb[0].mxu0 %v200
        %v362 = vpop.f32.mrb[0].mxu0
        %v363 = vadd.f32 0.0, %v362
        %v364 = vpop.f32.mrb[0].mxu0
        %v365 = vadd.f32 0.0, %v364
        %366 = vmatprep.mubr.f32.mxu0 %v203
        %367 = vmatmul.mubr.f32.gmra.mrb[0].mxu0 %v202
        %v368 = vpop.f32.mrb[0].mxu0
        %v369 = vadd.f32 0.0, %v368
        %v370 = vpop.f32.mrb[0].mxu0
        %v371 = vadd.f32 0.0, %v370
        %372 = vmatprep.mubr.f32.mxu0 %v205
        %373 = vmatmul.mubr.f32.gmra.mrb[0].mxu0 %v204
        %v374 = vpop.f32.mrb[0].mxu0
        %v375 = vadd.f32 0.0, %v374
        %v376 = vpop.f32.mrb[0].mxu0
        %v377 = vadd.f32 0.0, %v376
        %378 = vmatprep.mubr.f32.mxu0 %v207
        %379 = vmatmul.mubr.f32.gmra.mrb[0].mxu0 %v206
        %v380 = vpop.f32.mrb[0].mxu0
        %v381 = vadd.f32 0.0, %v380
        %v382 = vpop.f32.mrb[0].mxu0
        %v383 = vadd.f32 0.0, %v382
        %384 = vmatprep.mubr.f32.mxu0 %v209
        %385 = vmatmul.mubr.f32.gmra.mrb[0].mxu0 %v208
        %v386 = vpop.f32.mrb[0].mxu0
        %v387 = vadd.f32 0.0, %v386
        %v388 = vpop.f32.mrb[0].mxu0
        %v389 = vadd.f32 0.0, %v388
        %390 = vmatprep.mubr.f32.mxu0 %v211
        %391 = vmatmul.mubr.f32.gmra.mrb[0].mxu0 %v210
        %v392 = vpop.f32.mrb[0].mxu0
        %v393 = vadd.f32 0.0, %v392
        %v394 = vpop.f32.mrb[0].mxu0
        %v395 = vadd.f32 0.0, %v394
        %396 = vmatprep.mubr.f32.mxu0 %v213
        %397 = vmatmul.mubr.f32.gmra.mrb[0].mxu0 %v212
        %v398 = vpop.f32.mrb[0].mxu0
        %v399 = vadd.f32 0.0, %v398
        %v400 = vpop.f32.mrb[0].mxu0
        %v401 = vadd.f32 0.0, %v400
        %402 = vmatprep.mubr.f32.mxu0 %v215
        %403 = vmatmul.mubr.f32.gmra.mrb[0].mxu0 %v214
        %v404 = vpop.f32.mrb[0].mxu0
        %v405 = vadd.f32 0.0, %v404
        %v406 = vpop.f32.mrb[0].mxu0
        %v407 = vadd.f32 0.0, %v406
        %408 = vmatprep.mubr.f32.mxu0 %v217
        %409 = vmatmul.mubr.f32.gmra.mrb[0].mxu0 %v216
        %v410 = vpop.f32.mrb[0].mxu0
        %v411 = vadd.f32 0.0, %v410
        %v412 = vpop.f32.mrb[0].mxu0
        %v413 = vadd.f32 0.0, %v412
        %414 = vmatprep.mubr.f32.mxu0 %v219
        %415 = vmatmul.mubr.f32.gmra.mrb[0].mxu0 %v218
        %v416 = vpop.f32.mrb[0].mxu0
        %v417 = vadd.f32 0.0, %v416
        %v418 = vpop.f32.mrb[0].mxu0
        %v419 = vadd.f32 0.0, %v418
        %420 = vmatprep.mubr.f32.mxu0 %v221
        %421 = vmatmul.mubr.f32.gmra.mrb[0].mxu0 %v220
        %v422 = vpop.f32.mrb[0].mxu0
        %v423 = vadd.f32 0.0, %v422
        %v424 = vpop.f32.mrb[0].mxu0
        %v425 = vadd.f32 0.0, %v424
        %426 = vmatprep.mubr.f32.mxu0 %v223
        %427 = vmatmul.mubr.f32.gmra.mrb[0].mxu0 %v222
        %v428 = vpop.f32.mrb[0].mxu0
        %v429 = vadd.f32 0.0, %v428
        %v430 = vpop.f32.mrb[0].mxu0
        %v431 = vadd.f32 0.0, %v430
        %432 = vmatprep.mubr.f32.mxu0 %v225
        %433 = vmatmul.mubr.f32.gmra.mrb[0].mxu0 %v224
        %v434 = vpop.f32.mrb[0].mxu0
        %v435 = vadd.f32 0.0, %v434
        %v436 = vpop.f32.mrb[0].mxu0
        %v437 = vadd.f32 0.0, %v436
        %438 = vmatprep.mubr.f32.mxu0 %v227
        %439 = vmatmul.mubr.f32.gmra.mrb[0].mxu0 %v226
        %v440 = vpop.f32.mrb[0].mxu0
        %v441 = vadd.f32 0.0, %v440
        %v442 = vpop.f32.mrb[0].mxu0
        %v443 = vadd.f32 0.0, %v442
        %444 = vmatprep.mubr.f32.mxu0 %v229
        %445 = vmatmul.mubr.f32.gmra.mrb[0].mxu0 %v228
        %v446 = vpop.f32.mrb[0].mxu0
        %v447 = vadd.f32 0.0, %v446
        %v448 = vpop.f32.mrb[0].mxu0
        %v449 = vadd.f32 0.0, %v448
        %450 = vmatprep.mubr.f32.mxu0 %v231
        %451 = vmatmul.mubr.f32.gmra.mrb[0].mxu0 %v230
        %v452 = vpop.f32.mrb[0].mxu0
        %v453 = vadd.f32 0.0, %v452
        %v454 = vpop.f32.mrb[0].mxu0
        %v455 = vadd.f32 0.0, %v454
        %456 = vmatprep.mubr.f32.mxu0 %v233
        %457 = vmatmul.mubr.f32.gmra.mrb[0].mxu0 %v232
        %v458 = vpop.f32.mrb[0].mxu0
        %v459 = vadd.f32 0.0, %v458
        %v460 = vpop.f32.mrb[0].mxu0
        %v461 = vadd.f32 0.0, %v460
        %462 = vmatprep.mubr.f32.mxu0 %v235
        %463 = vmatmul.mubr.f32.gmra.mrb[0].mxu0 %v234
        %v464 = vpop.f32.mrb[0].mxu0
        %v465 = vadd.f32 0.0, %v464
        %v466 = vpop.f32.mrb[0].mxu0
        %v467 = vadd.f32 0.0, %v466
        %468 = vmatprep.mubr.f32.mxu0 %v237
        %469 = vmatmul.mubr.f32.gmra.mrb[0].mxu0 %v236
        %v470 = vpop.f32.mrb[0].mxu0
        %v471 = vadd.f32 0.0, %v470
        %v472 = vpop.f32.mrb[0].mxu0
        %v473 = vadd.f32 0.0, %v472
        %474 = vmatprep.mubr.f32.mxu0 %v239
        %475 = vmatmul.mubr.f32.gmra.mrb[0].mxu0 %v238
        %v476 = vpop.f32.mrb[0].mxu0
        %v477 = vadd.f32 0.0, %v476
        %v478 = vpop.f32.mrb[0].mxu0
        %v479 = vadd.f32 0.0, %v478
        %480 = vmatprep.mubr.f32.mxu0 %v241
        %481 = vmatmul.mubr.f32.gmra.mrb[0].mxu0 %v240
        %v482 = vpop.f32.mrb[0].mxu0
        %v483 = vadd.f32 0.0, %v482
        %v484 = vpop.f32.mrb[0].mxu0
        %v485 = vadd.f32 0.0, %v484
        %486 = vmatprep.mubr.f32.mxu0 %v243
        %487 = vmatmul.mubr.f32.gmra.mrb[0].mxu0 %v242
        %v488 = vpop.f32.mrb[0].mxu0
        %v489 = vadd.f32 0.0, %v488
        %v490 = vpop.f32.mrb[0].mxu0
        %v491 = vadd.f32 0.0, %v490
        %492 = vmatprep.mubr.f32.mxu0 %v245
        %493 = vmatmul.mubr.f32.gmra.mrb[0].mxu0 %v244
        %v494 = vpop.f32.mrb[0].mxu0
        %v495 = vadd.f32 0.0, %v494
        %v496 = vpop.f32.mrb[0].mxu0
        %v497 = vadd.f32 0.0, %v496
        %498 = vmatprep.mubr.f32.mxu0 %v247
        %499 = vmatmul.mubr.f32.gmra.mrb[0].mxu0 %v246
        %v500 = vpop.f32.mrb[0].mxu0
        %v501 = vadd.f32 0.0, %v500
        %v502 = vpop.f32.mrb[0].mxu0
        %v503 = vadd.f32 0.0, %v502
        %504 = vdwg.mxu0
        %505 = vst [vmem:[#allocation2] sm:$0xff] %v315
        %506 = vst [vmem:[#allocation2 + $0x8] sm:$0xff] %v317
        %507 = vst [vmem:[#allocation2 + $0x10] sm:$0xff] %v321
        %508 = vst [vmem:[#allocation2 + $0x18] sm:$0xff] %v323
        %509 = vst [vmem:[#allocation2 + $0x20] sm:$0xff] %v327
        %510 = vst [vmem:[#allocation2 + $0x28] sm:$0xff] %v329
        %511 = vst [vmem:[#allocation2 + $0x30] sm:$0xff] %v333
        %512 = vst [vmem:[#allocation2 + $0x38] sm:$0xff] %v335
        %513 = vst [vmem:[#allocation2 + $0x40] sm:$0xff] %v339
        %514 = vst [vmem:[#allocation2 + $0x48] sm:$0xff] %v341
        %515 = vst [vmem:[#allocation2 + $0x50] sm:$0xff] %v345
        %516 = vst [vmem:[#allocation2 + $0x58] sm:$0xff] %v347
        %517 = vst [vmem:[#allocation2 + $0x60] sm:$0xff] %v351
        %518 = vst [vmem:[#allocation2 + $0x68] sm:$0xff] %v353
        %519 = vst [vmem:[#allocation2 + $0x70] sm:$0xff] %v357
        %520 = vst [vmem:[#allocation2 + $0x78] sm:$0xff] %v359
        %521 = vst [vmem:[#allocation2 + $0x80] sm:$0xff] %v363
        %522 = vst [vmem:[#allocation2 + $0x88] sm:$0xff] %v365
        %523 = vst [vmem:[#allocation2 + $0x90] sm:$0xff] %v369
        %524 = vst [vmem:[#allocation2 + $0x98] sm:$0xff] %v371
        %525 = vst [vmem:[#allocation2 + $0xa0] sm:$0xff] %v375
        %526 = vst [vmem:[#allocation2 + $0xa8] sm:$0xff] %v377
        %527 = vst [vmem:[#allocation2 + $0xb0] sm:$0xff] %v381
        %528 = vst [vmem:[#allocation2 + $0xb8] sm:$0xff] %v383
        %529 = vst [vmem:[#allocation2 + $0xc0] sm:$0xff] %v387
        %530 = vst [vmem:[#allocation2 + $0xc8] sm:$0xff] %v389
        %531 = vst [vmem:[#allocation2 + $0xd0] sm:$0xff] %v393
        %532 = vst [vmem:[#allocation2 + $0xd8] sm:$0xff] %v395
        %533 = vst [vmem:[#allocation2 + $0xe0] sm:$0xff] %v399
        %534 = vst [vmem:[#allocation2 + $0xe8] sm:$0xff] %v401
        %535 = vst [vmem:[#allocation2 + $0xf0] sm:$0xff] %v405
        %536 = vst [vmem:[#allocation2 + $0xf8] sm:$0xff] %v407
        %537 = vst [vmem:[#allocation2 + $0x100] sm:$0xff] %v411
        %538 = vst [vmem:[#allocation2 + $0x108] sm:$0xff] %v413
        %539 = vst [vmem:[#allocation2 + $0x110] sm:$0xff] %v417
        %540 = vst [vmem:[#allocation2 + $0x118] sm:$0xff] %v419
        %541 = vst [vmem:[#allocation2 + $0x120] sm:$0xff] %v423
        %542 = vst [vmem:[#allocation2 + $0x128] sm:$0xff] %v425
        %543 = vst [vmem:[#allocation2 + $0x130] sm:$0xff] %v429
        %544 = vst [vmem:[#allocation2 + $0x138] sm:$0xff] %v431
        %545 = vst [vmem:[#allocation2 + $0x140] sm:$0xff] %v435
        %546 = vst [vmem:[#allocation2 + $0x148] sm:$0xff] %v437
        %547 = vst [vmem:[#allocation2 + $0x150] sm:$0xff] %v441
        %548 = vst [vmem:[#allocation2 + $0x158] sm:$0xff] %v443
        %549 = vst [vmem:[#allocation2 + $0x160] sm:$0xff] %v447
        %550 = vst [vmem:[#allocation2 + $0x168] sm:$0xff] %v449
        %551 = vst [vmem:[#allocation2 + $0x170] sm:$0xff] %v453
        %552 = vst [vmem:[#allocation2 + $0x178] sm:$0xff] %v455
        %553 = vst [vmem:[#allocation2 + $0x180] sm:$0xff] %v459
        %554 = vst [vmem:[#allocation2 + $0x188] sm:$0xff] %v461
        %555 = vst [vmem:[#allocation2 + $0x190] sm:$0xff] %v465
        %556 = vst [vmem:[#allocation2 + $0x198] sm:$0xff] %v467
        %557 = vst [vmem:[#allocation2 + $0x1a0] sm:$0xff] %v471
        %558 = vst [vmem:[#allocation2 + $0x1a8] sm:$0xff] %v473
        %559 = vst [vmem:[#allocation2 + $0x1b0] sm:$0xff] %v477
        %560 = vst [vmem:[#allocation2 + $0x1b8] sm:$0xff] %v479
        %561 = vst [vmem:[#allocation2 + $0x1c0] sm:$0xff] %v483
        %562 = vst [vmem:[#allocation2 + $0x1c8] sm:$0xff] %v485
        %563 = vst [vmem:[#allocation2 + $0x1d0] sm:$0xff] %v489
        %564 = vst [vmem:[#allocation2 + $0x1d8] sm:$0xff] %v491
        %565 = vst [vmem:[#allocation2 + $0x1e0] sm:$0xff] %v495
        %566 = vst [vmem:[#allocation2 + $0x1e8] sm:$0xff] %v497
        %567 = vst [vmem:[#allocation2 + $0x1f0] sm:$0xff] %v501
        %568 = vst [vmem:[#allocation2 + $0x1f8] sm:$0xff] %v503
        %v569 = vld [vmem:[%s178] sm:$0xff]
        %v570 = vld [vmem:[%s178 + $0x8] sm:$0xff]
        %v571 = vld [vmem:[%s178 + $0x10] sm:$0xff]
        %v572 = vld [vmem:[%s178 + $0x18] sm:$0xff]
        %v573 = vld [vmem:[%s178 + $0x20] sm:$0xff]
        %v574 = vld [vmem:[%s178 + $0x28] sm:$0xff]
        %v575 = vld [vmem:[%s178 + $0x30] sm:$0xff]
        %v576 = vld [vmem:[%s178 + $0x38] sm:$0xff]
        %v577 = vld [vmem:[%s178 + $0x40] sm:$0xff]
        %v578 = vld [vmem:[%s178 + $0x48] sm:$0xff]
        %v579 = vld [vmem:[%s178 + $0x50] sm:$0xff]
        %v580 = vld [vmem:[%s178 + $0x58] sm:$0xff]
        %v581 = vld [vmem:[%s178 + $0x60] sm:$0xff]
        %v582 = vld [vmem:[%s178 + $0x68] sm:$0xff]
        %v583 = vld [vmem:[%s178 + $0x70] sm:$0xff]
        %v584 = vld [vmem:[%s178 + $0x78] sm:$0xff]
        %v585 = vld [vmem:[%s178 + $0x80] sm:$0xff]
        %v586 = vld [vmem:[%s178 + $0x88] sm:$0xff]
        %v587 = vld [vmem:[%s178 + $0x90] sm:$0xff]
        %v588 = vld [vmem:[%s178 + $0x98] sm:$0xff]
        %v589 = vld [vmem:[%s178 + $0xa0] sm:$0xff]
        %v590 = vld [vmem:[%s178 + $0xa8] sm:$0xff]
        %v591 = vld [vmem:[%s178 + $0xb0] sm:$0xff]
        %v592 = vld [vmem:[%s178 + $0xb8] sm:$0xff]
        %v593 = vld [vmem:[%s178 + $0xc0] sm:$0xff]
        %v594 = vld [vmem:[%s178 + $0xc8] sm:$0xff]
        %v595 = vld [vmem:[%s178 + $0xd0] sm:$0xff]
        %v596 = vld [vmem:[%s178 + $0xd8] sm:$0xff]
        %v597 = vld [vmem:[%s178 + $0xe0] sm:$0xff]
        %v598 = vld [vmem:[%s178 + $0xe8] sm:$0xff]
        %v599 = vld [vmem:[%s178 + $0xf0] sm:$0xff]
        %v600 = vld [vmem:[%s178 + $0xf8] sm:$0xff]
        %601 = vst [vmem:[%s183] sm:$0xff] %v569
        %602 = vst [vmem:[%s183 + $0x8] sm:$0xff] %v570
        %603 = vst [vmem:[%s183 + $0x10] sm:$0xff] %v571
        %604 = vst [vmem:[%s183 + $0x18] sm:$0xff] %v572
        %605 = vst [vmem:[%s183 + $0x20] sm:$0xff] %v573
        %606 = vst [vmem:[%s183 + $0x28] sm:$0xff] %v574
        %607 = vst [vmem:[%s183 + $0x30] sm:$0xff] %v575
        %608 = vst [vmem:[%s183 + $0x38] sm:$0xff] %v576
        %609 = vst [vmem:[%s183 + $0x40] sm:$0xff] %v577
        %610 = vst [vmem:[%s183 + $0x48] sm:$0xff] %v578
        %611 = vst [vmem:[%s183 + $0x50] sm:$0xff] %v579
        %612 = vst [vmem:[%s183 + $0x58] sm:$0xff] %v580
        %613 = vst [vmem:[%s183 + $0x60] sm:$0xff] %v581
        %614 = vst [vmem:[%s183 + $0x68] sm:$0xff] %v582
        %615 = vst [vmem:[%s183 + $0x70] sm:$0xff] %v583
        %616 = vst [vmem:[%s183 + $0x78] sm:$0xff] %v584
        %617 = vst [vmem:[%s183 + $0x80] sm:$0xff] %v585
        %618 = vst [vmem:[%s183 + $0x88] sm:$0xff] %v586
        %619 = vst [vmem:[%s183 + $0x90] sm:$0xff] %v587
        %620 = vst [vmem:[%s183 + $0x98] sm:$0xff] %v588
        %621 = vst [vmem:[%s183 + $0xa0] sm:$0xff] %v589
        %622 = vst [vmem:[%s183 + $0xa8] sm:$0xff] %v590
        %623 = vst [vmem:[%s183 + $0xb0] sm:$0xff] %v591
        %624 = vst [vmem:[%s183 + $0xb8] sm:$0xff] %v592
        %625 = vst [vmem:[%s183 + $0xc0] sm:$0xff] %v593
        %626 = vst [vmem:[%s183 + $0xc8] sm:$0xff] %v594
        %627 = vst [vmem:[%s183 + $0xd0] sm:$0xff] %v595
        %628 = vst [vmem:[%s183 + $0xd8] sm:$0xff] %v596
        %629 = vst [vmem:[%s183 + $0xe0] sm:$0xff] %v597
        %630 = vst [vmem:[%s183 + $0xe8] sm:$0xff] %v598
        %631 = vst [vmem:[%s183 + $0xf0] sm:$0xff] %v599
        %632 = vst [vmem:[%s183 + $0xf8] sm:$0xff] %v600
        loop: start=0, step=1, limit=20
        $region33: #{comp_eig_decomp_batch.2} parent=27 // loop_pre_header
          _
        $region34: #{comp_eig_decomp_batch.2} parent=27 // loop_header
          %s634 = sphi 0, %s638
          %p635 = scmp.ge.s32.totalorder %s634, 20
        $region35: #{comp_eig_decomp_batch.2} parent=27 // loop_header_branch
          %637 = sbr.rel (%p635) target = $region39
        $region36: #{comp_eig_decomp_batch.2} parent=27 // loop_body
          %v639 = vld [vmem:[#allocation2] sm:$0xff]
          %v640 = vld [vmem:[#allocation2 + $0x8] sm:$0xff]
          %v641 = vld [vmem:[#allocation2 + $0x10] sm:$0xff]
          %v642 = vld [vmem:[#allocation2 + $0x18] sm:$0xff]
          %v643 = vld [vmem:[#allocation2 + $0x20] sm:$0xff]
          %v644 = vld [vmem:[#allocation2 + $0x28] sm:$0xff]
          %v645 = vld [vmem:[#allocation2 + $0x30] sm:$0xff]
          %v646 = vld [vmem:[#allocation2 + $0x38] sm:$0xff]
          %v647 = vld [vmem:[#allocation2 + $0x40] sm:$0xff]
          %v648 = vld [vmem:[#allocation2 + $0x48] sm:$0xff]
          %v649 = vld [vmem:[#allocation2 + $0x50] sm:$0xff]
          %v650 = vld [vmem:[#allocation2 + $0x58] sm:$0xff]
          %v651 = vld [vmem:[#allocation2 + $0x60] sm:$0xff]
          %v652 = vld [vmem:[#allocation2 + $0x68] sm:$0xff]
          %v653 = vld [vmem:[#allocation2 + $0x70] sm:$0xff]
          %v654 = vld [vmem:[#allocation2 + $0x78] sm:$0xff]
          %v655 = vld [vmem:[#allocation2 + $0x80] sm:$0xff]
          %v656 = vld [vmem:[#allocation2 + $0x88] sm:$0xff]
          %v657 = vld [vmem:[#allocation2 + $0x90] sm:$0xff]
          %v658 = vld [vmem:[#allocation2 + $0x98] sm:$0xff]
          %v659 = vld [vmem:[#allocation2 + $0xa0] sm:$0xff]
          %v660 = vld [vmem:[#allocation2 + $0xa8] sm:$0xff]
          %v661 = vld [vmem:[#allocation2 + $0xb0] sm:$0xff]
          %v662 = vld [vmem:[#allocation2 + $0xb8] sm:$0xff]
          %v663 = vld [vmem:[#allocation2 + $0xc0] sm:$0xff]
          %v664 = vld [vmem:[#allocation2 + $0xc8] sm:$0xff]
          %v665 = vld [vmem:[#allocation2 + $0xd0] sm:$0xff]
          %v666 = vld [vmem:[#allocation2 + $0xd8] sm:$0xff]
          %v667 = vld [vmem:[#allocation2 + $0xe0] sm:$0xff]
          %v668 = vld [vmem:[#allocation2 + $0xe8] sm:$0xff]
          %v669 = vld [vmem:[#allocation2 + $0xf0] sm:$0xff]
          %v670 = vld [vmem:[#allocation2 + $0xf8] sm:$0xff]
          %v671 = vld [vmem:[#allocation2 + $0x100] sm:$0xff]
          %v672 = vld [vmem:[#allocation2 + $0x108] sm:$0xff]
          %v673 = vld [vmem:[#allocation2 + $0x110] sm:$0xff]
          %v674 = vld [vmem:[#allocation2 + $0x118] sm:$0xff]
          %v675 = vld [vmem:[#allocation2 + $0x120] sm:$0xff]
          %v676 = vld [vmem:[#allocation2 + $0x128] sm:$0xff]
          %v677 = vld [vmem:[#allocation2 + $0x130] sm:$0xff]
          %v678 = vld [vmem:[#allocation2 + $0x138] sm:$0xff]
          %v679 = vld [vmem:[#allocation2 + $0x140] sm:$0xff]
          %v680 = vld [vmem:[#allocation2 + $0x148] sm:$0xff]
          %v681 = vld [vmem:[#allocation2 + $0x150] sm:$0xff]
          %v682 = vld [vmem:[#allocation2 + $0x158] sm:$0xff]
          %v683 = vld [vmem:[#allocation2 + $0x160] sm:$0xff]
          %v684 = vld [vmem:[#allocation2 + $0x168] sm:$0xff]
          %v685 = vld [vmem:[#allocation2 + $0x170] sm:$0xff]
          %v686 = vld [vmem:[#allocation2 + $0x178] sm:$0xff]
          %v687 = vld [vmem:[#allocation2 + $0x180] sm:$0xff]
          %v688 = vld [vmem:[#allocation2 + $0x188] sm:$0xff]
          %v689 = vld [vmem:[#allocation2 + $0x190] sm:$0xff]
          %v690 = vld [vmem:[#allocation2 + $0x198] sm:$0xff]
          %v691 = vld [vmem:[#allocation2 + $0x1a0] sm:$0xff]
          %v692 = vld [vmem:[#allocation2 + $0x1a8] sm:$0xff]
          %v693 = vld [vmem:[#allocation2 + $0x1b0] sm:$0xff]
          %v694 = vld [vmem:[#allocation2 + $0x1b8] sm:$0xff]
          %v695 = vld [vmem:[#allocation2 + $0x1c0] sm:$0xff]
          %v696 = vld [vmem:[#allocation2 + $0x1c8] sm:$0xff]
          %v697 = vld [vmem:[#allocation2 + $0x1d0] sm:$0xff]
          %v698 = vld [vmem:[#allocation2 + $0x1d8] sm:$0xff]
          %v699 = vld [vmem:[#allocation2 + $0x1e0] sm:$0xff]
          %v700 = vld [vmem:[#allocation2 + $0x1e8] sm:$0xff]
          %v701 = vld [vmem:[#allocation2 + $0x1f0] sm:$0xff]
          %v702 = vld [vmem:[#allocation2 + $0x1f8] sm:$0xff]
          %v703 = vld [vmem:[%s183] sm:$0xff]
          %v704 = vld [vmem:[%s183 + $0x8] sm:$0xff]
          %v705 = vld [vmem:[%s183 + $0x10] sm:$0xff]
          %v706 = vld [vmem:[%s183 + $0x18] sm:$0xff]
          %v707 = vld [vmem:[%s183 + $0x20] sm:$0xff]
          %v708 = vld [vmem:[%s183 + $0x28] sm:$0xff]
          %v709 = vld [vmem:[%s183 + $0x30] sm:$0xff]
          %v710 = vld [vmem:[%s183 + $0x38] sm:$0xff]
          %v711 = vld [vmem:[%s183 + $0x40] sm:$0xff]
          %v712 = vld [vmem:[%s183 + $0x48] sm:$0xff]
          %v713 = vld [vmem:[%s183 + $0x50] sm:$0xff]
          %v714 = vld [vmem:[%s183 + $0x58] sm:$0xff]
          %v715 = vld [vmem:[%s183 + $0x60] sm:$0xff]
          %v716 = vld [vmem:[%s183 + $0x68] sm:$0xff]
          %v717 = vld [vmem:[%s183 + $0x70] sm:$0xff]
          %v718 = vld [vmem:[%s183 + $0x78] sm:$0xff]
          %v719 = vld [vmem:[%s183 + $0x80] sm:$0xff]
          %v720 = vld [vmem:[%s183 + $0x88] sm:$0xff]
          %v721 = vld [vmem:[%s183 + $0x90] sm:$0xff]
          %v722 = vld [vmem:[%s183 + $0x98] sm:$0xff]
          %v723 = vld [vmem:[%s183 + $0xa0] sm:$0xff]
          %v724 = vld [vmem:[%s183 + $0xa8] sm:$0xff]
          %v725 = vld [vmem:[%s183 + $0xb0] sm:$0xff]
          %v726 = vld [vmem:[%s183 + $0xb8] sm:$0xff]
          %v727 = vld [vmem:[%s183 + $0xc0] sm:$0xff]
          %v728 = vld [vmem:[%s183 + $0xc8] sm:$0xff]
          %v729 = vld [vmem:[%s183 + $0xd0] sm:$0xff]
          %v730 = vld [vmem:[%s183 + $0xd8] sm:$0xff]
          %v731 = vld [vmem:[%s183 + $0xe0] sm:$0xff]
          %v732 = vld [vmem:[%s183 + $0xe8] sm:$0xff]
          %v733 = vld [vmem:[%s183 + $0xf0] sm:$0xff]
          %v734 = vld [vmem:[%s183 + $0xf8] sm:$0xff]
          %735 = vmatprep.subr.mxu0 0.0
          %736 = vmatpush1.msra.mxu0 %v703
          %737 = vmatprep.subr.mxu0 0.0
          %738 = vmatpush1.msra.mxu0 %v704
          %739 = vmatprep.subr.mxu0 0.0
          %740 = vmatpush1.msra.mxu0 %v705
          %741 = vmatprep.subr.mxu0 0.0
          %742 = vmatpush1.msra.mxu0 %v706
          %743 = vmatprep.subr.mxu0 0.0
          %744 = vmatpush1.msra.mxu0 %v707
          %745 = vmatprep.subr.mxu0 0.0
          %746 = vmatpush1.msra.mxu0 %v708
          %747 = vmatprep.subr.mxu0 0.0
          %748 = vmatpush1.msra.mxu0 %v709
          %749 = vmatprep.subr.mxu0 0.0
          %750 = vmatpush1.msra.mxu0 %v710
          %751 = vmatprep.subr.mxu0 0.0
          %752 = vmatpush1.msra.mxu0 %v711
          %753 = vmatprep.subr.mxu0 0.0
          %754 = vmatpush1.msra.mxu0 %v712
          %755 = vmatprep.subr.mxu0 0.0
          %756 = vmatpush1.msra.mxu0 %v713
          %757 = vmatprep.subr.mxu0 0.0
          %758 = vmatpush1.msra.mxu0 %v714
          %759 = vmatprep.subr.mxu0 0.0
          %760 = vmatpush1.msra.mxu0 %v715
          %761 = vmatprep.subr.mxu0 0.0
          %762 = vmatpush1.msra.mxu0 %v716
          %763 = vmatprep.subr.mxu0 0.0
          %764 = vmatpush1.msra.mxu0 %v717
          %765 = vmatprep.subr.mxu0 0.0
          %766 = vmatpush1.msra.mxu0 %v718
          %767 = vmatprep.subr.mxu0 0.0
          %768 = vmatpush1.msra.mxu0 %v719
          %769 = vmatprep.subr.mxu0 0.0
          %770 = vmatpush1.msra.mxu0 %v720
          %771 = vmatprep.subr.mxu0 0.0
          %772 = vmatpush1.msra.mxu0 %v721
          %773 = vmatprep.subr.mxu0 0.0
          %774 = vmatpush1.msra.mxu0 %v722
          %775 = vmatprep.subr.mxu0 0.0
          %776 = vmatpush1.msra.mxu0 %v723
          %777 = vmatprep.subr.mxu0 0.0
          %778 = vmatpush1.msra.mxu0 %v724
          %779 = vmatprep.subr.mxu0 0.0
          %780 = vmatpush1.msra.mxu0 %v725
          %781 = vmatprep.subr.mxu0 0.0
          %782 = vmatpush1.msra.mxu0 %v726
          %783 = vmatprep.subr.mxu0 0.0
          %784 = vmatpush1.msra.mxu0 %v727
          %785 = vmatprep.subr.mxu0 0.0
          %786 = vmatpush1.msra.mxu0 %v728
          %787 = vmatprep.subr.mxu0 0.0
          %788 = vmatpush1.msra.mxu0 %v729
          %789 = vmatprep.subr.mxu0 0.0
          %790 = vmatpush1.msra.mxu0 %v730
          %791 = vmatprep.subr.mxu0 0.0
          %792 = vmatpush1.msra.mxu0 %v731
          %793 = vmatprep.subr.mxu0 0.0
          %794 = vmatpush1.msra.mxu0 %v732
          %795 = vmatprep.subr.mxu0 0.0
          %796 = vmatpush1.msra.mxu0 %v733
          %797 = vmatprep.subr.mxu0 0.0
          %798 = vmatpush1.msra.mxu0 %v734
          %799 = vmatprep.mubr.f32.mxu0 %v640
          %800 = vmatmul.mubr.f32.gmra.mrb[0].mxu0 %v639
          %v801 = vpop.f32.mrb[0].mxu0
          %v802 = vadd.f32 0.0, %v801
          %v803 = vpop.f32.mrb[0].mxu0
          %804 = vmatprep.mubr.f32.mxu0 %v642
          %805 = vmatmul.mubr.f32.gmra.mrb[0].mxu0 %v641
          %v806 = vpop.f32.mrb[0].mxu0
          %v807 = vadd.f32 0.0, %v806
          %v808 = vpop.f32.mrb[0].mxu0
          %809 = vmatprep.mubr.f32.mxu0 %v644
          %810 = vmatmul.mubr.f32.gmra.mrb[0].mxu0 %v643
          %v811 = vpop.f32.mrb[0].mxu0
          %v812 = vadd.f32 0.0, %v811
          %v813 = vpop.f32.mrb[0].mxu0
          %814 = vmatprep.mubr.f32.mxu0 %v646
          %815 = vmatmul.mubr.f32.gmra.mrb[0].mxu0 %v645
          %v816 = vpop.f32.mrb[0].mxu0
          %v817 = vadd.f32 0.0, %v816
          %v818 = vpop.f32.mrb[0].mxu0
          %819 = vmatprep.mubr.f32.mxu0 %v648
          %820 = vmatmul.mubr.f32.gmra.mrb[0].mxu0 %v647
          %v821 = vpop.f32.mrb[0].mxu0
          %v822 = vadd.f32 0.0, %v821
          %v823 = vpop.f32.mrb[0].mxu0
          %824 = vmatprep.mubr.f32.mxu0 %v650
          %825 = vmatmul.mubr.f32.gmra.mrb[0].mxu0 %v649
          %v826 = vpop.f32.mrb[0].mxu0
          %v827 = vadd.f32 0.0, %v826
          %v828 = vpop.f32.mrb[0].mxu0
          %829 = vmatprep.mubr.f32.mxu0 %v652
          %830 = vmatmul.mubr.f32.gmra.mrb[0].mxu0 %v651
          %v831 = vpop.f32.mrb[0].mxu0
          %v832 = vadd.f32 0.0, %v831
          %v833 = vpop.f32.mrb[0].mxu0
          %834 = vmatprep.mubr.f32.mxu0 %v654
          %835 = vmatmul.mubr.f32.gmra.mrb[0].mxu0 %v653
          %v836 = vpop.f32.mrb[0].mxu0
          %v837 = vadd.f32 0.0, %v836
          %v838 = vpop.f32.mrb[0].mxu0
          %839 = vmatprep.mubr.f32.mxu0 %v656
          %840 = vmatmul.mubr.f32.gmra.mrb[0].mxu0 %v655
          %v841 = vpop.f32.mrb[0].mxu0
          %v842 = vadd.f32 0.0, %v841
          %v843 = vpop.f32.mrb[0].mxu0
          %844 = vmatprep.mubr.f32.mxu0 %v658
          %845 = vmatmul.mubr.f32.gmra.mrb[0].mxu0 %v657
          %v846 = vpop.f32.mrb[0].mxu0
          %v847 = vadd.f32 0.0, %v846
          %v848 = vpop.f32.mrb[0].mxu0
          %849 = vmatprep.mubr.f32.mxu0 %v660
          %850 = vmatmul.mubr.f32.gmra.mrb[0].mxu0 %v659
          %v851 = vpop.f32.mrb[0].mxu0
          %v852 = vadd.f32 0.0, %v851
          %v853 = vpop.f32.mrb[0].mxu0
          %854 = vmatprep.mubr.f32.mxu0 %v662
          %855 = vmatmul.mubr.f32.gmra.mrb[0].mxu0 %v661
          %v856 = vpop.f32.mrb[0].mxu0
          %v857 = vadd.f32 0.0, %v856
          %v858 = vpop.f32.mrb[0].mxu0
          %859 = vmatprep.mubr.f32.mxu0 %v664
          %860 = vmatmul.mubr.f32.gmra.mrb[0].mxu0 %v663
          %v861 = vpop.f32.mrb[0].mxu0
          %v862 = vadd.f32 0.0, %v861
          %v863 = vpop.f32.mrb[0].mxu0
          %864 = vmatprep.mubr.f32.mxu0 %v666
          %865 = vmatmul.mubr.f32.gmra.mrb[0].mxu0 %v665
          %v866 = vpop.f32.mrb[0].mxu0
          %v867 = vadd.f32 0.0, %v866
          %v868 = vpop.f32.mrb[0].mxu0
          %869 = vmatprep.mubr.f32.mxu0 %v668
          %870 = vmatmul.mubr.f32.gmra.mrb[0].mxu0 %v667
          %v871 = vpop.f32.mrb[0].mxu0
          %v872 = vadd.f32 0.0, %v871
          %v873 = vpop.f32.mrb[0].mxu0
          %874 = vmatprep.mubr.f32.mxu0 %v670
          %875 = vmatmul.mubr.f32.gmra.mrb[0].mxu0 %v669
          %v876 = vpop.f32.mrb[0].mxu0
          %v877 = vadd.f32 0.0, %v876
          %v878 = vpop.f32.mrb[0].mxu0
          %879 = vmatprep.mubr.f32.mxu0 %v672
          %880 = vmatmul.mubr.f32.gmra.mrb[0].mxu0 %v671
          %v881 = vpop.f32.mrb[0].mxu0
          %v882 = vadd.f32 0.0, %v881
          %v883 = vpop.f32.mrb[0].mxu0
          %884 = vmatprep.mubr.f32.mxu0 %v674
          %885 = vmatmul.mubr.f32.gmra.mrb[0].mxu0 %v673
          %v886 = vpop.f32.mrb[0].mxu0
          %v887 = vadd.f32 0.0, %v886
          %v888 = vpop.f32.mrb[0].mxu0
          %889 = vmatprep.mubr.f32.mxu0 %v676
          %890 = vmatmul.mubr.f32.gmra.mrb[0].mxu0 %v675
          %v891 = vpop.f32.mrb[0].mxu0
          %v892 = vadd.f32 0.0, %v891
          %v893 = vpop.f32.mrb[0].mxu0
          %894 = vmatprep.mubr.f32.mxu0 %v678
          %895 = vmatmul.mubr.f32.gmra.mrb[0].mxu0 %v677
          %v896 = vpop.f32.mrb[0].mxu0
          %v897 = vadd.f32 0.0, %v896
          %v898 = vpop.f32.mrb[0].mxu0
          %899 = vmatprep.mubr.f32.mxu0 %v680
          %900 = vmatmul.mubr.f32.gmra.mrb[0].mxu0 %v679
          %v901 = vpop.f32.mrb[0].mxu0
          %v902 = vadd.f32 0.0, %v901
          %v903 = vpop.f32.mrb[0].mxu0
          %904 = vmatprep.mubr.f32.mxu0 %v682
          %905 = vmatmul.mubr.f32.gmra.mrb[0].mxu0 %v681
          %v906 = vpop.f32.mrb[0].mxu0
          %v907 = vadd.f32 0.0, %v906
          %v908 = vpop.f32.mrb[0].mxu0
          %909 = vmatprep.mubr.f32.mxu0 %v684
          %910 = vmatmul.mubr.f32.gmra.mrb[0].mxu0 %v683
          %v911 = vpop.f32.mrb[0].mxu0
          %v912 = vadd.f32 0.0, %v911
          %v913 = vpop.f32.mrb[0].mxu0
          %914 = vmatprep.mubr.f32.mxu0 %v686
          %915 = vmatmul.mubr.f32.gmra.mrb[0].mxu0 %v685
          %v916 = vpop.f32.mrb[0].mxu0
          %v917 = vadd.f32 0.0, %v916
          %v918 = vpop.f32.mrb[0].mxu0
          %919 = vmatprep.mubr.f32.mxu0 %v688
          %920 = vmatmul.mubr.f32.gmra.mrb[0].mxu0 %v687
          %v921 = vpop.f32.mrb[0].mxu0
          %v922 = vadd.f32 0.0, %v921
          %v923 = vpop.f32.mrb[0].mxu0
          %924 = vmatprep.mubr.f32.mxu0 %v690
          %925 = vmatmul.mubr.f32.gmra.mrb[0].mxu0 %v689
          %v926 = vpop.f32.mrb[0].mxu0
          %v927 = vadd.f32 0.0, %v926
          %v928 = vpop.f32.mrb[0].mxu0
          %929 = vmatprep.mubr.f32.mxu0 %v692
          %930 = vmatmul.mubr.f32.gmra.mrb[0].mxu0 %v691
          %v931 = vpop.f32.mrb[0].mxu0
          %v932 = vadd.f32 0.0, %v931
          %v933 = vpop.f32.mrb[0].mxu0
          %934 = vmatprep.mubr.f32.mxu0 %v694
          %935 = vmatmul.mubr.f32.gmra.mrb[0].mxu0 %v693
          %v936 = vpop.f32.mrb[0].mxu0
          %v937 = vadd.f32 0.0, %v936
          %v938 = vpop.f32.mrb[0].mxu0
          %939 = vmatprep.mubr.f32.mxu0 %v696
          %940 = vmatmul.mubr.f32.gmra.mrb[0].mxu0 %v695
          %v941 = vpop.f32.mrb[0].mxu0
          %v942 = vadd.f32 0.0, %v941
          %v943 = vpop.f32.mrb[0].mxu0
          %944 = vmatprep.mubr.f32.mxu0 %v698
          %945 = vmatmul.mubr.f32.gmra.mrb[0].mxu0 %v697
          %v946 = vpop.f32.mrb[0].mxu0
          %v947 = vadd.f32 0.0, %v946
          %v948 = vpop.f32.mrb[0].mxu0
          %949 = vmatprep.mubr.f32.mxu0 %v700
          %950 = vmatmul.mubr.f32.gmra.mrb[0].mxu0 %v699
          %v951 = vpop.f32.mrb[0].mxu0
          %v952 = vadd.f32 0.0, %v951
          %v953 = vpop.f32.mrb[0].mxu0
          %954 = vmatprep.mubr.f32.mxu0 %v702
          %955 = vmatmul.mubr.f32.gmra.mrb[0].mxu0 %v701
          %v956 = vpop.f32.mrb[0].mxu0
          %v957 = vadd.f32 0.0, %v956
          %v958 = vpop.f32.mrb[0].mxu0
          %959 = vdwg.mxu0
          %960 = vst [vmem:[%s183] sm:$0xff] %v802
          %961 = vst [vmem:[%s183 + $0x8] sm:$0xff] %v807
          %962 = vst [vmem:[%s183 + $0x10] sm:$0xff] %v812
          %963 = vst [vmem:[%s183 + $0x18] sm:$0xff] %v817
          %964 = vst [vmem:[%s183 + $0x20] sm:$0xff] %v822
          %965 = vst [vmem:[%s183 + $0x28] sm:$0xff] %v827
          %966 = vst [vmem:[%s183 + $0x30] sm:$0xff] %v832
          %967 = vst [vmem:[%s183 + $0x38] sm:$0xff] %v837
          %968 = vst [vmem:[%s183 + $0x40] sm:$0xff] %v842
          %969 = vst [vmem:[%s183 + $0x48] sm:$0xff] %v847
          %970 = vst [vmem:[%s183 + $0x50] sm:$0xff] %v852
          %971 = vst [vmem:[%s183 + $0x58] sm:$0xff] %v857
          %972 = vst [vmem:[%s183 + $0x60] sm:$0xff] %v862
          %973 = vst [vmem:[%s183 + $0x68] sm:$0xff] %v867
          %974 = vst [vmem:[%s183 + $0x70] sm:$0xff] %v872
          %975 = vst [vmem:[%s183 + $0x78] sm:$0xff] %v877
          %976 = vst [vmem:[%s183 + $0x80] sm:$0xff] %v882
          %977 = vst [vmem:[%s183 + $0x88] sm:$0xff] %v887
          %978 = vst [vmem:[%s183 + $0x90] sm:$0xff] %v892
          %979 = vst [vmem:[%s183 + $0x98] sm:$0xff] %v897
          %980 = vst [vmem:[%s183 + $0xa0] sm:$0xff] %v902
          %981 = vst [vmem:[%s183 + $0xa8] sm:$0xff] %v907
          %982 = vst [vmem:[%s183 + $0xb0] sm:$0xff] %v912
          %983 = vst [vmem:[%s183 + $0xb8] sm:$0xff] %v917
          %984 = vst [vmem:[%s183 + $0xc0] sm:$0xff] %v922
          %985 = vst [vmem:[%s183 + $0xc8] sm:$0xff] %v927
          %986 = vst [vmem:[%s183 + $0xd0] sm:$0xff] %v932
          %987 = vst [vmem:[%s183 + $0xd8] sm:$0xff] %v937
          %988 = vst [vmem:[%s183 + $0xe0] sm:$0xff] %v942
          %989 = vst [vmem:[%s183 + $0xe8] sm:$0xff] %v947
          %990 = vst [vmem:[%s183 + $0xf0] sm:$0xff] %v952
          %991 = vst [vmem:[%s183 + $0xf8] sm:$0xff] %v957
        $region37: #{comp_eig_decomp_batch.2} parent=27 // loop_footer
          %s638 = sadd.s32 1, %s634
        $region38: #{comp_eig_decomp_batch.2} parent=27 // loop_footer_branch
          %633 = sbr.rel target = $region34
        $region39: #{comp_eig_decomp_batch.2} parent=27 // loop_exit
          _
        %p992 = scmp.lt.s32.totalorder %s16, 1
        %s993 = scalar_select %p992, %s16, 1
        %s994 = smul.addr %s993, 32
        %s995 = smul.addr %s994, 8
        %s996 = scalar_lea.vmem %s2, %s995
        // Predicated region
        $region40: #{comp_eig_decomp_batch.2} parent=27 // pred_check
          %p997 = pneg %p86
        $region41: #{comp_eig_decomp_batch.2} parent=27 // pred_check_branch
          %999 = sbr.rel (%p997) target = $region43
        $region42: #{comp_eig_decomp_batch.2} parent=27 // pred_region
          _
        $region43: #{comp_eig_decomp_batch.2} parent=27 // pred_fallthru
          _
      $region28: #{comp_eig_decomp_batch.2} parent=5 // pred_fallthru
        _
      %p1000 = scmp.le.s32.totalorder 2, %s11
      // Predicated region
      $region44: #{comp_eig_decomp_batch.2} parent=5 // pred_check
        %p1001 = pneg %p1000
      $region45: #{comp_eig_decomp_batch.2} parent=5 // pred_check_branch
        %1003 = sbr.rel (%p1001) target = $region47
      $region46: #{comp_eig_decomp_batch.2} parent=5 // pred_region
        %s1004 = ssub.s32 %s11, 2
        // Predicated region
        $region48: #{comp_eig_decomp_batch.2} parent=46 // pred_check
          %p1005 = pneg %p92
        $region49: #{comp_eig_decomp_batch.2} parent=46 // pred_check_branch
          %1007 = sbr.rel (%p1005) target = $region51
        $region50: #{comp_eig_decomp_batch.2} parent=46 // pred_region
          %p1008 = scmp.lt.s32.totalorder %s17, 1
          %s1009 = scalar_select %p1008, %s17, 1
          %s1010 = smul.addr %s1009, 32
          %s1011 = smul.addr %s1010, 8
          %s1012 = scalar_lea.vmem %s2, %s1011
        $region51: #{comp_eig_decomp_batch.2} parent=46 // pred_fallthru
          _
      $region47: #{comp_eig_decomp_batch.2} parent=5 // pred_fallthru
        _
    $region6: #{comp_eig_decomp_batch.2} parent=1 // loop_footer
      %s15 = sadd.s32 1, %s11
    $region7: #{comp_eig_decomp_batch.2} parent=1 // loop_footer_branch
      %10 = sbr.rel target = $region3
    $region8: #{comp_eig_decomp_batch.2} parent=1 // loop_exit
      _
    %1013 = vsyncpa [#allocation4], 1
    %s1014 = scalar_lea.sflag [#allocation4], 1
    %1015 = vsyncpa %s1014, 1

// kernel: comp_eig_decomp_batch.3
$region0: #{comp_eig_decomp_batch.3}
  #allocation0 [shape = 'u32[]', space=smem, size = 0x4, offset = 0x4, fixed_abs, tag = 'smem constant byte address 0x4 - core index']
  #allocation1 [shape = 'u32[144,128]{1,0:T(1,128)}', space=vmem, size = 0x12000, scoped, tag = 'internal scratch']
  #allocation2 [shape = 'f32[256,256]{1,0:T(8,128)}', space=vmem, size = 0x40000, scoped, tag = 'scratch operand']
  %s0 = inlined_call_operand.vmem [shape: f32[2,256,256], index: 0, kind: input, shape index: {}]
  %s1 = inlined_call_operand.vmem [shape: f32[2,256,128], index: 1, kind: input, shape index: {}]
  %s2 = inlined_call_operand.vmem [shape: f32[2,256,128], index: 2, kind: output, shape index: {}]
  %s3 = sld [smem:[#allocation0]]
  $region48: #{comp_eig_decomp_batch.3} parent=0
    _
  %s5 = ssub.s32 1, %s3
  %s6 = scalar_select 0, %s5, %s3
  loop: start=0, step=1, limit=4
  $region2: #{comp_eig_decomp_batch.3} parent=0 // loop_pre_header
    _
  $region3: #{comp_eig_decomp_batch.3} parent=0 // loop_header
    %s8 = sphi 0, %s12
    %p9 = scmp.ge.s32.totalorder %s8, 4
    %s18 = sphi 0, %s20
    %s21 = sphi 0, %s18
    %s22 = sphi 0, %s21
    %s38 = sphi 0, %s22
    %s44 = sphi 0, %s46
    %s47 = sphi 0, %s44
    %s48 = sphi 0, %s47
    %s64 = sphi 0, %s48
    %s70 = sphi 0, %s72
    %s73 = sphi 0, %s70
    %s74 = sphi 0, %s73
    %s90 = sphi 0, %s74
  $region4: #{comp_eig_decomp_batch.3} parent=0 // loop_header_branch
    %11 = sbr.rel (%p9) target = $region8
  $region5: #{comp_eig_decomp_batch.3} parent=0 // loop_body
    %s13 = ssub.s32 %s8, 1
    %s14 = ssub.s32 %s8, 2
    %s15 = sadd.s32 %s8, 1
    %s16 = ssub.s32 %s8, %s15
    %p17 = scmp.eq.s32.totalorder %s16, 0
    %s19 = sadd.s32 %s18, 1
    %s20 = scalar_select %p17, %s18, %s19
    %p23 = pneg %p17
    %p24 = scmp.eq.s32.totalorder %s8, 1
    %p25 = por %p23, %p24
    %p26 = scmp.ne.s32.totalorder %s18, %s21
    %p27 = scmp.eq.s32.totalorder %s8, 0
    %p28 = por %p26, %p27
    %p29 = scmp.ne.s32.totalorder %s18, %s21
    %p30 = scmp.eq.s32.totalorder %s13, 1
    %p31 = por %p29, %p30
    %p32 = scmp.ne.s32.totalorder %s21, %s22
    %p33 = scmp.eq.s32.totalorder %s13, 0
    %p34 = por %p32, %p33
    %p35 = scmp.ne.s32.totalorder %s21, %s22
    %p36 = scmp.eq.s32.totalorder %s14, 1
    %p37 = por %p35, %p36
    %p39 = scmp.ne.s32.totalorder %s22, %s38
    %p40 = scmp.eq.s32.totalorder %s14, 0
    %p41 = por %p39, %p40
    %s42 = ssub.s32 %s8, %s15
    %p43 = scmp.eq.s32.totalorder %s42, 0
    %s45 = sadd.s32 %s44, 1
    %s46 = scalar_select %p43, %s44, %s45
    %p49 = pneg %p43
    %p50 = scmp.eq.s32.totalorder %s8, 1
    %p51 = por %p49, %p50
    %p52 = scmp.ne.s32.totalorder %s44, %s47
    %p53 = scmp.eq.s32.totalorder %s8, 0
    %p54 = por %p52, %p53
    %p55 = scmp.ne.s32.totalorder %s44, %s47
    %p56 = scmp.eq.s32.totalorder %s13, 1
    %p57 = por %p55, %p56
    %p58 = scmp.ne.s32.totalorder %s47, %s48
    %p59 = scmp.eq.s32.totalorder %s13, 0
    %p60 = por %p58, %p59
    %p61 = scmp.ne.s32.totalorder %s47, %s48
    %p62 = scmp.eq.s32.totalorder %s14, 1
    %p63 = por %p61, %p62
    %p65 = scmp.ne.s32.totalorder %s48, %s64
    %p66 = scmp.eq.s32.totalorder %s14, 0
    %p67 = por %p65, %p66
    %s68 = ssub.s32 %s8, %s15
    %p69 = scmp.eq.s32.totalorder %s68, 0
    %s71 = sadd.s32 %s70, 1
    %s72 = scalar_select %p69, %s70, %s71
    %p75 = pneg %p69
    %p76 = scmp.eq.s32.totalorder %s8, 1
    %p77 = por %p75, %p76
    %p78 = scmp.ne.s32.totalorder %s70, %s73
    %p79 = scmp.eq.s32.totalorder %s8, 0
    %p80 = por %p78, %p79
    %p81 = scmp.ne.s32.totalorder %s70, %s73
    %p82 = scmp.eq.s32.totalorder %s13, 1
    %p83 = por %p81, %p82
    %p84 = scmp.ne.s32.totalorder %s73, %s74
    %p85 = scmp.eq.s32.totalorder %s13, 0
    %p86 = por %p84, %p85
    %p87 = scmp.ne.s32.totalorder %s73, %s74
    %p88 = scmp.eq.s32.totalorder %s14, 1
    %p89 = por %p87, %p88
    %p91 = scmp.ne.s32.totalorder %s74, %s90
    %p92 = scmp.eq.s32.totalorder %s14, 0
    %p93 = por %p91, %p92
    %p94 = scmp.le.s32.totalorder 1, %s8
    %p95 = scmp.lt.s32.totalorder %s8, 3
    %p96 = pnand %p94, %p95
    %p97 = pneg %p96
    // Predicated region
    $region9: #{comp_eig_decomp_batch.3} parent=5 // pred_check
      _
    $region10: #{comp_eig_decomp_batch.3} parent=5 // pred_check_branch
      %99 = sbr.rel (%p96) target = $region12
    $region11: #{comp_eig_decomp_batch.3} parent=5 // pred_region
      %s100 = ssub.s32 %s8, 1
    $region12: #{comp_eig_decomp_batch.3} parent=5 // pred_fallthru
      _
    %p101 = scmp.lt.s32.totalorder %s8, 2
    // Predicated region
    $region13: #{comp_eig_decomp_batch.3} parent=5 // pred_check
      %p102 = pneg %p101
    $region14: #{comp_eig_decomp_batch.3} parent=5 // pred_check_branch
      %104 = sbr.rel (%p102) target = $region16
    $region15: #{comp_eig_decomp_batch.3} parent=5 // pred_region
      // Predicated region
      $region17: #{comp_eig_decomp_batch.3} parent=15 // pred_check
        %p105 = pneg %p28
      $region18: #{comp_eig_decomp_batch.3} parent=15 // pred_check_branch
        %107 = sbr.rel (%p105) target = $region20
      $region19: #{comp_eig_decomp_batch.3} parent=15 // pred_region
        %p108 = scmp.lt.s32.totalorder %s8, 1
        %s109 = scalar_select %p108, %s8, 1
        %s110 = smul.addr %s109, 64
        %s111 = smul.addr %s110, 8
        %s112 = scalar_lea.vmem %s0, %s111
      $region20: #{comp_eig_decomp_batch.3} parent=15 // pred_fallthru
        _
      // Predicated region
      $region21: #{comp_eig_decomp_batch.3} parent=15 // pred_check
        %p113 = pneg %p54
      $region22: #{comp_eig_decomp_batch.3} parent=15 // pred_check_branch
        %115 = sbr.rel (%p113) target = $region24
      $region23: #{comp_eig_decomp_batch.3} parent=15 // pred_region
        %p116 = scmp.lt.s32.totalorder %s8, 1
        %s117 = scalar_select %p116, %s8, 1
        %s118 = smul.addr %s117, 32
        %s119 = smul.addr %s118, 8
        %s120 = scalar_lea.vmem %s1, %s119
      $region24: #{comp_eig_decomp_batch.3} parent=15 // pred_fallthru
        _
    $region16: #{comp_eig_decomp_batch.3} parent=5 // pred_fallthru
      _
    %p121 = scmp.le.s32.totalorder 1, %s8
    %p122 = scmp.lt.s32.totalorder %s8, 3
    %p123 = pnand %p121, %p122
    %p124 = pneg %p123
    // Predicated region
    $region25: #{comp_eig_decomp_batch.3} parent=5 // pred_check
      _
    $region26: #{comp_eig_decomp_batch.3} parent=5 // pred_check_branch
      %126 = sbr.rel (%p123) target = $region28
    $region27: #{comp_eig_decomp_batch.3} parent=5 // pred_region
      %s127 = ssub.s32 %s8, 1
      %p128 = scmp.lt.s32.totalorder %s13, 1
      %s129 = scalar_select %p128, %s13, 1
      %s130 = smul.addr %s129, 64
      %s131 = smul.addr %s130, 8
      %s132 = scalar_lea.vmem %s0, %s131
      %p133 = pneg %p34
      %p134 = pneg %p31
      %p135 = scmp.lt.s32.totalorder %s13, 1
      %s136 = scalar_select %p135, %s13, 1
      %s137 = smul.addr %s136, 32
      %s138 = smul.addr %s137, 8
      %s139 = scalar_lea.vmem %s1, %s138
      %p140 = pneg %p60
      %p141 = pneg %p57
      %p142 = pneg %p86
      %p143 = pneg %p83
      %p144 = scmp.lt.s32.totalorder %s13, 1
      %s145 = scalar_select %p144, %s13, 1
      %s146 = smul.addr %s145, 32
      %s147 = smul.addr %s146, 8
      %s148 = scalar_lea.vmem %s2, %s147
      %p149 = scmp.lt.s32.totalorder %s13, 1
      %s150 = scalar_select %p149, %s13, 1
      %s151 = smul.addr %s150, 64
      %s152 = smul.addr %s151, 8
      %s153 = scalar_lea.vmem %s0, %s152
      %p154 = scmp.lt.s32.totalorder %s13, 1
      %s155 = scalar_select %p154, %s13, 1
      %s156 = smul.addr %s155, 32
      %s157 = smul.addr %s156, 8
      %s158 = scalar_lea.vmem %s1, %s157
      %p159 = scmp.lt.s32.totalorder %s13, 1
      %s160 = scalar_select %p159, %s13, 1
      %s161 = smul.addr %s160, 32
      %s162 = smul.addr %s161, 8
      %s163 = scalar_lea.vmem %s2, %s162
      %v164 = vld [vmem:[%s153] sm:$0xff]
      %v165 = vld [vmem:[%s153 + $0x8] sm:$0xff]
      %v166 = vld [vmem:[%s153 + $0x10] sm:$0xff]
      %v167 = vld [vmem:[%s153 + $0x18] sm:$0xff]
      %v168 = vld [vmem:[%s153 + $0x20] sm:$0xff]
      %v169 = vld [vmem:[%s153 + $0x28] sm:$0xff]
      %v170 = vld [vmem:[%s153 + $0x30] sm:$0xff]
      %v171 = vld [vmem:[%s153 + $0x38] sm:$0xff]
      %v172 = vld [vmem:[%s153 + $0x40] sm:$0xff]
      %v173 = vld [vmem:[%s153 + $0x48] sm:$0xff]
      %v174 = vld [vmem:[%s153 + $0x50] sm:$0xff]
      %v175 = vld [vmem:[%s153 + $0x58] sm:$0xff]
      %v176 = vld [vmem:[%s153 + $0x60] sm:$0xff]
      %v177 = vld [vmem:[%s153 + $0x68] sm:$0xff]
      %v178 = vld [vmem:[%s153 + $0x70] sm:$0xff]
      %v179 = vld [vmem:[%s153 + $0x78] sm:$0xff]
      %v180 = vld [vmem:[%s153 + $0x80] sm:$0xff]
      %v181 = vld [vmem:[%s153 + $0x88] sm:$0xff]
      %v182 = vld [vmem:[%s153 + $0x90] sm:$0xff]
      %v183 = vld [vmem:[%s153 + $0x98] sm:$0xff]
      %v184 = vld [vmem:[%s153 + $0xa0] sm:$0xff]
      %v185 = vld [vmem:[%s153 + $0xa8] sm:$0xff]
      %v186 = vld [vmem:[%s153 + $0xb0] sm:$0xff]
      %v187 = vld [vmem:[%s153 + $0xb8] sm:$0xff]
      %v188 = vld [vmem:[%s153 + $0xc0] sm:$0xff]
      %v189 = vld [vmem:[%s153 + $0xc8] sm:$0xff]
      %v190 = vld [vmem:[%s153 + $0xd0] sm:$0xff]
      %v191 = vld [vmem:[%s153 + $0xd8] sm:$0xff]
      %v192 = vld [vmem:[%s153 + $0xe0] sm:$0xff]
      %v193 = vld [vmem:[%s153 + $0xe8] sm:$0xff]
      %v194 = vld [vmem:[%s153 + $0xf0] sm:$0xff]
      %v195 = vld [vmem:[%s153 + $0xf8] sm:$0xff]
      %v196 = vld [vmem:[%s153 + $0x100] sm:$0xff]
      %v197 = vld [vmem:[%s153 + $0x108] sm:$0xff]
      %v198 = vld [vmem:[%s153 + $0x110] sm:$0xff]
      %v199 = vld [vmem:[%s153 + $0x118] sm:$0xff]
      %v200 = vld [vmem:[%s153 + $0x120] sm:$0xff]
      %v201 = vld [vmem:[%s153 + $0x128] sm:$0xff]
      %v202 = vld [vmem:[%s153 + $0x130] sm:$0xff]
      %v203 = vld [vmem:[%s153 + $0x138] sm:$0xff]
      %v204 = vld [vmem:[%s153 + $0x140] sm:$0xff]
      %v205 = vld [vmem:[%s153 + $0x148] sm:$0xff]
      %v206 = vld [vmem:[%s153 + $0x150] sm:$0xff]
      %v207 = vld [vmem:[%s153 + $0x158] sm:$0xff]
      %v208 = vld [vmem:[%s153 + $0x160] sm:$0xff]
      %v209 = vld [vmem:[%s153 + $0x168] sm:$0xff]
      %v210 = vld [vmem:[%s153 + $0x170] sm:$0xff]
      %v211 = vld [vmem:[%s153 + $0x178] sm:$0xff]
      %v212 = vld [vmem:[%s153 + $0x180] sm:$0xff]
      %v213 = vld [vmem:[%s153 + $0x188] sm:$0xff]
      %v214 = vld [vmem:[%s153 + $0x190] sm:$0xff]
      %v215 = vld [vmem:[%s153 + $0x198] sm:$0xff]
      %v216 = vld [vmem:[%s153 + $0x1a0] sm:$0xff]
      %v217 = vld [vmem:[%s153 + $0x1a8] sm:$0xff]
      %v218 = vld [vmem:[%s153 + $0x1b0] sm:$0xff]
      %v219 = vld [vmem:[%s153 + $0x1b8] sm:$0xff]
      %v220 = vld [vmem:[%s153 + $0x1c0] sm:$0xff]
      %v221 = vld [vmem:[%s153 + $0x1c8] sm:$0xff]
      %v222 = vld [vmem:[%s153 + $0x1d0] sm:$0xff]
      %v223 = vld [vmem:[%s153 + $0x1d8] sm:$0xff]
      %v224 = vld [vmem:[%s153 + $0x1e0] sm:$0xff]
      %v225 = vld [vmem:[%s153 + $0x1e8] sm:$0xff]
      %v226 = vld [vmem:[%s153 + $0x1f0] sm:$0xff]
      %v227 = vld [vmem:[%s153 + $0x1f8] sm:$0xff]
      %228 = vmatprep.subr.mxu0 %v165
      %229 = vmatpush1.msra.mxu0 %v164
      %230 = vmatprep.subr.mxu0 %v167
      %231 = vmatpush1.msra.mxu0 %v166
      %232 = vmatprep.subr.mxu0 %v169
      %233 = vmatpush1.msra.mxu0 %v168
      %234 = vmatprep.subr.mxu0 %v171
      %235 = vmatpush1.msra.mxu0 %v170
      %236 = vmatprep.subr.mxu0 %v173
      %237 = vmatpush1.msra.mxu0 %v172
      %238 = vmatprep.subr.mxu0 %v175
      %239 = vmatpush1.msra.mxu0 %v174
      %240 = vmatprep.subr.mxu0 %v177
      %241 = vmatpush1.msra.mxu0 %v176
      %242 = vmatprep.subr.mxu0 %v179
      %243 = vmatpush1.msra.mxu0 %v178
      %244 = vmatprep.subr.mxu0 %v181
      %245 = vmatpush1.msra.mxu0 %v180
      %246 = vmatprep.subr.mxu0 %v183
      %247 = vmatpush1.msra.mxu0 %v182
      %248 = vmatprep.subr.mxu0 %v185
      %249 = vmatpush1.msra.mxu0 %v184
      %250 = vmatprep.subr.mxu0 %v187
      %251 = vmatpush1.msra.mxu0 %v186
      %252 = vmatprep.subr.mxu0 %v189
      %253 = vmatpush1.msra.mxu0 %v188
      %254 = vmatprep.subr.mxu0 %v191
      %255 = vmatpush1.msra.mxu0 %v190
      %256 = vmatprep.subr.mxu0 %v193
      %257 = vmatpush1.msra.mxu0 %v192
      %258 = vmatprep.subr.mxu0 %v195
      %259 = vmatpush1.msra.mxu0 %v194
      %260 = vmatprep.subr.mxu0 %v197
      %261 = vmatpush1.msra.mxu0 %v196
      %262 = vmatprep.subr.mxu0 %v199
      %263 = vmatpush1.msra.mxu0 %v198
      %264 = vmatprep.subr.mxu0 %v201
      %265 = vmatpush1.msra.mxu0 %v200
      %266 = vmatprep.subr.mxu0 %v203
      %267 = vmatpush1.msra.mxu0 %v202
      %268 = vmatprep.subr.mxu0 %v205
      %269 = vmatpush1.msra.mxu0 %v204
      %270 = vmatprep.subr.mxu0 %v207
      %271 = vmatpush1.msra.mxu0 %v206
      %272 = vmatprep.subr.mxu0 %v209
      %273 = vmatpush1.msra.mxu0 %v208
      %274 = vmatprep.subr.mxu0 %v211
      %275 = vmatpush1.msra.mxu0 %v210
      %276 = vmatprep.subr.mxu0 %v213
      %277 = vmatpush1.msra.mxu0 %v212
      %278 = vmatprep.subr.mxu0 %v215
      %279 = vmatpush1.msra.mxu0 %v214
      %280 = vmatprep.subr.mxu0 %v217
      %281 = vmatpush1.msra.mxu0 %v216
      %282 = vmatprep.subr.mxu0 %v219
      %283 = vmatpush1.msra.mxu0 %v218
      %284 = vmatprep.subr.mxu0 %v221
      %285 = vmatpush1.msra.mxu0 %v220
      %286 = vmatprep.subr.mxu0 %v223
      %287 = vmatpush1.msra.mxu0 %v222
      %288 = vmatprep.subr.mxu0 %v225
      %289 = vmatpush1.msra.mxu0 %v224
      %290 = vmatprep.subr.mxu0 %v227
      %291 = vmatpush1.msra.mxu0 %v226
      %292 = vmatprep.mubr.f32.mxu0 %v165
      %293 = vmatmul.mubr.f32.gmra.mrb[0].mxu0 %v164
      %v294 = vpop.f32.mrb[0].mxu0
      %v295 = vadd.f32 0.0, %v294
      %v296 = vpop.f32.mrb[0].mxu0
      %v297 = vadd.f32 0.0, %v296
      %298 = vmatprep.mubr.f32.mxu0 %v167
      %299 = vmatmul.mubr.f32.gmra.mrb[0].mxu0 %v166
      %v300 = vpop.f32.mrb[0].mxu0
      %v301 = vadd.f32 0.0, %v300
      %v302 = vpop.f32.mrb[0].mxu0
      %v303 = vadd.f32 0.0, %v302
      %304 = vmatprep.mubr.f32.mxu0 %v169
      %305 = vmatmul.mubr.f32.gmra.mrb[0].mxu0 %v168
      %v306 = vpop.f32.mrb[0].mxu0
      %v307 = vadd.f32 0.0, %v306
      %v308 = vpop.f32.mrb[0].mxu0
      %v309 = vadd.f32 0.0, %v308
      %310 = vmatprep.mubr.f32.mxu0 %v171
      %311 = vmatmul.mubr.f32.gmra.mrb[0].mxu0 %v170
      %v312 = vpop.f32.mrb[0].mxu0
      %v313 = vadd.f32 0.0, %v312
      %v314 = vpop.f32.mrb[0].mxu0
      %v315 = vadd.f32 0.0, %v314
      %316 = vmatprep.mubr.f32.mxu0 %v173
      %317 = vmatmul.mubr.f32.gmra.mrb[0].mxu0 %v172
      %v318 = vpop.f32.mrb[0].mxu0
      %v319 = vadd.f32 0.0, %v318
      %v320 = vpop.f32.mrb[0].mxu0
      %v321 = vadd.f32 0.0, %v320
      %322 = vmatprep.mubr.f32.mxu0 %v175
      %323 = vmatmul.mubr.f32.gmra.mrb[0].mxu0 %v174
      %v324 = vpop.f32.mrb[0].mxu0
      %v325 = vadd.f32 0.0, %v324
      %v326 = vpop.f32.mrb[0].mxu0
      %v327 = vadd.f32 0.0, %v326
      %328 = vmatprep.mubr.f32.mxu0 %v177
      %329 = vmatmul.mubr.f32.gmra.mrb[0].mxu0 %v176
      %v330 = vpop.f32.mrb[0].mxu0
      %v331 = vadd.f32 0.0, %v330
      %v332 = vpop.f32.mrb[0].mxu0
      %v333 = vadd.f32 0.0, %v332
      %334 = vmatprep.mubr.f32.mxu0 %v179
      %335 = vmatmul.mubr.f32.gmra.mrb[0].mxu0 %v178
      %v336 = vpop.f32.mrb[0].mxu0
      %v337 = vadd.f32 0.0, %v336
      %v338 = vpop.f32.mrb[0].mxu0
      %v339 = vadd.f32 0.0, %v338
      %340 = vmatprep.mubr.f32.mxu0 %v181
      %341 = vmatmul.mubr.f32.gmra.mrb[0].mxu0 %v180
      %v342 = vpop.f32.mrb[0].mxu0
      %v343 = vadd.f32 0.0, %v342
      %v344 = vpop.f32.mrb[0].mxu0
      %v345 = vadd.f32 0.0, %v344
      %346 = vmatprep.mubr.f32.mxu0 %v183
      %347 = vmatmul.mubr.f32.gmra.mrb[0].mxu0 %v182
      %v348 = vpop.f32.mrb[0].mxu0
      %v349 = vadd.f32 0.0, %v348
      %v350 = vpop.f32.mrb[0].mxu0
      %v351 = vadd.f32 0.0, %v350
      %352 = vmatprep.mubr.f32.mxu0 %v185
      %353 = vmatmul.mubr.f32.gmra.mrb[0].mxu0 %v184
      %v354 = vpop.f32.mrb[0].mxu0
      %v355 = vadd.f32 0.0, %v354
      %v356 = vpop.f32.mrb[0].mxu0
      %v357 = vadd.f32 0.0, %v356
      %358 = vmatprep.mubr.f32.mxu0 %v187
      %359 = vmatmul.mubr.f32.gmra.mrb[0].mxu0 %v186
      %v360 = vpop.f32.mrb[0].mxu0
      %v361 = vadd.f32 0.0, %v360
      %v362 = vpop.f32.mrb[0].mxu0
      %v363 = vadd.f32 0.0, %v362
      %364 = vmatprep.mubr.f32.mxu0 %v189
      %365 = vmatmul.mubr.f32.gmra.mrb[0].mxu0 %v188
      %v366 = vpop.f32.mrb[0].mxu0
      %v367 = vadd.f32 0.0, %v366
      %v368 = vpop.f32.mrb[0].mxu0
      %v369 = vadd.f32 0.0, %v368
      %370 = vmatprep.mubr.f32.mxu0 %v191
      %371 = vmatmul.mubr.f32.gmra.mrb[0].mxu0 %v190
      %v372 = vpop.f32.mrb[0].mxu0
      %v373 = vadd.f32 0.0, %v372
      %v374 = vpop.f32.mrb[0].mxu0
      %v375 = vadd.f32 0.0, %v374
      %376 = vmatprep.mubr.f32.mxu0 %v193
      %377 = vmatmul.mubr.f32.gmra.mrb[0].mxu0 %v192
      %v378 = vpop.f32.mrb[0].mxu0
      %v379 = vadd.f32 0.0, %v378
      %v380 = vpop.f32.mrb[0].mxu0
      %v381 = vadd.f32 0.0, %v380
      %382 = vmatprep.mubr.f32.mxu0 %v195
      %383 = vmatmul.mubr.f32.gmra.mrb[0].mxu0 %v194
      %v384 = vpop.f32.mrb[0].mxu0
      %v385 = vadd.f32 0.0, %v384
      %v386 = vpop.f32.mrb[0].mxu0
      %v387 = vadd.f32 0.0, %v386
      %388 = vmatprep.mubr.f32.mxu0 %v197
      %389 = vmatmul.mubr.f32.gmra.mrb[0].mxu0 %v196
      %v390 = vpop.f32.mrb[0].mxu0
      %v391 = vadd.f32 0.0, %v390
      %v392 = vpop.f32.mrb[0].mxu0
      %v393 = vadd.f32 0.0, %v392
      %394 = vmatprep.mubr.f32.mxu0 %v199
      %395 = vmatmul.mubr.f32.gmra.mrb[0].mxu0 %v198
      %v396 = vpop.f32.mrb[0].mxu0
      %v397 = vadd.f32 0.0, %v396
      %v398 = vpop.f32.mrb[0].mxu0
      %v399 = vadd.f32 0.0, %v398
      %400 = vmatprep.mubr.f32.mxu0 %v201
      %401 = vmatmul.mubr.f32.gmra.mrb[0].mxu0 %v200
      %v402 = vpop.f32.mrb[0].mxu0
      %v403 = vadd.f32 0.0, %v402
      %v404 = vpop.f32.mrb[0].mxu0
      %v405 = vadd.f32 0.0, %v404
      %406 = vmatprep.mubr.f32.mxu0 %v203
      %407 = vmatmul.mubr.f32.gmra.mrb[0].mxu0 %v202
      %v408 = vpop.f32.mrb[0].mxu0
      %v409 = vadd.f32 0.0, %v408
      %v410 = vpop.f32.mrb[0].mxu0
      %v411 = vadd.f32 0.0, %v410
      %412 = vmatprep.mubr.f32.mxu0 %v205
      %413 = vmatmul.mubr.f32.gmra.mrb[0].mxu0 %v204
      %v414 = vpop.f32.mrb[0].mxu0
      %v415 = vadd.f32 0.0, %v414
      %v416 = vpop.f32.mrb[0].mxu0
      %v417 = vadd.f32 0.0, %v416
      %418 = vmatprep.mubr.f32.mxu0 %v207
      %419 = vmatmul.mubr.f32.gmra.mrb[0].mxu0 %v206
      %v420 = vpop.f32.mrb[0].mxu0
      %v421 = vadd.f32 0.0, %v420
      %v422 = vpop.f32.mrb[0].mxu0
      %v423 = vadd.f32 0.0, %v422
      %424 = vmatprep.mubr.f32.mxu0 %v209
      %425 = vmatmul.mubr.f32.gmra.mrb[0].mxu0 %v208
      %v426 = vpop.f32.mrb[0].mxu0
      %v427 = vadd.f32 0.0, %v426
      %v428 = vpop.f32.mrb[0].mxu0
      %v429 = vadd.f32 0.0, %v428
      %430 = vmatprep.mubr.f32.mxu0 %v211
      %431 = vmatmul.mubr.f32.gmra.mrb[0].mxu0 %v210
      %v432 = vpop.f32.mrb[0].mxu0
      %v433 = vadd.f32 0.0, %v432
      %v434 = vpop.f32.mrb[0].mxu0
      %v435 = vadd.f32 0.0, %v434
      %436 = vmatprep.mubr.f32.mxu0 %v213
      %437 = vmatmul.mubr.f32.gmra.mrb[0].mxu0 %v212
      %v438 = vpop.f32.mrb[0].mxu0
      %v439 = vadd.f32 0.0, %v438
      %v440 = vpop.f32.mrb[0].mxu0
      %v441 = vadd.f32 0.0, %v440
      %442 = vmatprep.mubr.f32.mxu0 %v215
      %443 = vmatmul.mubr.f32.gmra.mrb[0].mxu0 %v214
      %v444 = vpop.f32.mrb[0].mxu0
      %v445 = vadd.f32 0.0, %v444
      %v446 = vpop.f32.mrb[0].mxu0
      %v447 = vadd.f32 0.0, %v446
      %448 = vmatprep.mubr.f32.mxu0 %v217
      %449 = vmatmul.mubr.f32.gmra.mrb[0].mxu0 %v216
      %v450 = vpop.f32.mrb[0].mxu0
      %v451 = vadd.f32 0.0, %v450
      %v452 = vpop.f32.mrb[0].mxu0
      %v453 = vadd.f32 0.0, %v452
      %454 = vmatprep.mubr.f32.mxu0 %v219
      %455 = vmatmul.mubr.f32.gmra.mrb[0].mxu0 %v218
      %v456 = vpop.f32.mrb[0].mxu0
      %v457 = vadd.f32 0.0, %v456
      %v458 = vpop.f32.mrb[0].mxu0
      %v459 = vadd.f32 0.0, %v458
      %460 = vmatprep.mubr.f32.mxu0 %v221
      %461 = vmatmul.mubr.f32.gmra.mrb[0].mxu0 %v220
      %v462 = vpop.f32.mrb[0].mxu0
      %v463 = vadd.f32 0.0, %v462
      %v464 = vpop.f32.mrb[0].mxu0
      %v465 = vadd.f32 0.0, %v464
      %466 = vmatprep.mubr.f32.mxu0 %v223
      %467 = vmatmul.mubr.f32.gmra.mrb[0].mxu0 %v222
      %v468 = vpop.f32.mrb[0].mxu0
      %v469 = vadd.f32 0.0, %v468
      %v470 = vpop.f32.mrb[0].mxu0
      %v471 = vadd.f32 0.0, %v470
      %472 = vmatprep.mubr.f32.mxu0 %v225
      %473 = vmatmul.mubr.f32.gmra.mrb[0].mxu0 %v224
      %v474 = vpop.f32.mrb[0].mxu0
      %v475 = vadd.f32 0.0, %v474
      %v476 = vpop.f32.mrb[0].mxu0
      %v477 = vadd.f32 0.0, %v476
      %478 = vmatprep.mubr.f32.mxu0 %v227
      %479 = vmatmul.mubr.f32.gmra.mrb[0].mxu0 %v226
      %v480 = vpop.f32.mrb[0].mxu0
      %v481 = vadd.f32 0.0, %v480
      %v482 = vpop.f32.mrb[0].mxu0
      %v483 = vadd.f32 0.0, %v482
      %484 = vdwg.mxu0
      %485 = vst [vmem:[#allocation2] sm:$0xff] %v295
      %486 = vst [vmem:[#allocation2 + $0x8] sm:$0xff] %v297
      %487 = vst [vmem:[#allocation2 + $0x10] sm:$0xff] %v301
      %488 = vst [vmem:[#allocation2 + $0x18] sm:$0xff] %v303
      %489 = vst [vmem:[#allocation2 + $0x20] sm:$0xff] %v307
      %490 = vst [vmem:[#allocation2 + $0x28] sm:$0xff] %v309
      %491 = vst [vmem:[#allocation2 + $0x30] sm:$0xff] %v313
      %492 = vst [vmem:[#allocation2 + $0x38] sm:$0xff] %v315
      %493 = vst [vmem:[#allocation2 + $0x40] sm:$0xff] %v319
      %494 = vst [vmem:[#allocation2 + $0x48] sm:$0xff] %v321
      %495 = vst [vmem:[#allocation2 + $0x50] sm:$0xff] %v325
      %496 = vst [vmem:[#allocation2 + $0x58] sm:$0xff] %v327
      %497 = vst [vmem:[#allocation2 + $0x60] sm:$0xff] %v331
      %498 = vst [vmem:[#allocation2 + $0x68] sm:$0xff] %v333
      %499 = vst [vmem:[#allocation2 + $0x70] sm:$0xff] %v337
      %500 = vst [vmem:[#allocation2 + $0x78] sm:$0xff] %v339
      %501 = vst [vmem:[#allocation2 + $0x80] sm:$0xff] %v343
      %502 = vst [vmem:[#allocation2 + $0x88] sm:$0xff] %v345
      %503 = vst [vmem:[#allocation2 + $0x90] sm:$0xff] %v349
      %504 = vst [vmem:[#allocation2 + $0x98] sm:$0xff] %v351
      %505 = vst [vmem:[#allocation2 + $0xa0] sm:$0xff] %v355
      %506 = vst [vmem:[#allocation2 + $0xa8] sm:$0xff] %v357
      %507 = vst [vmem:[#allocation2 + $0xb0] sm:$0xff] %v361
      %508 = vst [vmem:[#allocation2 + $0xb8] sm:$0xff] %v363
      %509 = vst [vmem:[#allocation2 + $0xc0] sm:$0xff] %v367
      %510 = vst [vmem:[#allocation2 + $0xc8] sm:$0xff] %v369
      %511 = vst [vmem:[#allocation2 + $0xd0] sm:$0xff] %v373
      %512 = vst [vmem:[#allocation2 + $0xd8] sm:$0xff] %v375
      %513 = vst [vmem:[#allocation2 + $0xe0] sm:$0xff] %v379
      %514 = vst [vmem:[#allocation2 + $0xe8] sm:$0xff] %v381
      %515 = vst [vmem:[#allocation2 + $0xf0] sm:$0xff] %v385
      %516 = vst [vmem:[#allocation2 + $0xf8] sm:$0xff] %v387
      %517 = vst [vmem:[#allocation2 + $0x100] sm:$0xff] %v391
      %518 = vst [vmem:[#allocation2 + $0x108] sm:$0xff] %v393
      %519 = vst [vmem:[#allocation2 + $0x110] sm:$0xff] %v397
      %520 = vst [vmem:[#allocation2 + $0x118] sm:$0xff] %v399
      %521 = vst [vmem:[#allocation2 + $0x120] sm:$0xff] %v403
      %522 = vst [vmem:[#allocation2 + $0x128] sm:$0xff] %v405
      %523 = vst [vmem:[#allocation2 + $0x130] sm:$0xff] %v409
      %524 = vst [vmem:[#allocation2 + $0x138] sm:$0xff] %v411
      %525 = vst [vmem:[#allocation2 + $0x140] sm:$0xff] %v415
      %526 = vst [vmem:[#allocation2 + $0x148] sm:$0xff] %v417
      %527 = vst [vmem:[#allocation2 + $0x150] sm:$0xff] %v421
      %528 = vst [vmem:[#allocation2 + $0x158] sm:$0xff] %v423
      %529 = vst [vmem:[#allocation2 + $0x160] sm:$0xff] %v427
      %530 = vst [vmem:[#allocation2 + $0x168] sm:$0xff] %v429
      %531 = vst [vmem:[#allocation2 + $0x170] sm:$0xff] %v433
      %532 = vst [vmem:[#allocation2 + $0x178] sm:$0xff] %v435
      %533 = vst [vmem:[#allocation2 + $0x180] sm:$0xff] %v439
      %534 = vst [vmem:[#allocation2 + $0x188] sm:$0xff] %v441
      %535 = vst [vmem:[#allocation2 + $0x190] sm:$0xff] %v445
      %536 = vst [vmem:[#allocation2 + $0x198] sm:$0xff] %v447
      %537 = vst [vmem:[#allocation2 + $0x1a0] sm:$0xff] %v451
      %538 = vst [vmem:[#allocation2 + $0x1a8] sm:$0xff] %v453
      %539 = vst [vmem:[#allocation2 + $0x1b0] sm:$0xff] %v457
      %540 = vst [vmem:[#allocation2 + $0x1b8] sm:$0xff] %v459
      %541 = vst [vmem:[#allocation2 + $0x1c0] sm:$0xff] %v463
      %542 = vst [vmem:[#allocation2 + $0x1c8] sm:$0xff] %v465
      %543 = vst [vmem:[#allocation2 + $0x1d0] sm:$0xff] %v469
      %544 = vst [vmem:[#allocation2 + $0x1d8] sm:$0xff] %v471
      %545 = vst [vmem:[#allocation2 + $0x1e0] sm:$0xff] %v475
      %546 = vst [vmem:[#allocation2 + $0x1e8] sm:$0xff] %v477
      %547 = vst [vmem:[#allocation2 + $0x1f0] sm:$0xff] %v481
      %548 = vst [vmem:[#allocation2 + $0x1f8] sm:$0xff] %v483
      %v549 = vld [vmem:[%s158] sm:$0xff]
      %v550 = vld [vmem:[%s158 + $0x8] sm:$0xff]
      %v551 = vld [vmem:[%s158 + $0x10] sm:$0xff]
      %v552 = vld [vmem:[%s158 + $0x18] sm:$0xff]
      %v553 = vld [vmem:[%s158 + $0x20] sm:$0xff]
      %v554 = vld [vmem:[%s158 + $0x28] sm:$0xff]
      %v555 = vld [vmem:[%s158 + $0x30] sm:$0xff]
      %v556 = vld [vmem:[%s158 + $0x38] sm:$0xff]
      %v557 = vld [vmem:[%s158 + $0x40] sm:$0xff]
      %v558 = vld [vmem:[%s158 + $0x48] sm:$0xff]
      %v559 = vld [vmem:[%s158 + $0x50] sm:$0xff]
      %v560 = vld [vmem:[%s158 + $0x58] sm:$0xff]
      %v561 = vld [vmem:[%s158 + $0x60] sm:$0xff]
      %v562 = vld [vmem:[%s158 + $0x68] sm:$0xff]
      %v563 = vld [vmem:[%s158 + $0x70] sm:$0xff]
      %v564 = vld [vmem:[%s158 + $0x78] sm:$0xff]
      %v565 = vld [vmem:[%s158 + $0x80] sm:$0xff]
      %v566 = vld [vmem:[%s158 + $0x88] sm:$0xff]
      %v567 = vld [vmem:[%s158 + $0x90] sm:$0xff]
      %v568 = vld [vmem:[%s158 + $0x98] sm:$0xff]
      %v569 = vld [vmem:[%s158 + $0xa0] sm:$0xff]
      %v570 = vld [vmem:[%s158 + $0xa8] sm:$0xff]
      %v571 = vld [vmem:[%s158 + $0xb0] sm:$0xff]
      %v572 = vld [vmem:[%s158 + $0xb8] sm:$0xff]
      %v573 = vld [vmem:[%s158 + $0xc0] sm:$0xff]
      %v574 = vld [vmem:[%s158 + $0xc8] sm:$0xff]
      %v575 = vld [vmem:[%s158 + $0xd0] sm:$0xff]
      %v576 = vld [vmem:[%s158 + $0xd8] sm:$0xff]
      %v577 = vld [vmem:[%s158 + $0xe0] sm:$0xff]
      %v578 = vld [vmem:[%s158 + $0xe8] sm:$0xff]
      %v579 = vld [vmem:[%s158 + $0xf0] sm:$0xff]
      %v580 = vld [vmem:[%s158 + $0xf8] sm:$0xff]
      %581 = vst [vmem:[%s163] sm:$0xff] %v549
      %582 = vst [vmem:[%s163 + $0x8] sm:$0xff] %v550
      %583 = vst [vmem:[%s163 + $0x10] sm:$0xff] %v551
      %584 = vst [vmem:[%s163 + $0x18] sm:$0xff] %v552
      %585 = vst [vmem:[%s163 + $0x20] sm:$0xff] %v553
      %586 = vst [vmem:[%s163 + $0x28] sm:$0xff] %v554
      %587 = vst [vmem:[%s163 + $0x30] sm:$0xff] %v555
      %588 = vst [vmem:[%s163 + $0x38] sm:$0xff] %v556
      %589 = vst [vmem:[%s163 + $0x40] sm:$0xff] %v557
      %590 = vst [vmem:[%s163 + $0x48] sm:$0xff] %v558
      %591 = vst [vmem:[%s163 + $0x50] sm:$0xff] %v559
      %592 = vst [vmem:[%s163 + $0x58] sm:$0xff] %v560
      %593 = vst [vmem:[%s163 + $0x60] sm:$0xff] %v561
      %594 = vst [vmem:[%s163 + $0x68] sm:$0xff] %v562
      %595 = vst [vmem:[%s163 + $0x70] sm:$0xff] %v563
      %596 = vst [vmem:[%s163 + $0x78] sm:$0xff] %v564
      %597 = vst [vmem:[%s163 + $0x80] sm:$0xff] %v565
      %598 = vst [vmem:[%s163 + $0x88] sm:$0xff] %v566
      %599 = vst [vmem:[%s163 + $0x90] sm:$0xff] %v567
      %600 = vst [vmem:[%s163 + $0x98] sm:$0xff] %v568
      %601 = vst [vmem:[%s163 + $0xa0] sm:$0xff] %v569
      %602 = vst [vmem:[%s163 + $0xa8] sm:$0xff] %v570
      %603 = vst [vmem:[%s163 + $0xb0] sm:$0xff] %v571
      %604 = vst [vmem:[%s163 + $0xb8] sm:$0xff] %v572
      %605 = vst [vmem:[%s163 + $0xc0] sm:$0xff] %v573
      %606 = vst [vmem:[%s163 + $0xc8] sm:$0xff] %v574
      %607 = vst [vmem:[%s163 + $0xd0] sm:$0xff] %v575
      %608 = vst [vmem:[%s163 + $0xd8] sm:$0xff] %v576
      %609 = vst [vmem:[%s163 + $0xe0] sm:$0xff] %v577
      %610 = vst [vmem:[%s163 + $0xe8] sm:$0xff] %v578
      %611 = vst [vmem:[%s163 + $0xf0] sm:$0xff] %v579
      %612 = vst [vmem:[%s163 + $0xf8] sm:$0xff] %v580
      loop: start=0, step=1, limit=20
      $region29: #{comp_eig_decomp_batch.3} parent=27 // loop_pre_header
        _
      $region30: #{comp_eig_decomp_batch.3} parent=27 // loop_header
        %s614 = sphi 0, %s618
        %p615 = scmp.ge.s32.totalorder %s614, 20
      $region31: #{comp_eig_decomp_batch.3} parent=27 // loop_header_branch
        %617 = sbr.rel (%p615) target = $region35
      $region32: #{comp_eig_decomp_batch.3} parent=27 // loop_body
        %v619 = vld [vmem:[#allocation2] sm:$0xff]
        %v620 = vld [vmem:[#allocation2 + $0x8] sm:$0xff]
        %v621 = vld [vmem:[#allocation2 + $0x10] sm:$0xff]
        %v622 = vld [vmem:[#allocation2 + $0x18] sm:$0xff]
        %v623 = vld [vmem:[#allocation2 + $0x20] sm:$0xff]
        %v624 = vld [vmem:[#allocation2 + $0x28] sm:$0xff]
        %v625 = vld [vmem:[#allocation2 + $0x30] sm:$0xff]
        %v626 = vld [vmem:[#allocation2 + $0x38] sm:$0xff]
        %v627 = vld [vmem:[#allocation2 + $0x40] sm:$0xff]
        %v628 = vld [vmem:[#allocation2 + $0x48] sm:$0xff]
        %v629 = vld [vmem:[#allocation2 + $0x50] sm:$0xff]
        %v630 = vld [vmem:[#allocation2 + $0x58] sm:$0xff]
        %v631 = vld [vmem:[#allocation2 + $0x60] sm:$0xff]
        %v632 = vld [vmem:[#allocation2 + $0x68] sm:$0xff]
        %v633 = vld [vmem:[#allocation2 + $0x70] sm:$0xff]
        %v634 = vld [vmem:[#allocation2 + $0x78] sm:$0xff]
        %v635 = vld [vmem:[#allocation2 + $0x80] sm:$0xff]
        %v636 = vld [vmem:[#allocation2 + $0x88] sm:$0xff]
        %v637 = vld [vmem:[#allocation2 + $0x90] sm:$0xff]
        %v638 = vld [vmem:[#allocation2 + $0x98] sm:$0xff]
        %v639 = vld [vmem:[#allocation2 + $0xa0] sm:$0xff]
        %v640 = vld [vmem:[#allocation2 + $0xa8] sm:$0xff]
        %v641 = vld [vmem:[#allocation2 + $0xb0] sm:$0xff]
        %v642 = vld [vmem:[#allocation2 + $0xb8] sm:$0xff]
        %v643 = vld [vmem:[#allocation2 + $0xc0] sm:$0xff]
        %v644 = vld [vmem:[#allocation2 + $0xc8] sm:$0xff]
        %v645 = vld [vmem:[#allocation2 + $0xd0] sm:$0xff]
        %v646 = vld [vmem:[#allocation2 + $0xd8] sm:$0xff]
        %v647 = vld [vmem:[#allocation2 + $0xe0] sm:$0xff]
        %v648 = vld [vmem:[#allocation2 + $0xe8] sm:$0xff]
        %v649 = vld [vmem:[#allocation2 + $0xf0] sm:$0xff]
        %v650 = vld [vmem:[#allocation2 + $0xf8] sm:$0xff]
        %v651 = vld [vmem:[#allocation2 + $0x100] sm:$0xff]
        %v652 = vld [vmem:[#allocation2 + $0x108] sm:$0xff]
        %v653 = vld [vmem:[#allocation2 + $0x110] sm:$0xff]
        %v654 = vld [vmem:[#allocation2 + $0x118] sm:$0xff]
        %v655 = vld [vmem:[#allocation2 + $0x120] sm:$0xff]
        %v656 = vld [vmem:[#allocation2 + $0x128] sm:$0xff]
        %v657 = vld [vmem:[#allocation2 + $0x130] sm:$0xff]
        %v658 = vld [vmem:[#allocation2 + $0x138] sm:$0xff]
        %v659 = vld [vmem:[#allocation2 + $0x140] sm:$0xff]
        %v660 = vld [vmem:[#allocation2 + $0x148] sm:$0xff]
        %v661 = vld [vmem:[#allocation2 + $0x150] sm:$0xff]
        %v662 = vld [vmem:[#allocation2 + $0x158] sm:$0xff]
        %v663 = vld [vmem:[#allocation2 + $0x160] sm:$0xff]
        %v664 = vld [vmem:[#allocation2 + $0x168] sm:$0xff]
        %v665 = vld [vmem:[#allocation2 + $0x170] sm:$0xff]
        %v666 = vld [vmem:[#allocation2 + $0x178] sm:$0xff]
        %v667 = vld [vmem:[#allocation2 + $0x180] sm:$0xff]
        %v668 = vld [vmem:[#allocation2 + $0x188] sm:$0xff]
        %v669 = vld [vmem:[#allocation2 + $0x190] sm:$0xff]
        %v670 = vld [vmem:[#allocation2 + $0x198] sm:$0xff]
        %v671 = vld [vmem:[#allocation2 + $0x1a0] sm:$0xff]
        %v672 = vld [vmem:[#allocation2 + $0x1a8] sm:$0xff]
        %v673 = vld [vmem:[#allocation2 + $0x1b0] sm:$0xff]
        %v674 = vld [vmem:[#allocation2 + $0x1b8] sm:$0xff]
        %v675 = vld [vmem:[#allocation2 + $0x1c0] sm:$0xff]
        %v676 = vld [vmem:[#allocation2 + $0x1c8] sm:$0xff]
        %v677 = vld [vmem:[#allocation2 + $0x1d0] sm:$0xff]
        %v678 = vld [vmem:[#allocation2 + $0x1d8] sm:$0xff]
        %v679 = vld [vmem:[#allocation2 + $0x1e0] sm:$0xff]
        %v680 = vld [vmem:[#allocation2 + $0x1e8] sm:$0xff]
        %v681 = vld [vmem:[#allocation2 + $0x1f0] sm:$0xff]
        %v682 = vld [vmem:[#allocation2 + $0x1f8] sm:$0xff]
        %v683 = vld [vmem:[%s163] sm:$0xff]
        %v684 = vld [vmem:[%s163 + $0x8] sm:$0xff]
        %v685 = vld [vmem:[%s163 + $0x10] sm:$0xff]
        %v686 = vld [vmem:[%s163 + $0x18] sm:$0xff]
        %v687 = vld [vmem:[%s163 + $0x20] sm:$0xff]
        %v688 = vld [vmem:[%s163 + $0x28] sm:$0xff]
        %v689 = vld [vmem:[%s163 + $0x30] sm:$0xff]
        %v690 = vld [vmem:[%s163 + $0x38] sm:$0xff]
        %v691 = vld [vmem:[%s163 + $0x40] sm:$0xff]
        %v692 = vld [vmem:[%s163 + $0x48] sm:$0xff]
        %v693 = vld [vmem:[%s163 + $0x50] sm:$0xff]
        %v694 = vld [vmem:[%s163 + $0x58] sm:$0xff]
        %v695 = vld [vmem:[%s163 + $0x60] sm:$0xff]
        %v696 = vld [vmem:[%s163 + $0x68] sm:$0xff]
        %v697 = vld [vmem:[%s163 + $0x70] sm:$0xff]
        %v698 = vld [vmem:[%s163 + $0x78] sm:$0xff]
        %v699 = vld [vmem:[%s163 + $0x80] sm:$0xff]
        %v700 = vld [vmem:[%s163 + $0x88] sm:$0xff]
        %v701 = vld [vmem:[%s163 + $0x90] sm:$0xff]
        %v702 = vld [vmem:[%s163 + $0x98] sm:$0xff]
        %v703 = vld [vmem:[%s163 + $0xa0] sm:$0xff]
        %v704 = vld [vmem:[%s163 + $0xa8] sm:$0xff]
        %v705 = vld [vmem:[%s163 + $0xb0] sm:$0xff]
        %v706 = vld [vmem:[%s163 + $0xb8] sm:$0xff]
        %v707 = vld [vmem:[%s163 + $0xc0] sm:$0xff]
        %v708 = vld [vmem:[%s163 + $0xc8] sm:$0xff]
        %v709 = vld [vmem:[%s163 + $0xd0] sm:$0xff]
        %v710 = vld [vmem:[%s163 + $0xd8] sm:$0xff]
        %v711 = vld [vmem:[%s163 + $0xe0] sm:$0xff]
        %v712 = vld [vmem:[%s163 + $0xe8] sm:$0xff]
        %v713 = vld [vmem:[%s163 + $0xf0] sm:$0xff]
        %v714 = vld [vmem:[%s163 + $0xf8] sm:$0xff]
        %715 = vmatprep.subr.mxu0 0.0
        %716 = vmatpush1.msra.mxu0 %v683
        %717 = vmatprep.subr.mxu0 0.0
        %718 = vmatpush1.msra.mxu0 %v684
        %719 = vmatprep.subr.mxu0 0.0
        %720 = vmatpush1.msra.mxu0 %v685
        %721 = vmatprep.subr.mxu0 0.0
        %722 = vmatpush1.msra.mxu0 %v686
        %723 = vmatprep.subr.mxu0 0.0
        %724 = vmatpush1.msra.mxu0 %v687
        %725 = vmatprep.subr.mxu0 0.0
        %726 = vmatpush1.msra.mxu0 %v688
        %727 = vmatprep.subr.mxu0 0.0
        %728 = vmatpush1.msra.mxu0 %v689
        %729 = vmatprep.subr.mxu0 0.0
        %730 = vmatpush1.msra.mxu0 %v690
        %731 = vmatprep.subr.mxu0 0.0
        %732 = vmatpush1.msra.mxu0 %v691
        %733 = vmatprep.subr.mxu0 0.0
        %734 = vmatpush1.msra.mxu0 %v692
        %735 = vmatprep.subr.mxu0 0.0
        %736 = vmatpush1.msra.mxu0 %v693
        %737 = vmatprep.subr.mxu0 0.0
        %738 = vmatpush1.msra.mxu0 %v694
        %739 = vmatprep.subr.mxu0 0.0
        %740 = vmatpush1.msra.mxu0 %v695
        %741 = vmatprep.subr.mxu0 0.0
        %742 = vmatpush1.msra.mxu0 %v696
        %743 = vmatprep.subr.mxu0 0.0
        %744 = vmatpush1.msra.mxu0 %v697
        %745 = vmatprep.subr.mxu0 0.0
        %746 = vmatpush1.msra.mxu0 %v698
        %747 = vmatprep.subr.mxu0 0.0
        %748 = vmatpush1.msra.mxu0 %v699
        %749 = vmatprep.subr.mxu0 0.0
        %750 = vmatpush1.msra.mxu0 %v700
        %751 = vmatprep.subr.mxu0 0.0
        %752 = vmatpush1.msra.mxu0 %v701
        %753 = vmatprep.subr.mxu0 0.0
        %754 = vmatpush1.msra.mxu0 %v702
        %755 = vmatprep.subr.mxu0 0.0
        %756 = vmatpush1.msra.mxu0 %v703
        %757 = vmatprep.subr.mxu0 0.0
        %758 = vmatpush1.msra.mxu0 %v704
        %759 = vmatprep.subr.mxu0 0.0
        %760 = vmatpush1.msra.mxu0 %v705
        %761 = vmatprep.subr.mxu0 0.0
        %762 = vmatpush1.msra.mxu0 %v706
        %763 = vmatprep.subr.mxu0 0.0
        %764 = vmatpush1.msra.mxu0 %v707
        %765 = vmatprep.subr.mxu0 0.0
        %766 = vmatpush1.msra.mxu0 %v708
        %767 = vmatprep.subr.mxu0 0.0
        %768 = vmatpush1.msra.mxu0 %v709
        %769 = vmatprep.subr.mxu0 0.0
        %770 = vmatpush1.msra.mxu0 %v710
        %771 = vmatprep.subr.mxu0 0.0
        %772 = vmatpush1.msra.mxu0 %v711
        %773 = vmatprep.subr.mxu0 0.0
        %774 = vmatpush1.msra.mxu0 %v712
        %775 = vmatprep.subr.mxu0 0.0
        %776 = vmatpush1.msra.mxu0 %v713
        %777 = vmatprep.subr.mxu0 0.0
        %778 = vmatpush1.msra.mxu0 %v714
        %779 = vmatprep.mubr.f32.mxu0 %v620
        %780 = vmatmul.mubr.f32.gmra.mrb[0].mxu0 %v619
        %v781 = vpop.f32.mrb[0].mxu0
        %v782 = vadd.f32 0.0, %v781
        %v783 = vpop.f32.mrb[0].mxu0
        %784 = vmatprep.mubr.f32.mxu0 %v622
        %785 = vmatmul.mubr.f32.gmra.mrb[0].mxu0 %v621
        %v786 = vpop.f32.mrb[0].mxu0
        %v787 = vadd.f32 0.0, %v786
        %v788 = vpop.f32.mrb[0].mxu0
        %789 = vmatprep.mubr.f32.mxu0 %v624
        %790 = vmatmul.mubr.f32.gmra.mrb[0].mxu0 %v623
        %v791 = vpop.f32.mrb[0].mxu0
        %v792 = vadd.f32 0.0, %v791
        %v793 = vpop.f32.mrb[0].mxu0
        %794 = vmatprep.mubr.f32.mxu0 %v626
        %795 = vmatmul.mubr.f32.gmra.mrb[0].mxu0 %v625
        %v796 = vpop.f32.mrb[0].mxu0
        %v797 = vadd.f32 0.0, %v796
        %v798 = vpop.f32.mrb[0].mxu0
        %799 = vmatprep.mubr.f32.mxu0 %v628
        %800 = vmatmul.mubr.f32.gmra.mrb[0].mxu0 %v627
        %v801 = vpop.f32.mrb[0].mxu0
        %v802 = vadd.f32 0.0, %v801
        %v803 = vpop.f32.mrb[0].mxu0
        %804 = vmatprep.mubr.f32.mxu0 %v630
        %805 = vmatmul.mubr.f32.gmra.mrb[0].mxu0 %v629
        %v806 = vpop.f32.mrb[0].mxu0
        %v807 = vadd.f32 0.0, %v806
        %v808 = vpop.f32.mrb[0].mxu0
        %809 = vmatprep.mubr.f32.mxu0 %v632
        %810 = vmatmul.mubr.f32.gmra.mrb[0].mxu0 %v631
        %v811 = vpop.f32.mrb[0].mxu0
        %v812 = vadd.f32 0.0, %v811
        %v813 = vpop.f32.mrb[0].mxu0
        %814 = vmatprep.mubr.f32.mxu0 %v634
        %815 = vmatmul.mubr.f32.gmra.mrb[0].mxu0 %v633
        %v816 = vpop.f32.mrb[0].mxu0
        %v817 = vadd.f32 0.0, %v816
        %v818 = vpop.f32.mrb[0].mxu0
        %819 = vmatprep.mubr.f32.mxu0 %v636
        %820 = vmatmul.mubr.f32.gmra.mrb[0].mxu0 %v635
        %v821 = vpop.f32.mrb[0].mxu0
        %v822 = vadd.f32 0.0, %v821
        %v823 = vpop.f32.mrb[0].mxu0
        %824 = vmatprep.mubr.f32.mxu0 %v638
        %825 = vmatmul.mubr.f32.gmra.mrb[0].mxu0 %v637
        %v826 = vpop.f32.mrb[0].mxu0
        %v827 = vadd.f32 0.0, %v826
        %v828 = vpop.f32.mrb[0].mxu0
        %829 = vmatprep.mubr.f32.mxu0 %v640
        %830 = vmatmul.mubr.f32.gmra.mrb[0].mxu0 %v639
        %v831 = vpop.f32.mrb[0].mxu0
        %v832 = vadd.f32 0.0, %v831
        %v833 = vpop.f32.mrb[0].mxu0
        %834 = vmatprep.mubr.f32.mxu0 %v642
        %835 = vmatmul.mubr.f32.gmra.mrb[0].mxu0 %v641
        %v836 = vpop.f32.mrb[0].mxu0
        %v837 = vadd.f32 0.0, %v836
        %v838 = vpop.f32.mrb[0].mxu0
        %839 = vmatprep.mubr.f32.mxu0 %v644
        %840 = vmatmul.mubr.f32.gmra.mrb[0].mxu0 %v643
        %v841 = vpop.f32.mrb[0].mxu0
        %v842 = vadd.f32 0.0, %v841
        %v843 = vpop.f32.mrb[0].mxu0
        %844 = vmatprep.mubr.f32.mxu0 %v646
        %845 = vmatmul.mubr.f32.gmra.mrb[0].mxu0 %v645
        %v846 = vpop.f32.mrb[0].mxu0
        %v847 = vadd.f32 0.0, %v846
        %v848 = vpop.f32.mrb[0].mxu0
        %849 = vmatprep.mubr.f32.mxu0 %v648
        %850 = vmatmul.mubr.f32.gmra.mrb[0].mxu0 %v647
        %v851 = vpop.f32.mrb[0].mxu0
        %v852 = vadd.f32 0.0, %v851
        %v853 = vpop.f32.mrb[0].mxu0
        %854 = vmatprep.mubr.f32.mxu0 %v650
        %855 = vmatmul.mubr.f32.gmra.mrb[0].mxu0 %v649
        %v856 = vpop.f32.mrb[0].mxu0
        %v857 = vadd.f32 0.0, %v856
        %v858 = vpop.f32.mrb[0].mxu0
        %859 = vmatprep.mubr.f32.mxu0 %v652
        %860 = vmatmul.mubr.f32.gmra.mrb[0].mxu0 %v651
        %v861 = vpop.f32.mrb[0].mxu0
        %v862 = vadd.f32 0.0, %v861
        %v863 = vpop.f32.mrb[0].mxu0
        %864 = vmatprep.mubr.f32.mxu0 %v654
        %865 = vmatmul.mubr.f32.gmra.mrb[0].mxu0 %v653
        %v866 = vpop.f32.mrb[0].mxu0
        %v867 = vadd.f32 0.0, %v866
        %v868 = vpop.f32.mrb[0].mxu0
        %869 = vmatprep.mubr.f32.mxu0 %v656
        %870 = vmatmul.mubr.f32.gmra.mrb[0].mxu0 %v655
        %v871 = vpop.f32.mrb[0].mxu0
        %v872 = vadd.f32 0.0, %v871
        %v873 = vpop.f32.mrb[0].mxu0
        %874 = vmatprep.mubr.f32.mxu0 %v658
        %875 = vmatmul.mubr.f32.gmra.mrb[0].mxu0 %v657
        %v876 = vpop.f32.mrb[0].mxu0
        %v877 = vadd.f32 0.0, %v876
        %v878 = vpop.f32.mrb[0].mxu0
        %879 = vmatprep.mubr.f32.mxu0 %v660
        %880 = vmatmul.mubr.f32.gmra.mrb[0].mxu0 %v659
        %v881 = vpop.f32.mrb[0].mxu0
        %v882 = vadd.f32 0.0, %v881
        %v883 = vpop.f32.mrb[0].mxu0
        %884 = vmatprep.mubr.f32.mxu0 %v662
        %885 = vmatmul.mubr.f32.gmra.mrb[0].mxu0 %v661
        %v886 = vpop.f32.mrb[0].mxu0
        %v887 = vadd.f32 0.0, %v886
        %v888 = vpop.f32.mrb[0].mxu0
        %889 = vmatprep.mubr.f32.mxu0 %v664
        %890 = vmatmul.mubr.f32.gmra.mrb[0].mxu0 %v663
        %v891 = vpop.f32.mrb[0].mxu0
        %v892 = vadd.f32 0.0, %v891
        %v893 = vpop.f32.mrb[0].mxu0
        %894 = vmatprep.mubr.f32.mxu0 %v666
        %895 = vmatmul.mubr.f32.gmra.mrb[0].mxu0 %v665
        %v896 = vpop.f32.mrb[0].mxu0
        %v897 = vadd.f32 0.0, %v896
        %v898 = vpop.f32.mrb[0].mxu0
        %899 = vmatprep.mubr.f32.mxu0 %v668
        %900 = vmatmul.mubr.f32.gmra.mrb[0].mxu0 %v667
        %v901 = vpop.f32.mrb[0].mxu0
        %v902 = vadd.f32 0.0, %v901
        %v903 = vpop.f32.mrb[0].mxu0
        %904 = vmatprep.mubr.f32.mxu0 %v670
        %905 = vmatmul.mubr.f32.gmra.mrb[0].mxu0 %v669
        %v906 = vpop.f32.mrb[0].mxu0
        %v907 = vadd.f32 0.0, %v906
        %v908 = vpop.f32.mrb[0].mxu0
        %909 = vmatprep.mubr.f32.mxu0 %v672
        %910 = vmatmul.mubr.f32.gmra.mrb[0].mxu0 %v671
        %v911 = vpop.f32.mrb[0].mxu0
        %v912 = vadd.f32 0.0, %v911
        %v913 = vpop.f32.mrb[0].mxu0
        %914 = vmatprep.mubr.f32.mxu0 %v674
        %915 = vmatmul.mubr.f32.gmra.mrb[0].mxu0 %v673
        %v916 = vpop.f32.mrb[0].mxu0
        %v917 = vadd.f32 0.0, %v916
        %v918 = vpop.f32.mrb[0].mxu0
        %919 = vmatprep.mubr.f32.mxu0 %v676
        %920 = vmatmul.mubr.f32.gmra.mrb[0].mxu0 %v675
        %v921 = vpop.f32.mrb[0].mxu0
        %v922 = vadd.f32 0.0, %v921
        %v923 = vpop.f32.mrb[0].mxu0
        %924 = vmatprep.mubr.f32.mxu0 %v678
        %925 = vmatmul.mubr.f32.gmra.mrb[0].mxu0 %v677
        %v926 = vpop.f32.mrb[0].mxu0
        %v927 = vadd.f32 0.0, %v926
        %v928 = vpop.f32.mrb[0].mxu0
        %929 = vmatprep.mubr.f32.mxu0 %v680
        %930 = vmatmul.mubr.f32.gmra.mrb[0].mxu0 %v679
        %v931 = vpop.f32.mrb[0].mxu0
        %v932 = vadd.f32 0.0, %v931
        %v933 = vpop.f32.mrb[0].mxu0
        %934 = vmatprep.mubr.f32.mxu0 %v682
        %935 = vmatmul.mubr.f32.gmra.mrb[0].mxu0 %v681
        %v936 = vpop.f32.mrb[0].mxu0
        %v937 = vadd.f32 0.0, %v936
        %v938 = vpop.f32.mrb[0].mxu0
        %939 = vdwg.mxu0
        %940 = vst [vmem:[%s163] sm:$0xff] %v782
        %941 = vst [vmem:[%s163 + $0x8] sm:$0xff] %v787
        %942 = vst [vmem:[%s163 + $0x10] sm:$0xff] %v792
        %943 = vst [vmem:[%s163 + $0x18] sm:$0xff] %v797
        %944 = vst [vmem:[%s163 + $0x20] sm:$0xff] %v802
        %945 = vst [vmem:[%s163 + $0x28] sm:$0xff] %v807
        %946 = vst [vmem:[%s163 + $0x30] sm:$0xff] %v812
        %947 = vst [vmem:[%s163 + $0x38] sm:$0xff] %v817
        %948 = vst [vmem:[%s163 + $0x40] sm:$0xff] %v822
        %949 = vst [vmem:[%s163 + $0x48] sm:$0xff] %v827
        %950 = vst [vmem:[%s163 + $0x50] sm:$0xff] %v832
        %951 = vst [vmem:[%s163 + $0x58] sm:$0xff] %v837
        %952 = vst [vmem:[%s163 + $0x60] sm:$0xff] %v842
        %953 = vst [vmem:[%s163 + $0x68] sm:$0xff] %v847
        %954 = vst [vmem:[%s163 + $0x70] sm:$0xff] %v852
        %955 = vst [vmem:[%s163 + $0x78] sm:$0xff] %v857
        %956 = vst [vmem:[%s163 + $0x80] sm:$0xff] %v862
        %957 = vst [vmem:[%s163 + $0x88] sm:$0xff] %v867
        %958 = vst [vmem:[%s163 + $0x90] sm:$0xff] %v872
        %959 = vst [vmem:[%s163 + $0x98] sm:$0xff] %v877
        %960 = vst [vmem:[%s163 + $0xa0] sm:$0xff] %v882
        %961 = vst [vmem:[%s163 + $0xa8] sm:$0xff] %v887
        %962 = vst [vmem:[%s163 + $0xb0] sm:$0xff] %v892
        %963 = vst [vmem:[%s163 + $0xb8] sm:$0xff] %v897
        %964 = vst [vmem:[%s163 + $0xc0] sm:$0xff] %v902
        %965 = vst [vmem:[%s163 + $0xc8] sm:$0xff] %v907
        %966 = vst [vmem:[%s163 + $0xd0] sm:$0xff] %v912
        %967 = vst [vmem:[%s163 + $0xd8] sm:$0xff] %v917
        %968 = vst [vmem:[%s163 + $0xe0] sm:$0xff] %v922
        %969 = vst [vmem:[%s163 + $0xe8] sm:$0xff] %v927
        %970 = vst [vmem:[%s163 + $0xf0] sm:$0xff] %v932
        %971 = vst [vmem:[%s163 + $0xf8] sm:$0xff] %v937
      $region33: #{comp_eig_decomp_batch.3} parent=27 // loop_footer
        %s618 = sadd.s32 1, %s614
      $region34: #{comp_eig_decomp_batch.3} parent=27 // loop_footer_branch
        %613 = sbr.rel target = $region30
      $region35: #{comp_eig_decomp_batch.3} parent=27 // loop_exit
        _
      %p972 = scmp.lt.s32.totalorder %s13, 1
      %s973 = scalar_select %p972, %s13, 1
      %s974 = smul.addr %s973, 32
      %s975 = smul.addr %s974, 8
      %s976 = scalar_lea.vmem %s2, %s975
      // Predicated region
      $region36: #{comp_eig_decomp_batch.3} parent=27 // pred_check
        %p977 = pneg %p83
      $region37: #{comp_eig_decomp_batch.3} parent=27 // pred_check_branch
        %979 = sbr.rel (%p977) target = $region39
      $region38: #{comp_eig_decomp_batch.3} parent=27 // pred_region
        _
      $region39: #{comp_eig_decomp_batch.3} parent=27 // pred_fallthru
        _
    $region28: #{comp_eig_decomp_batch.3} parent=5 // pred_fallthru
      _
    %p980 = scmp.le.s32.totalorder 2, %s8
    // Predicated region
    $region40: #{comp_eig_decomp_batch.3} parent=5 // pred_check
      %p981 = pneg %p980
    $region41: #{comp_eig_decomp_batch.3} parent=5 // pred_check_branch
      %983 = sbr.rel (%p981) target = $region43
    $region42: #{comp_eig_decomp_batch.3} parent=5 // pred_region
      %s984 = ssub.s32 %s8, 2
      // Predicated region
      $region44: #{comp_eig_decomp_batch.3} parent=42 // pred_check
        %p985 = pneg %p89
      $region45: #{comp_eig_decomp_batch.3} parent=42 // pred_check_branch
        %987 = sbr.rel (%p985) target = $region47
      $region46: #{comp_eig_decomp_batch.3} parent=42 // pred_region
        %p988 = scmp.lt.s32.totalorder %s14, 1
        %s989 = scalar_select %p988, %s14, 1
        %s990 = smul.addr %s989, 32
        %s991 = smul.addr %s990, 8
        %s992 = scalar_lea.vmem %s2, %s991
      $region47: #{comp_eig_decomp_batch.3} parent=42 // pred_fallthru
        _
    $region43: #{comp_eig_decomp_batch.3} parent=5 // pred_fallthru
      _
  $region6: #{comp_eig_decomp_batch.3} parent=0 // loop_footer
    %s12 = sadd.s32 1, %s8
  $region7: #{comp_eig_decomp_batch.3} parent=0 // loop_footer_branch
    %7 = sbr.rel target = $region3
  $region8: #{comp_eig_decomp_batch.3} parent=0 // loop_exit
    _

</llo_original>
